<compile_context>
chip_gen: v6e
topology: v6e:2x2x1
jax: 0.10.0
libtpu: 0.0.40
codegen_flags: <defaults>
</compile_context>

<pallas_src>
import functools

import jax
import jax.numpy as jnp
from jax.experimental import pallas as pl
from jax.experimental.pallas import tpu as pltpu

EPS = 1e-5  # nn.InstanceNorm3d default eps


def _round_up(x, m):
    return ((x + m - 1) // m) * m


def _deconv_block_kernel(x_ref, w_ref, mask_ref, o_ref, patch_ref, *,
                         cin, cout, hw, ws, lq, l_true, eps):
    # x_ref:     (1, Cin, Sflat)   f32  1-padded ORIGINAL-resolution volume, flattened
    # w_ref:     (8*Cout, 27*Cin)  bf16 parity-folded weights (rows = parity*Cout + co)
    # mask_ref:  (8*Cout, Lq)      f32  1.0 on real output voxels of that parity row-block
    # o_ref:     (1, 8*Cout, Lq)   f32  lane-dense, parity-major output
    # patch_ref: (27*Cin, Lq)      bf16 VMEM scratch: tap matrix shared by all 8 parities

    # ---- build the shared (27*Cin, Lq) tap matrix: one contiguous lane-offset slice/tap ----
    for jd in range(3):
        for jh in range(3):
            for jw in range(3):
                t = (jd * 3 + jh) * 3 + jw
                off = jd * hw + jh * ws + jw
                patch_ref[pl.ds(t * cin, cin), :] = (
                    x_ref[0, :, pl.ds(off, lq)].astype(jnp.bfloat16))

    # ---- single MXU pass: every parity and every tap in one dot ----
    y = jnp.dot(w_ref[...], patch_ref[...],
                preferred_element_type=jnp.float32)            # (8*Cout, Lq) f32

    # ---- InstanceNorm3d stats (affine=False, biased var) over the valid voxels of all
    #      8 parities.  One-pass E[y^2]-mean^2 in f32 (fine at these magnitudes).
    m = mask_ref[...]
    ym = y * m
    row_s = jnp.sum(ym, axis=1, keepdims=True)                 # (8*Cout, 1)
    row_ss = jnp.sum(ym * y, axis=1, keepdims=True)            # (8*Cout, 1)
    s = row_s[0:cout]
    ss = row_ss[0:cout]
    for p in range(1, 8):                                      # parity-group reduction
        s = s + row_s[p * cout:(p + 1) * cout]
        ss = ss + row_ss[p * cout:(p + 1) * cout]
    inv_n = 1.0 / float(l_true)
    mean = s * inv_n                                           # (Cout, 1)
    var = ss * inv_n - mean * mean
    inv_std = jax.lax.rsqrt(var + eps)                         # EUP slot

    # ---- normalize + ReLU, written per parity block (aligned sublane slices) ----
    for p in range(8):
        yp = y[p * cout:(p + 1) * cout]                        # (Cout, Lq)
        o_ref[0, pl.ds(p * cout, cout), :] = jnp.maximum((yp - mean) * inv_std, 0.0)


@functools.partial(jax.jit, static_argnames=("kernel_size", "padding"))
def deconv3d_block(x, weight, bias=None, *, kernel_size=4, padding=1):
    """x: (N, Cin, D, H, W); weight: (Cout, Cin, 4, 4, 4).

    bias is unused: it is a per-channel constant and InstanceNorm3d(affine=False)
    cancels it exactly (do NOT drop it if the norm ever becomes affine=True).
    """
    del bias
    if kernel_size != 4 or padding != 1:
        raise NotImplementedError("sub-pixel fold is derived for kernel_size=4, padding=1")
    N, Cin, D, H, W = x.shape
    Cout = weight.shape[0]
    Do, Ho, Wo = 2 * D - 1, 2 * H - 1, 2 * W - 1

    # ---- fold Upsample(x2, nearest) into the conv: per-axis parity tap sums on the
    #      1-padded ORIGINAL grid.   r=0: [W0, W1+W2, W3]   r=1: [0, W0+W1, W2+W3]
    T = jnp.array([[[1, 0, 0, 0], [0, 1, 1, 0], [0, 0, 0, 1]],
                   [[0, 0, 0, 0], [1, 1, 0, 0], [0, 0, 1, 1]]], jnp.float32)   # (2,3,4)
    weff = jnp.einsum('adx,bey,cfz,oixyz->abcodefi', T, T, T,
                      weight.astype(jnp.float32))        # (rd,rh,rw,Cout,jd,jh,jw,Cin)
    w_lhs = weff.reshape(8 * Cout, 27 * Cin).astype(jnp.bfloat16)

    # ---- 1-padded original-resolution volume, flattened (input-strided virtual grid) ----
    ws_ = W + 2
    hw = (H + 2) * ws_
    Spad = (D + 2) * hw
    Lq = _round_up(D * hw, 128)                  # lane-dense virtual base-position axis
    max_off = 2 * hw + 2 * ws_ + 2               # largest tap offset
    Sflat = _round_up(max(Spad, Lq + max_off), 128)
    xpad = jnp.pad(x.astype(jnp.float32), ((0, 0), (0, 0), (1, 1), (1, 1), (1, 1)))
    x_flat = jnp.pad(xpad.reshape(N, Cin, Spad), ((0, 0), (0, 0), (0, Sflat - Spad)))

    # ---- validity mask per (parity, base position) for the InstanceNorm statistics ----
    col = jnp.arange(Lq, dtype=jnp.int32)
    bw = col % ws_
    bh = (col // ws_) % (H + 2)
    bd = col // hw
    mask8 = jnp.stack([((bd < D - rd) & (bh < H - rh) & (bw < W - rw))
                       for rd in range(2) for rh in range(2) for rw in range(2)],
                      axis=0).astype(jnp.float32)                       # (8, Lq)
    mask_full = jnp.repeat(mask8, Cout, axis=0)                         # (8*Cout, Lq)

    L_true = Do * Ho * Wo
    kernel = functools.partial(_deconv_block_kernel, cin=Cin, cout=Cout, hw=hw,
                               ws=ws_, lq=Lq, l_true=L_true, eps=EPS)

    flops = 2 * N * (8 * Cout) * (27 * Cin) * Lq
    bytes_accessed = (x_flat.size * 4 + w_lhs.size * 2 + mask_full.size * 4
                      + N * 8 * Cout * Lq * 4)

    out = pl.pallas_call(
        kernel,
        out_shape=jax.ShapeDtypeStruct((N, 8 * Cout, Lq), jnp.float32),
        grid_spec=pltpu.PrefetchScalarGridSpec(
            num_scalar_prefetch=0,
            grid=(N,),
            in_specs=[
                pl.BlockSpec((1, Cin, Sflat), lambda n: (n, 0, 0)),
                pl.BlockSpec((8 * Cout, 27 * Cin), lambda n: (0, 0)),
                pl.BlockSpec((8 * Cout, Lq), lambda n: (0, 0)),
            ],
            out_specs=pl.BlockSpec((1, 8 * Cout, Lq), lambda n: (n, 0, 0)),
            scratch_shapes=[
                pltpu.VMEM((27 * Cin, Lq), jnp.bfloat16),   # shared tap matrix (MXU RHS)
            ],
        ),
        compiler_params=pltpu.CompilerParams(
            dimension_semantics=("parallel",)),
        cost_estimate=pl.CostEstimate(flops=flops, transcendentals=N * Cout,
                                      bytes_accessed=bytes_accessed),
    )(x_flat, w_lhs, mask_full)

    # ---- un-interleave the 8 parities back to (N, Cout, Do, Ho, Wo): layout plumbing ----
    y = out[:, :, :D * hw].reshape(N, 2, 2, 2, Cout, D, H + 2, W + 2)[..., :H, :W]
    y = jnp.transpose(y, (0, 4, 5, 1, 6, 2, 7, 3))       # (N, Cout, D, rd, H, rh, W, rw)
    y = y.reshape(N, Cout, 2 * D, 2 * H, 2 * W)
    return y[:, :, :Do, :Ho, :Wo]


# ------------------------- pure-JAX reference (no Pallas) -------------------------

def _nearest_upsample_x2(x_ncdhw):
    x = jnp.repeat(x_ncdhw, 2, axis=2)
    x = jnp.repeat(x, 2, axis=3)
    x = jnp.repeat(x, 2, axis=4)
    return x


def _im2col_3d(x_cl, k, pad):
    N, D, H, W, Cin = x_cl.shape
    xp = jnp.pad(x_cl, ((0, 0), (pad, pad), (pad, pad), (pad, pad), (0, 0)))
    Do, Ho, Wo = D + 2 * pad - k + 1, H + 2 * pad - k + 1, W + 2 * pad - k + 1
    cols = []
    for kd in range(k):
        for kh in range(k):
            for kw in range(k):
                cols.append(xp[:, kd:kd + Do, kh:kh + Ho, kw:kw + Wo, :])
    patches = jnp.stack(cols, axis=-2)
    L = Do * Ho * Wo
    return patches.reshape(N, L, k * k * k * Cin), (Do, Ho, Wo)


def _reference(x_ncdhw, weight, bias, *, kernel_size=4, padding=1):
    k = kernel_size
    Cout = weight.shape[0]
    x_up = _nearest_upsample_x2(x_ncdhw.astype(jnp.float32))
    x_cl = jnp.transpose(x_up, (0, 2, 3, 4, 1))
    patches, (Do, Ho, Wo) = _im2col_3d(x_cl, k, padding)
    w2 = jnp.transpose(weight.astype(jnp.float32), (2, 3, 4, 1, 0)).reshape(-1, Cout)
    y = jnp.einsum("nlk,kc->nlc", patches, w2) + bias[None, None, :]
    mean = jnp.mean(y, axis=1, keepdims=True)
    var = jnp.mean((y - mean) ** 2, axis=1, keepdims=True)
    y = jnp.maximum((y - mean) * jax.lax.rsqrt(var + EPS), 0.0)
    return jnp.transpose(y.reshape(-1, Do, Ho, Wo, Cout), (0, 4, 1, 2, 3))


if __name__ == "__main__":
    # Small shapes consistent with the module: batch=2, in_channels=4, out_channels=8,
    # spatial=8^3 (NCDHW); output spatial = 2*8 - 1 = 15.
    N, Cin, Cout, D = 2, 4, 8, 8
    K = 4

    key = jax.random.PRNGKey(0)
    kx, kw_, kb = jax.random.split(key, 3)
    x = jax.random.normal(kx, (N, Cin, D, D, D), dtype=jnp.float32)
    fan_in = Cin * K * K * K
    bound = 1.0 / (fan_in ** 0.5)
    weight = jax.random.uniform(kw_, (Cout, Cin, K, K, K), jnp.float32, -bound, bound)
    bias = jax.random.uniform(kb, (Cout,), jnp.float32, -bound, bound)

    y = deconv3d_block(x, weight, bias, kernel_size=K, padding=1)
    y = jax.block_until_ready(y)

    y_ref = jax.block_until_ready(_reference(x, weight, bias, kernel_size=K, padding=1))
    assert y.shape == (N, Cout, 2 * D - 1, 2 * D - 1, 2 * D - 1), y.shape
    # bf16 MXU operands (folded weights + patch) with f32 accumulation -> loosened tolerance
    # on normalized outputs.
    assert jnp.allclose(y, y_ref, rtol=5e-2, atol=5e-2), float(jnp.max(jnp.abs(y - y_ref)))

    print("KERNEL_OK")
</pallas_src>

<mosaic_0001>
module attributes {stable_mosaic.version = 11 : i64} {
  func.func @_deconv_block_kernel(%arg0: i32, %arg1: memref<1x4x1152xf32, #tpu.memory_space<vmem>>, %arg2: memref<64x108xbf16, #tpu.memory_space<vmem>>, %arg3: memref<64x896xf32, #tpu.memory_space<vmem>>, %arg4: memref<1x64x896xf32, #tpu.memory_space<vmem>>, %arg5: memref<108x896xbf16, #tpu.memory_space<vmem>>) attributes {dimension_semantics = [#tpu.dimension_semantics<parallel>], iteration_bounds = array<i64: 2>, scalar_prefetch = 0 : i64, scratch_operands = 1 : i64, tpu.core_type = #tpu.core_type<tc>, window_params = [{transform_indices = @transform_0, window_bounds = array<i64: 1, 4, 1152>}, {pipeline_mode = #tpu.pipeline_mode<synchronous>, transform_indices = @transform_1, window_bounds = array<i64: 64, 108>}, {pipeline_mode = #tpu.pipeline_mode<synchronous>, transform_indices = @transform_2, window_bounds = array<i64: 64, 896>}, {transform_indices = @transform_3, window_bounds = array<i64: 1, 64, 896>}]} {
    %c0 = arith.constant 0 : index
    %c0_0 = arith.constant 0 : index
    %c0_1 = arith.constant 0 : index
    %0 = vector.load %arg1[%c0, %c0_0, %c0_1] : memref<1x4x1152xf32, #tpu.memory_space<vmem>>, vector<1x4x896xf32>
    %1 = vector.shape_cast %0 : vector<1x4x896xf32> to vector<4x896xf32>
    %2 = arith.truncf %1 : vector<4x896xf32> to vector<4x896xbf16>
    %c0_2 = arith.constant 0 : index
    %c0_3 = arith.constant 0 : index
    %3 = vector.load %arg5[%c0_2, %c0_3] : memref<108x896xbf16, #tpu.memory_space<vmem>>, vector<4x896xbf16>
    tpu.vector_store %arg5[%c0_2, %c0_3], %2 {strides = array<i32>} : memref<108x896xbf16, #tpu.memory_space<vmem>>, vector<4x896xbf16>,
    %c0_4 = arith.constant 0 : index
    %c0_5 = arith.constant 0 : index
    %c1 = arith.constant 1 : index
    %4 = vector.load %arg1[%c0_4, %c0_5, %c1] : memref<1x4x1152xf32, #tpu.memory_space<vmem>>, vector<1x4x896xf32>
    %5 = vector.shape_cast %4 : vector<1x4x896xf32> to vector<4x896xf32>
    %6 = arith.truncf %5 : vector<4x896xf32> to vector<4x896xbf16>
    %c4 = arith.constant 4 : index
    %c0_6 = arith.constant 0 : index
    %7 = vector.load %arg5[%c4, %c0_6] : memref<108x896xbf16, #tpu.memory_space<vmem>>, vector<4x896xbf16>
    tpu.vector_store %arg5[%c4, %c0_6], %6 {strides = array<i32>} : memref<108x896xbf16, #tpu.memory_space<vmem>>, vector<4x896xbf16>,
    %c0_7 = arith.constant 0 : index
    %c0_8 = arith.constant 0 : index
    %c2 = arith.constant 2 : index
    %8 = vector.load %arg1[%c0_7, %c0_8, %c2] : memref<1x4x1152xf32, #tpu.memory_space<vmem>>, vector<1x4x896xf32>
    %9 = vector.shape_cast %8 : vector<1x4x896xf32> to vector<4x896xf32>
    %10 = arith.truncf %9 : vector<4x896xf32> to vector<4x896xbf16>
    %c8 = arith.constant 8 : index
    %c0_9 = arith.constant 0 : index
    %11 = vector.load %arg5[%c8, %c0_9] : memref<108x896xbf16, #tpu.memory_space<vmem>>, vector<4x896xbf16>
    tpu.vector_store %arg5[%c8, %c0_9], %10 {strides = array<i32>} : memref<108x896xbf16, #tpu.memory_space<vmem>>, vector<4x896xbf16>,
    %c0_10 = arith.constant 0 : index
    %c0_11 = arith.constant 0 : index
    %c10 = arith.constant 10 : index
    %12 = vector.load %arg1[%c0_10, %c0_11, %c10] : memref<1x4x1152xf32, #tpu.memory_space<vmem>>, vector<1x4x896xf32>
    %13 = vector.shape_cast %12 : vector<1x4x896xf32> to vector<4x896xf32>
    %14 = arith.truncf %13 : vector<4x896xf32> to vector<4x896xbf16>
    %c12 = arith.constant 12 : index
    %c0_12 = arith.constant 0 : index
    %15 = vector.load %arg5[%c12, %c0_12] : memref<108x896xbf16, #tpu.memory_space<vmem>>, vector<4x896xbf16>
    tpu.vector_store %arg5[%c12, %c0_12], %14 {strides = array<i32>} : memref<108x896xbf16, #tpu.memory_space<vmem>>, vector<4x896xbf16>,
    %c0_13 = arith.constant 0 : index
    %c0_14 = arith.constant 0 : index
    %c11 = arith.constant 11 : index
    %16 = vector.load %arg1[%c0_13, %c0_14, %c11] : memref<1x4x1152xf32, #tpu.memory_space<vmem>>, vector<1x4x896xf32>
    %17 = vector.shape_cast %16 : vector<1x4x896xf32> to vector<4x896xf32>
    %18 = arith.truncf %17 : vector<4x896xf32> to vector<4x896xbf16>
    %c16 = arith.constant 16 : index
    %c0_15 = arith.constant 0 : index
    %19 = vector.load %arg5[%c16, %c0_15] : memref<108x896xbf16, #tpu.memory_space<vmem>>, vector<4x896xbf16>
    tpu.vector_store %arg5[%c16, %c0_15], %18 {strides = array<i32>} : memref<108x896xbf16, #tpu.memory_space<vmem>>, vector<4x896xbf16>,
    %c0_16 = arith.constant 0 : index
    %c0_17 = arith.constant 0 : index
    %c12_18 = arith.constant 12 : index
    %20 = vector.load %arg1[%c0_16, %c0_17, %c12_18] : memref<1x4x1152xf32, #tpu.memory_space<vmem>>, vector<1x4x896xf32>
    %21 = vector.shape_cast %20 : vector<1x4x896xf32> to vector<4x896xf32>
    %22 = arith.truncf %21 : vector<4x896xf32> to vector<4x896xbf16>
    %c20 = arith.constant 20 : index
    %c0_19 = arith.constant 0 : index
    %23 = vector.load %arg5[%c20, %c0_19] : memref<108x896xbf16, #tpu.memory_space<vmem>>, vector<4x896xbf16>
    tpu.vector_store %arg5[%c20, %c0_19], %22 {strides = array<i32>} : memref<108x896xbf16, #tpu.memory_space<vmem>>, vector<4x896xbf16>,
    %c0_20 = arith.constant 0 : index
    %c0_21 = arith.constant 0 : index
    %c20_22 = arith.constant 20 : index
    %24 = vector.load %arg1[%c0_20, %c0_21, %c20_22] : memref<1x4x1152xf32, #tpu.memory_space<vmem>>, vector<1x4x896xf32>
    %25 = vector.shape_cast %24 : vector<1x4x896xf32> to vector<4x896xf32>
    %26 = arith.truncf %25 : vector<4x896xf32> to vector<4x896xbf16>
    %c24 = arith.constant 24 : index
    %c0_23 = arith.constant 0 : index
    %27 = vector.load %arg5[%c24, %c0_23] : memref<108x896xbf16, #tpu.memory_space<vmem>>, vector<4x896xbf16>
    tpu.vector_store %arg5[%c24, %c0_23], %26 {strides = array<i32>} : memref<108x896xbf16, #tpu.memory_space<vmem>>, vector<4x896xbf16>,
    %c0_24 = arith.constant 0 : index
    %c0_25 = arith.constant 0 : index
    %c21 = arith.constant 21 : index
    %28 = vector.load %arg1[%c0_24, %c0_25, %c21] : memref<1x4x1152xf32, #tpu.memory_space<vmem>>, vector<1x4x896xf32>
    %29 = vector.shape_cast %28 : vector<1x4x896xf32> to vector<4x896xf32>
    %30 = arith.truncf %29 : vector<4x896xf32> to vector<4x896xbf16>
    %c28 = arith.constant 28 : index
    %c0_26 = arith.constant 0 : index
    %31 = vector.load %arg5[%c28, %c0_26] : memref<108x896xbf16, #tpu.memory_space<vmem>>, vector<4x896xbf16>
    tpu.vector_store %arg5[%c28, %c0_26], %30 {strides = array<i32>} : memref<108x896xbf16, #tpu.memory_space<vmem>>, vector<4x896xbf16>,
    %c0_27 = arith.constant 0 : index
    %c0_28 = arith.constant 0 : index
    %c22 = arith.constant 22 : index
    %32 = vector.load %arg1[%c0_27, %c0_28, %c22] : memref<1x4x1152xf32, #tpu.memory_space<vmem>>, vector<1x4x896xf32>
    %33 = vector.shape_cast %32 : vector<1x4x896xf32> to vector<4x896xf32>
    %34 = arith.truncf %33 : vector<4x896xf32> to vector<4x896xbf16>
    %c32 = arith.constant 32 : index
    %c0_29 = arith.constant 0 : index
    %35 = vector.load %arg5[%c32, %c0_29] : memref<108x896xbf16, #tpu.memory_space<vmem>>, vector<4x896xbf16>
    tpu.vector_store %arg5[%c32, %c0_29], %34 {strides = array<i32>} : memref<108x896xbf16, #tpu.memory_space<vmem>>, vector<4x896xbf16>,
    %c0_30 = arith.constant 0 : index
    %c0_31 = arith.constant 0 : index
    %c100 = arith.constant 100 : index
    %36 = vector.load %arg1[%c0_30, %c0_31, %c100] : memref<1x4x1152xf32, #tpu.memory_space<vmem>>, vector<1x4x896xf32>
    %37 = vector.shape_cast %36 : vector<1x4x896xf32> to vector<4x896xf32>
    %38 = arith.truncf %37 : vector<4x896xf32> to vector<4x896xbf16>
    %c36 = arith.constant 36 : index
    %c0_32 = arith.constant 0 : index
    %39 = vector.load %arg5[%c36, %c0_32] : memref<108x896xbf16, #tpu.memory_space<vmem>>, vector<4x896xbf16>
    tpu.vector_store %arg5[%c36, %c0_32], %38 {strides = array<i32>} : memref<108x896xbf16, #tpu.memory_space<vmem>>, vector<4x896xbf16>,
    %c0_33 = arith.constant 0 : index
    %c0_34 = arith.constant 0 : index
    %c101 = arith.constant 101 : index
    %40 = vector.load %arg1[%c0_33, %c0_34, %c101] : memref<1x4x1152xf32, #tpu.memory_space<vmem>>, vector<1x4x896xf32>
    %41 = vector.shape_cast %40 : vector<1x4x896xf32> to vector<4x896xf32>
    %42 = arith.truncf %41 : vector<4x896xf32> to vector<4x896xbf16>
    %c40 = arith.constant 40 : index
    %c0_35 = arith.constant 0 : index
    %43 = vector.load %arg5[%c40, %c0_35] : memref<108x896xbf16, #tpu.memory_space<vmem>>, vector<4x896xbf16>
    tpu.vector_store %arg5[%c40, %c0_35], %42 {strides = array<i32>} : memref<108x896xbf16, #tpu.memory_space<vmem>>, vector<4x896xbf16>,
    %c0_36 = arith.constant 0 : index
    %c0_37 = arith.constant 0 : index
    %c102 = arith.constant 102 : index
    %44 = vector.load %arg1[%c0_36, %c0_37, %c102] : memref<1x4x1152xf32, #tpu.memory_space<vmem>>, vector<1x4x896xf32>
    %45 = vector.shape_cast %44 : vector<1x4x896xf32> to vector<4x896xf32>
    %46 = arith.truncf %45 : vector<4x896xf32> to vector<4x896xbf16>
    %c44 = arith.constant 44 : index
    %c0_38 = arith.constant 0 : index
    %47 = vector.load %arg5[%c44, %c0_38] : memref<108x896xbf16, #tpu.memory_space<vmem>>, vector<4x896xbf16>
    tpu.vector_store %arg5[%c44, %c0_38], %46 {strides = array<i32>} : memref<108x896xbf16, #tpu.memory_space<vmem>>, vector<4x896xbf16>,
    %c0_39 = arith.constant 0 : index
    %c0_40 = arith.constant 0 : index
    %c110 = arith.constant 110 : index
    %48 = vector.load %arg1[%c0_39, %c0_40, %c110] : memref<1x4x1152xf32, #tpu.memory_space<vmem>>, vector<1x4x896xf32>
    %49 = vector.shape_cast %48 : vector<1x4x896xf32> to vector<4x896xf32>
    %50 = arith.truncf %49 : vector<4x896xf32> to vector<4x896xbf16>
    %c48 = arith.constant 48 : index
    %c0_41 = arith.constant 0 : index
    %51 = vector.load %arg5[%c48, %c0_41] : memref<108x896xbf16, #tpu.memory_space<vmem>>, vector<4x896xbf16>
    tpu.vector_store %arg5[%c48, %c0_41], %50 {strides = array<i32>} : memref<108x896xbf16, #tpu.memory_space<vmem>>, vector<4x896xbf16>,
    %c0_42 = arith.constant 0 : index
    %c0_43 = arith.constant 0 : index
    %c111 = arith.constant 111 : index
    %52 = vector.load %arg1[%c0_42, %c0_43, %c111] : memref<1x4x1152xf32, #tpu.memory_space<vmem>>, vector<1x4x896xf32>
    %53 = vector.shape_cast %52 : vector<1x4x896xf32> to vector<4x896xf32>
    %54 = arith.truncf %53 : vector<4x896xf32> to vector<4x896xbf16>
    %c52 = arith.constant 52 : index
    %c0_44 = arith.constant 0 : index
    %55 = vector.load %arg5[%c52, %c0_44] : memref<108x896xbf16, #tpu.memory_space<vmem>>, vector<4x896xbf16>
    tpu.vector_store %arg5[%c52, %c0_44], %54 {strides = array<i32>} : memref<108x896xbf16, #tpu.memory_space<vmem>>, vector<4x896xbf16>,
    %c0_45 = arith.constant 0 : index
    %c0_46 = arith.constant 0 : index
    %c112 = arith.constant 112 : index
    %56 = vector.load %arg1[%c0_45, %c0_46, %c112] : memref<1x4x1152xf32, #tpu.memory_space<vmem>>, vector<1x4x896xf32>
    %57 = vector.shape_cast %56 : vector<1x4x896xf32> to vector<4x896xf32>
    %58 = arith.truncf %57 : vector<4x896xf32> to vector<4x896xbf16>
    %c56 = arith.constant 56 : index
    %c0_47 = arith.constant 0 : index
    %59 = vector.load %arg5[%c56, %c0_47] : memref<108x896xbf16, #tpu.memory_space<vmem>>, vector<4x896xbf16>
    tpu.vector_store %arg5[%c56, %c0_47], %58 {strides = array<i32>} : memref<108x896xbf16, #tpu.memory_space<vmem>>, vector<4x896xbf16>,
    %c0_48 = arith.constant 0 : index
    %c0_49 = arith.constant 0 : index
    %c120 = arith.constant 120 : index
    %60 = vector.load %arg1[%c0_48, %c0_49, %c120] : memref<1x4x1152xf32, #tpu.memory_space<vmem>>, vector<1x4x896xf32>
    %61 = vector.shape_cast %60 : vector<1x4x896xf32> to vector<4x896xf32>
    %62 = arith.truncf %61 : vector<4x896xf32> to vector<4x896xbf16>
    %c60 = arith.constant 60 : index
    %c0_50 = arith.constant 0 : index
    %63 = vector.load %arg5[%c60, %c0_50] : memref<108x896xbf16, #tpu.memory_space<vmem>>, vector<4x896xbf16>
    tpu.vector_store %arg5[%c60, %c0_50], %62 {strides = array<i32>} : memref<108x896xbf16, #tpu.memory_space<vmem>>, vector<4x896xbf16>,
    %c0_51 = arith.constant 0 : index
    %c0_52 = arith.constant 0 : index
    %c121 = arith.constant 121 : index
    %64 = vector.load %arg1[%c0_51, %c0_52, %c121] : memref<1x4x1152xf32, #tpu.memory_space<vmem>>, vector<1x4x896xf32>
    %65 = vector.shape_cast %64 : vector<1x4x896xf32> to vector<4x896xf32>
    %66 = arith.truncf %65 : vector<4x896xf32> to vector<4x896xbf16>
    %c64 = arith.constant 64 : index
    %c0_53 = arith.constant 0 : index
    %67 = vector.load %arg5[%c64, %c0_53] : memref<108x896xbf16, #tpu.memory_space<vmem>>, vector<4x896xbf16>
    tpu.vector_store %arg5[%c64, %c0_53], %66 {strides = array<i32>} : memref<108x896xbf16, #tpu.memory_space<vmem>>, vector<4x896xbf16>,
    %c0_54 = arith.constant 0 : index
    %c0_55 = arith.constant 0 : index
    %c122 = arith.constant 122 : index
    %68 = vector.load %arg1[%c0_54, %c0_55, %c122] : memref<1x4x1152xf32, #tpu.memory_space<vmem>>, vector<1x4x896xf32>
    %69 = vector.shape_cast %68 : vector<1x4x896xf32> to vector<4x896xf32>
    %70 = arith.truncf %69 : vector<4x896xf32> to vector<4x896xbf16>
    %c68 = arith.constant 68 : index
    %c0_56 = arith.constant 0 : index
    %71 = vector.load %arg5[%c68, %c0_56] : memref<108x896xbf16, #tpu.memory_space<vmem>>, vector<4x896xbf16>
    tpu.vector_store %arg5[%c68, %c0_56], %70 {strides = array<i32>} : memref<108x896xbf16, #tpu.memory_space<vmem>>, vector<4x896xbf16>,
    %c0_57 = arith.constant 0 : index
    %c0_58 = arith.constant 0 : index
    %c200 = arith.constant 200 : index
    %72 = vector.load %arg1[%c0_57, %c0_58, %c200] : memref<1x4x1152xf32, #tpu.memory_space<vmem>>, vector<1x4x896xf32>
    %73 = vector.shape_cast %72 : vector<1x4x896xf32> to vector<4x896xf32>
    %74 = arith.truncf %73 : vector<4x896xf32> to vector<4x896xbf16>
    %c72 = arith.constant 72 : index
    %c0_59 = arith.constant 0 : index
    %75 = vector.load %arg5[%c72, %c0_59] : memref<108x896xbf16, #tpu.memory_space<vmem>>, vector<4x896xbf16>
    tpu.vector_store %arg5[%c72, %c0_59], %74 {strides = array<i32>} : memref<108x896xbf16, #tpu.memory_space<vmem>>, vector<4x896xbf16>,
    %c0_60 = arith.constant 0 : index
    %c0_61 = arith.constant 0 : index
    %c201 = arith.constant 201 : index
    %76 = vector.load %arg1[%c0_60, %c0_61, %c201] : memref<1x4x1152xf32, #tpu.memory_space<vmem>>, vector<1x4x896xf32>
    %77 = vector.shape_cast %76 : vector<1x4x896xf32> to vector<4x896xf32>
    %78 = arith.truncf %77 : vector<4x896xf32> to vector<4x896xbf16>
    %c76 = arith.constant 76 : index
    %c0_62 = arith.constant 0 : index
    %79 = vector.load %arg5[%c76, %c0_62] : memref<108x896xbf16, #tpu.memory_space<vmem>>, vector<4x896xbf16>
    tpu.vector_store %arg5[%c76, %c0_62], %78 {strides = array<i32>} : memref<108x896xbf16, #tpu.memory_space<vmem>>, vector<4x896xbf16>,
    %c0_63 = arith.constant 0 : index
    %c0_64 = arith.constant 0 : index
    %c202 = arith.constant 202 : index
    %80 = vector.load %arg1[%c0_63, %c0_64, %c202] : memref<1x4x1152xf32, #tpu.memory_space<vmem>>, vector<1x4x896xf32>
    %81 = vector.shape_cast %80 : vector<1x4x896xf32> to vector<4x896xf32>
    %82 = arith.truncf %81 : vector<4x896xf32> to vector<4x896xbf16>
    %c80 = arith.constant 80 : index
    %c0_65 = arith.constant 0 : index
    %83 = vector.load %arg5[%c80, %c0_65] : memref<108x896xbf16, #tpu.memory_space<vmem>>, vector<4x896xbf16>
    tpu.vector_store %arg5[%c80, %c0_65], %82 {strides = array<i32>} : memref<108x896xbf16, #tpu.memory_space<vmem>>, vector<4x896xbf16>,
    %c0_66 = arith.constant 0 : index
    %c0_67 = arith.constant 0 : index
    %c210 = arith.constant 210 : index
    %84 = vector.load %arg1[%c0_66, %c0_67, %c210] : memref<1x4x1152xf32, #tpu.memory_space<vmem>>, vector<1x4x896xf32>
    %85 = vector.shape_cast %84 : vector<1x4x896xf32> to vector<4x896xf32>
    %86 = arith.truncf %85 : vector<4x896xf32> to vector<4x896xbf16>
    %c84 = arith.constant 84 : index
    %c0_68 = arith.constant 0 : index
    %87 = vector.load %arg5[%c84, %c0_68] : memref<108x896xbf16, #tpu.memory_space<vmem>>, vector<4x896xbf16>
    tpu.vector_store %arg5[%c84, %c0_68], %86 {strides = array<i32>} : memref<108x896xbf16, #tpu.memory_space<vmem>>, vector<4x896xbf16>,
    %c0_69 = arith.constant 0 : index
    %c0_70 = arith.constant 0 : index
    %c211 = arith.constant 211 : index
    %88 = vector.load %arg1[%c0_69, %c0_70, %c211] : memref<1x4x1152xf32, #tpu.memory_space<vmem>>, vector<1x4x896xf32>
    %89 = vector.shape_cast %88 : vector<1x4x896xf32> to vector<4x896xf32>
    %90 = arith.truncf %89 : vector<4x896xf32> to vector<4x896xbf16>
    %c88 = arith.constant 88 : index
    %c0_71 = arith.constant 0 : index
    %91 = vector.load %arg5[%c88, %c0_71] : memref<108x896xbf16, #tpu.memory_space<vmem>>, vector<4x896xbf16>
    tpu.vector_store %arg5[%c88, %c0_71], %90 {strides = array<i32>} : memref<108x896xbf16, #tpu.memory_space<vmem>>, vector<4x896xbf16>,
    %c0_72 = arith.constant 0 : index
    %c0_73 = arith.constant 0 : index
    %c212 = arith.constant 212 : index
    %92 = vector.load %arg1[%c0_72, %c0_73, %c212] : memref<1x4x1152xf32, #tpu.memory_space<vmem>>, vector<1x4x896xf32>
    %93 = vector.shape_cast %92 : vector<1x4x896xf32> to vector<4x896xf32>
    %94 = arith.truncf %93 : vector<4x896xf32> to vector<4x896xbf16>
    %c92 = arith.constant 92 : index
    %c0_74 = arith.constant 0 : index
    %95 = vector.load %arg5[%c92, %c0_74] : memref<108x896xbf16, #tpu.memory_space<vmem>>, vector<4x896xbf16>
    tpu.vector_store %arg5[%c92, %c0_74], %94 {strides = array<i32>} : memref<108x896xbf16, #tpu.memory_space<vmem>>, vector<4x896xbf16>,
    %c0_75 = arith.constant 0 : index
    %c0_76 = arith.constant 0 : index
    %c220 = arith.constant 220 : index
    %96 = vector.load %arg1[%c0_75, %c0_76, %c220] : memref<1x4x1152xf32, #tpu.memory_space<vmem>>, vector<1x4x896xf32>
    %97 = vector.shape_cast %96 : vector<1x4x896xf32> to vector<4x896xf32>
    %98 = arith.truncf %97 : vector<4x896xf32> to vector<4x896xbf16>
    %c96 = arith.constant 96 : index
    %c0_77 = arith.constant 0 : index
    %99 = vector.load %arg5[%c96, %c0_77] : memref<108x896xbf16, #tpu.memory_space<vmem>>, vector<4x896xbf16>
    tpu.vector_store %arg5[%c96, %c0_77], %98 {strides = array<i32>} : memref<108x896xbf16, #tpu.memory_space<vmem>>, vector<4x896xbf16>,
    %c0_78 = arith.constant 0 : index
    %c0_79 = arith.constant 0 : index
    %c221 = arith.constant 221 : index
    %100 = vector.load %arg1[%c0_78, %c0_79, %c221] : memref<1x4x1152xf32, #tpu.memory_space<vmem>>, vector<1x4x896xf32>
    %101 = vector.shape_cast %100 : vector<1x4x896xf32> to vector<4x896xf32>
    %102 = arith.truncf %101 : vector<4x896xf32> to vector<4x896xbf16>
    %c100_80 = arith.constant 100 : index
    %c0_81 = arith.constant 0 : index
    %103 = vector.load %arg5[%c100_80, %c0_81] : memref<108x896xbf16, #tpu.memory_space<vmem>>, vector<4x896xbf16>
    tpu.vector_store %arg5[%c100_80, %c0_81], %102 {strides = array<i32>} : memref<108x896xbf16, #tpu.memory_space<vmem>>, vector<4x896xbf16>,
    %c0_82 = arith.constant 0 : index
    %c0_83 = arith.constant 0 : index
    %c222 = arith.constant 222 : index
    %104 = vector.load %arg1[%c0_82, %c0_83, %c222] : memref<1x4x1152xf32, #tpu.memory_space<vmem>>, vector<1x4x896xf32>
    %105 = vector.shape_cast %104 : vector<1x4x896xf32> to vector<4x896xf32>
    %106 = arith.truncf %105 : vector<4x896xf32> to vector<4x896xbf16>
    %c104 = arith.constant 104 : index
    %c0_84 = arith.constant 0 : index
    %107 = vector.load %arg5[%c104, %c0_84] : memref<108x896xbf16, #tpu.memory_space<vmem>>, vector<4x896xbf16>
    tpu.vector_store %arg5[%c104, %c0_84], %106 {strides = array<i32>} : memref<108x896xbf16, #tpu.memory_space<vmem>>, vector<4x896xbf16>,
    %c0_85 = arith.constant 0 : index
    %c0_86 = arith.constant 0 : index
    %108 = vector.load %arg2[%c0_85, %c0_86] : memref<64x108xbf16, #tpu.memory_space<vmem>>, vector<64x108xbf16>
    %c0_87 = arith.constant 0 : index
    %c0_88 = arith.constant 0 : index
    %109 = vector.load %arg5[%c0_87, %c0_88] : memref<108x896xbf16, #tpu.memory_space<vmem>>, vector<108x896xbf16>
    %cst = arith.constant dense<0.000000e+00> : vector<64x896xf32>
    %110 = tpu.matmul %108, %109, %cst {dimension_numbers = #tpu.dot_dimension_numbers<[1], [0], [0], [1], [0, 0, 1, 1], [], []>} : vector<64x108xbf16>, vector<108x896xbf16>, vector<64x896xf32> -> vector<64x896xf32>
    %c0_89 = arith.constant 0 : index
    %c0_90 = arith.constant 0 : index
    %111 = vector.load %arg3[%c0_89, %c0_90] : memref<64x896xf32, #tpu.memory_space<vmem>>, vector<64x896xf32>
    %112 = arith.mulf %110, %111 : vector<64x896xf32>
    %cst_91 = arith.constant dense<0.000000e+00> : vector<64xf32>
    %113 = vector.multi_reduction <add>, %112, %cst_91 [1] : vector<64x896xf32> to vector<64xf32>
    %114 = vector.shape_cast %113 : vector<64xf32> to vector<64x1xf32>
    %115 = arith.mulf %112, %110 : vector<64x896xf32>
    %cst_92 = arith.constant dense<0.000000e+00> : vector<64xf32>
    %116 = vector.multi_reduction <add>, %115, %cst_92 [1] : vector<64x896xf32> to vector<64xf32>
    %117 = vector.shape_cast %116 : vector<64xf32> to vector<64x1xf32>
    %118 = vector.extract_strided_slice %114 {offsets = [0, 0], sizes = [8, 1], strides = [1, 1]} : vector<64x1xf32> to vector<8x1xf32>
    %119 = vector.extract_strided_slice %117 {offsets = [0, 0], sizes = [8, 1], strides = [1, 1]} : vector<64x1xf32> to vector<8x1xf32>
    %120 = vector.extract_strided_slice %114 {offsets = [8, 0], sizes = [8, 1], strides = [1, 1]} : vector<64x1xf32> to vector<8x1xf32>
    %121 = arith.addf %118, %120 : vector<8x1xf32>
    %122 = vector.extract_strided_slice %117 {offsets = [8, 0], sizes = [8, 1], strides = [1, 1]} : vector<64x1xf32> to vector<8x1xf32>
    %123 = arith.addf %119, %122 : vector<8x1xf32>
    %124 = vector.extract_strided_slice %114 {offsets = [16, 0], sizes = [8, 1], strides = [1, 1]} : vector<64x1xf32> to vector<8x1xf32>
    %125 = arith.addf %121, %124 : vector<8x1xf32>
    %126 = vector.extract_strided_slice %117 {offsets = [16, 0], sizes = [8, 1], strides = [1, 1]} : vector<64x1xf32> to vector<8x1xf32>
    %127 = arith.addf %123, %126 : vector<8x1xf32>
    %128 = vector.extract_strided_slice %114 {offsets = [24, 0], sizes = [8, 1], strides = [1, 1]} : vector<64x1xf32> to vector<8x1xf32>
    %129 = arith.addf %125, %128 : vector<8x1xf32>
    %130 = vector.extract_strided_slice %117 {offsets = [24, 0], sizes = [8, 1], strides = [1, 1]} : vector<64x1xf32> to vector<8x1xf32>
    %131 = arith.addf %127, %130 : vector<8x1xf32>
    %132 = vector.extract_strided_slice %114 {offsets = [32, 0], sizes = [8, 1], strides = [1, 1]} : vector<64x1xf32> to vector<8x1xf32>
    %133 = arith.addf %129, %132 : vector<8x1xf32>
    %134 = vector.extract_strided_slice %117 {offsets = [32, 0], sizes = [8, 1], strides = [1, 1]} : vector<64x1xf32> to vector<8x1xf32>
    %135 = arith.addf %131, %134 : vector<8x1xf32>
    %136 = vector.extract_strided_slice %114 {offsets = [40, 0], sizes = [8, 1], strides = [1, 1]} : vector<64x1xf32> to vector<8x1xf32>
    %137 = arith.addf %133, %136 : vector<8x1xf32>
    %138 = vector.extract_strided_slice %117 {offsets = [40, 0], sizes = [8, 1], strides = [1, 1]} : vector<64x1xf32> to vector<8x1xf32>
    %139 = arith.addf %135, %138 : vector<8x1xf32>
    %140 = vector.extract_strided_slice %114 {offsets = [48, 0], sizes = [8, 1], strides = [1, 1]} : vector<64x1xf32> to vector<8x1xf32>
    %141 = arith.addf %137, %140 : vector<8x1xf32>
    %142 = vector.extract_strided_slice %117 {offsets = [48, 0], sizes = [8, 1], strides = [1, 1]} : vector<64x1xf32> to vector<8x1xf32>
    %143 = arith.addf %139, %142 : vector<8x1xf32>
    %144 = vector.extract_strided_slice %114 {offsets = [56, 0], sizes = [8, 1], strides = [1, 1]} : vector<64x1xf32> to vector<8x1xf32>
    %145 = arith.addf %141, %144 : vector<8x1xf32>
    %146 = vector.extract_strided_slice %117 {offsets = [56, 0], sizes = [8, 1], strides = [1, 1]} : vector<64x1xf32> to vector<8x1xf32>
    %147 = arith.addf %143, %146 : vector<8x1xf32>
    %cst_93 = arith.constant 2.9629629E-4 : f32
    %148 = vector.broadcast %cst_93 : f32 to vector<8x1xf32>
    %149 = arith.mulf %145, %148 : vector<8x1xf32>
    %cst_94 = arith.constant 2.9629629E-4 : f32
    %150 = vector.broadcast %cst_94 : f32 to vector<8x1xf32>
    %151 = arith.mulf %147, %150 : vector<8x1xf32>
    %152 = arith.mulf %149, %149 : vector<8x1xf32>
    %153 = arith.subf %151, %152 : vector<8x1xf32>
    %cst_95 = arith.constant 9.99999974E-6 : f32
    %154 = vector.broadcast %cst_95 : f32 to vector<8x1xf32>
    %155 = arith.addf %153, %154 : vector<8x1xf32>
    %156 = math.rsqrt %155 : vector<8x1xf32>
    %157 = vector.extract_strided_slice %110 {offsets = [0, 0], sizes = [8, 896], strides = [1, 1]} : vector<64x896xf32> to vector<8x896xf32>
    %158 = vector.broadcast %149 : vector<8x1xf32> to vector<8x896xf32>
    %159 = arith.subf %157, %158 : vector<8x896xf32>
    %160 = vector.broadcast %156 : vector<8x1xf32> to vector<8x896xf32>
    %161 = arith.mulf %159, %160 : vector<8x896xf32>
    %cst_96 = arith.constant 0.000000e+00 : f32
    %162 = vector.broadcast %cst_96 : f32 to vector<8x896xf32>
    %163 = arith.maximumf %161, %162 : vector<8x896xf32>
    %c0_97 = arith.constant 0 : index
    %c0_98 = arith.constant 0 : index
    %c0_99 = arith.constant 0 : index
    %164 = vector.load %arg4[%c0_97, %c0_98, %c0_99] : memref<1x64x896xf32, #tpu.memory_space<vmem>>, vector<1x8x896xf32>
    %165 = vector.shape_cast %164 : vector<1x8x896xf32> to vector<8x896xf32>
    %166 = vector.shape_cast %163 : vector<8x896xf32> to vector<1x8x896xf32>
    tpu.vector_store %arg4[%c0_97, %c0_98, %c0_99], %166 {strides = array<i32>} : memref<1x64x896xf32, #tpu.memory_space<vmem>>, vector<1x8x896xf32>,
    %167 = vector.extract_strided_slice %110 {offsets = [8, 0], sizes = [8, 896], strides = [1, 1]} : vector<64x896xf32> to vector<8x896xf32>
    %168 = vector.broadcast %149 : vector<8x1xf32> to vector<8x896xf32>
    %169 = arith.subf %167, %168 : vector<8x896xf32>
    %170 = vector.broadcast %156 : vector<8x1xf32> to vector<8x896xf32>
    %171 = arith.mulf %169, %170 : vector<8x896xf32>
    %cst_100 = arith.constant 0.000000e+00 : f32
    %172 = vector.broadcast %cst_100 : f32 to vector<8x896xf32>
    %173 = arith.maximumf %171, %172 : vector<8x896xf32>
    %c0_101 = arith.constant 0 : index
    %c8_102 = arith.constant 8 : index
    %c0_103 = arith.constant 0 : index
    %174 = vector.load %arg4[%c0_101, %c8_102, %c0_103] : memref<1x64x896xf32, #tpu.memory_space<vmem>>, vector<1x8x896xf32>
    %175 = vector.shape_cast %174 : vector<1x8x896xf32> to vector<8x896xf32>
    %176 = vector.shape_cast %173 : vector<8x896xf32> to vector<1x8x896xf32>
    tpu.vector_store %arg4[%c0_101, %c8_102, %c0_103], %176 {strides = array<i32>} : memref<1x64x896xf32, #tpu.memory_space<vmem>>, vector<1x8x896xf32>,
    %177 = vector.extract_strided_slice %110 {offsets = [16, 0], sizes = [8, 896], strides = [1, 1]} : vector<64x896xf32> to vector<8x896xf32>
    %178 = vector.broadcast %149 : vector<8x1xf32> to vector<8x896xf32>
    %179 = arith.subf %177, %178 : vector<8x896xf32>
    %180 = vector.broadcast %156 : vector<8x1xf32> to vector<8x896xf32>
    %181 = arith.mulf %179, %180 : vector<8x896xf32>
    %cst_104 = arith.constant 0.000000e+00 : f32
    %182 = vector.broadcast %cst_104 : f32 to vector<8x896xf32>
    %183 = arith.maximumf %181, %182 : vector<8x896xf32>
    %c0_105 = arith.constant 0 : index
    %c16_106 = arith.constant 16 : index
    %c0_107 = arith.constant 0 : index
    %184 = vector.load %arg4[%c0_105, %c16_106, %c0_107] : memref<1x64x896xf32, #tpu.memory_space<vmem>>, vector<1x8x896xf32>
    %185 = vector.shape_cast %184 : vector<1x8x896xf32> to vector<8x896xf32>
    %186 = vector.shape_cast %183 : vector<8x896xf32> to vector<1x8x896xf32>
    tpu.vector_store %arg4[%c0_105, %c16_106, %c0_107], %186 {strides = array<i32>} : memref<1x64x896xf32, #tpu.memory_space<vmem>>, vector<1x8x896xf32>,
    %187 = vector.extract_strided_slice %110 {offsets = [24, 0], sizes = [8, 896], strides = [1, 1]} : vector<64x896xf32> to vector<8x896xf32>
    %188 = vector.broadcast %149 : vector<8x1xf32> to vector<8x896xf32>
    %189 = arith.subf %187, %188 : vector<8x896xf32>
    %190 = vector.broadcast %156 : vector<8x1xf32> to vector<8x896xf32>
    %191 = arith.mulf %189, %190 : vector<8x896xf32>
    %cst_108 = arith.constant 0.000000e+00 : f32
    %192 = vector.broadcast %cst_108 : f32 to vector<8x896xf32>
    %193 = arith.maximumf %191, %192 : vector<8x896xf32>
    %c0_109 = arith.constant 0 : index
    %c24_110 = arith.constant 24 : index
    %c0_111 = arith.constant 0 : index
    %194 = vector.load %arg4[%c0_109, %c24_110, %c0_111] : memref<1x64x896xf32, #tpu.memory_space<vmem>>, vector<1x8x896xf32>
    %195 = vector.shape_cast %194 : vector<1x8x896xf32> to vector<8x896xf32>
    %196 = vector.shape_cast %193 : vector<8x896xf32> to vector<1x8x896xf32>
    tpu.vector_store %arg4[%c0_109, %c24_110, %c0_111], %196 {strides = array<i32>} : memref<1x64x896xf32, #tpu.memory_space<vmem>>, vector<1x8x896xf32>,
    %197 = vector.extract_strided_slice %110 {offsets = [32, 0], sizes = [8, 896], strides = [1, 1]} : vector<64x896xf32> to vector<8x896xf32>
    %198 = vector.broadcast %149 : vector<8x1xf32> to vector<8x896xf32>
    %199 = arith.subf %197, %198 : vector<8x896xf32>
    %200 = vector.broadcast %156 : vector<8x1xf32> to vector<8x896xf32>
    %201 = arith.mulf %199, %200 : vector<8x896xf32>
    %cst_112 = arith.constant 0.000000e+00 : f32
    %202 = vector.broadcast %cst_112 : f32 to vector<8x896xf32>
    %203 = arith.maximumf %201, %202 : vector<8x896xf32>
    %c0_113 = arith.constant 0 : index
    %c32_114 = arith.constant 32 : index
    %c0_115 = arith.constant 0 : index
    %204 = vector.load %arg4[%c0_113, %c32_114, %c0_115] : memref<1x64x896xf32, #tpu.memory_space<vmem>>, vector<1x8x896xf32>
    %205 = vector.shape_cast %204 : vector<1x8x896xf32> to vector<8x896xf32>
    %206 = vector.shape_cast %203 : vector<8x896xf32> to vector<1x8x896xf32>
    tpu.vector_store %arg4[%c0_113, %c32_114, %c0_115], %206 {strides = array<i32>} : memref<1x64x896xf32, #tpu.memory_space<vmem>>, vector<1x8x896xf32>,
    %207 = vector.extract_strided_slice %110 {offsets = [40, 0], sizes = [8, 896], strides = [1, 1]} : vector<64x896xf32> to vector<8x896xf32>
    %208 = vector.broadcast %149 : vector<8x1xf32> to vector<8x896xf32>
    %209 = arith.subf %207, %208 : vector<8x896xf32>
    %210 = vector.broadcast %156 : vector<8x1xf32> to vector<8x896xf32>
    %211 = arith.mulf %209, %210 : vector<8x896xf32>
    %cst_116 = arith.constant 0.000000e+00 : f32
    %212 = vector.broadcast %cst_116 : f32 to vector<8x896xf32>
    %213 = arith.maximumf %211, %212 : vector<8x896xf32>
    %c0_117 = arith.constant 0 : index
    %c40_118 = arith.constant 40 : index
    %c0_119 = arith.constant 0 : index
    %214 = vector.load %arg4[%c0_117, %c40_118, %c0_119] : memref<1x64x896xf32, #tpu.memory_space<vmem>>, vector<1x8x896xf32>
    %215 = vector.shape_cast %214 : vector<1x8x896xf32> to vector<8x896xf32>
    %216 = vector.shape_cast %213 : vector<8x896xf32> to vector<1x8x896xf32>
    tpu.vector_store %arg4[%c0_117, %c40_118, %c0_119], %216 {strides = array<i32>} : memref<1x64x896xf32, #tpu.memory_space<vmem>>, vector<1x8x896xf32>,
    %217 = vector.extract_strided_slice %110 {offsets = [48, 0], sizes = [8, 896], strides = [1, 1]} : vector<64x896xf32> to vector<8x896xf32>
    %218 = vector.broadcast %149 : vector<8x1xf32> to vector<8x896xf32>
    %219 = arith.subf %217, %218 : vector<8x896xf32>
    %220 = vector.broadcast %156 : vector<8x1xf32> to vector<8x896xf32>
    %221 = arith.mulf %219, %220 : vector<8x896xf32>
    %cst_120 = arith.constant 0.000000e+00 : f32
    %222 = vector.broadcast %cst_120 : f32 to vector<8x896xf32>
    %223 = arith.maximumf %221, %222 : vector<8x896xf32>
    %c0_121 = arith.constant 0 : index
    %c48_122 = arith.constant 48 : index
    %c0_123 = arith.constant 0 : index
    %224 = vector.load %arg4[%c0_121, %c48_122, %c0_123] : memref<1x64x896xf32, #tpu.memory_space<vmem>>, vector<1x8x896xf32>
    %225 = vector.shape_cast %224 : vector<1x8x896xf32> to vector<8x896xf32>
    %226 = vector.shape_cast %223 : vector<8x896xf32> to vector<1x8x896xf32>
    tpu.vector_store %arg4[%c0_121, %c48_122, %c0_123], %226 {strides = array<i32>} : memref<1x64x896xf32, #tpu.memory_space<vmem>>, vector<1x8x896xf32>,
    %227 = vector.extract_strided_slice %110 {offsets = [56, 0], sizes = [8, 896], strides = [1, 1]} : vector<64x896xf32> to vector<8x896xf32>
    %228 = vector.broadcast %149 : vector<8x1xf32> to vector<8x896xf32>
    %229 = arith.subf %227, %228 : vector<8x896xf32>
    %230 = vector.broadcast %156 : vector<8x1xf32> to vector<8x896xf32>
    %231 = arith.mulf %229, %230 : vector<8x896xf32>
    %cst_124 = arith.constant 0.000000e+00 : f32
    %232 = vector.broadcast %cst_124 : f32 to vector<8x896xf32>
    %233 = arith.maximumf %231, %232 : vector<8x896xf32>
    %c0_125 = arith.constant 0 : index
    %c56_126 = arith.constant 56 : index
    %c0_127 = arith.constant 0 : index
    %234 = vector.load %arg4[%c0_125, %c56_126, %c0_127] : memref<1x64x896xf32, #tpu.memory_space<vmem>>, vector<1x8x896xf32>
    %235 = vector.shape_cast %234 : vector<1x8x896xf32> to vector<8x896xf32>
    %236 = vector.shape_cast %233 : vector<8x896xf32> to vector<1x8x896xf32>
    tpu.vector_store %arg4[%c0_125, %c56_126, %c0_127], %236 {strides = array<i32>} : memref<1x64x896xf32, #tpu.memory_space<vmem>>, vector<1x8x896xf32>,
    return
  }
  func.func @transform_0(%arg0: i32) -> (i32, i32, i32) {
    %c0_i32 = arith.constant 0 : i32
    %c0_i32_0 = arith.constant 0 : i32
    %c0_i32_1 = arith.constant 0 : i32
    return %arg0, %c0_i32, %c0_i32_0 : i32, i32, i32
  }
  func.func @transform_1(%arg0: i32) -> (i32, i32) {
    %c0_i32 = arith.constant 0 : i32
    %c0_i32_0 = arith.constant 0 : i32
    %c0_i32_1 = arith.constant 0 : i32
    return %c0_i32, %c0_i32_0 : i32, i32
  }
  func.func @transform_2(%arg0: i32) -> (i32, i32) {
    %c0_i32 = arith.constant 0 : i32
    %c0_i32_0 = arith.constant 0 : i32
    %c0_i32_1 = arith.constant 0 : i32
    return %c0_i32, %c0_i32_0 : i32, i32
  }
  func.func @transform_3(%arg0: i32) -> (i32, i32, i32) {
    %c0_i32 = arith.constant 0 : i32
    %c0_i32_0 = arith.constant 0 : i32
    %c0_i32_1 = arith.constant 0 : i32
    return %arg0, %c0_i32, %c0_i32_0 : i32, i32, i32
  }
}

</mosaic_0001>

<llo_original>
// kernel: deconv3d_block.1
$region0: #{deconv3d_block.1}
  #allocation0 [shape = 'u32[]', space=smem, size = 0x4, offset = 0x4, fixed_abs, tag = 'smem constant byte address 0x4 - core index']
  #allocation1 [shape = 'u32[144,128]{1,0:T(1,128)}', space=vmem, size = 0x12000, scoped, tag = 'internal scratch']
  #allocation2 [shape = 'bf16[108,896]{1,0:T(8,128)(2,1)}', space=vmem, size = 0x31000, scoped, tag = 'scratch operand']
  %s0 = inlined_call_operand.vmem [shape: f32[2,4,1152], index: 0, kind: input, shape index: {}]
  %s1 = inlined_call_operand.vmem [shape: bf16[64,108], index: 1, kind: input, shape index: {}]
  %s2 = inlined_call_operand.vmem [shape: f32[64,896], index: 2, kind: input, shape index: {}]
  %s3 = inlined_call_operand.vmem [shape: f32[2,64,896], index: 3, kind: output, shape index: {}]
  %s4 = sld [smem:[#allocation0]]
  $region45: #{deconv3d_block.1} parent=0
    _
  %s6 = ssub.s32 1, %s4
  %s7 = scalar_select 0, %s6, %s4
  loop: start=0, step=1, limit=4
  $region2: #{deconv3d_block.1} parent=0 // loop_pre_header
    _
  $region3: #{deconv3d_block.1} parent=0 // loop_header
    %s9 = sphi 0, %s13
    %p10 = scmp.ge.s32.totalorder %s9, 4
    %s19 = sphi 0, %s21
    %s22 = sphi 0, %s19
    %s23 = sphi 0, %s22
    %s39 = sphi 0, %s23
    %s43 = sphi 0, %s43
    %s45 = sphi 0, %s43
    %s46 = sphi 0, %s45
    %s60 = sphi 0, %s46
    %s64 = sphi 0, %s64
    %s66 = sphi 0, %s64
    %s67 = sphi 0, %s66
    %s81 = sphi 0, %s67
    %s87 = sphi 0, %s89
    %s90 = sphi 0, %s87
    %s91 = sphi 0, %s90
    %s107 = sphi 0, %s91
  $region4: #{deconv3d_block.1} parent=0 // loop_header_branch
    %12 = sbr.rel (%p10) target = $region8
  $region5: #{deconv3d_block.1} parent=0 // loop_body
    %s14 = ssub.s32 %s9, 1
    %s15 = ssub.s32 %s9, 2
    %s16 = sadd.s32 %s9, 1
    %s17 = ssub.s32 %s9, %s16
    %p18 = scmp.eq.s32.totalorder %s17, 0
    %s20 = sadd.s32 %s19, 1
    %s21 = scalar_select %p18, %s19, %s20
    %p24 = pneg %p18
    %p25 = scmp.eq.s32.totalorder %s9, 1
    %p26 = por %p24, %p25
    %p27 = scmp.ne.s32.totalorder %s19, %s22
    %p28 = scmp.eq.s32.totalorder %s9, 0
    %p29 = por %p27, %p28
    %p30 = scmp.ne.s32.totalorder %s19, %s22
    %p31 = scmp.eq.s32.totalorder %s14, 1
    %p32 = por %p30, %p31
    %p33 = scmp.ne.s32.totalorder %s22, %s23
    %p34 = scmp.eq.s32.totalorder %s14, 0
    %p35 = por %p33, %p34
    %p36 = scmp.ne.s32.totalorder %s22, %s23
    %p37 = scmp.eq.s32.totalorder %s15, 1
    %p38 = por %p36, %p37
    %p40 = scmp.ne.s32.totalorder %s23, %s39
    %p41 = scmp.eq.s32.totalorder %s15, 0
    %p42 = por %p40, %p41
    %s44 = sadd.s32 %s43, 1
    %p47 = scmp.eq.s32.totalorder %s9, 1
    %p48 = scmp.ne.s32.totalorder %s43, %s45
    %p49 = scmp.eq.s32.totalorder %s9, 0
    %p50 = por %p48, %p49
    %p51 = scmp.ne.s32.totalorder %s43, %s45
    %p52 = scmp.eq.s32.totalorder %s14, 1
    %p53 = por %p51, %p52
    %p54 = scmp.ne.s32.totalorder %s45, %s46
    %p55 = scmp.eq.s32.totalorder %s14, 0
    %p56 = por %p54, %p55
    %p57 = scmp.ne.s32.totalorder %s45, %s46
    %p58 = scmp.eq.s32.totalorder %s15, 1
    %p59 = por %p57, %p58
    %p61 = scmp.ne.s32.totalorder %s46, %s60
    %p62 = scmp.eq.s32.totalorder %s15, 0
    %p63 = por %p61, %p62
    %s65 = sadd.s32 %s64, 1
    %p68 = scmp.eq.s32.totalorder %s9, 1
    %p69 = scmp.ne.s32.totalorder %s64, %s66
    %p70 = scmp.eq.s32.totalorder %s9, 0
    %p71 = por %p69, %p70
    %p72 = scmp.ne.s32.totalorder %s64, %s66
    %p73 = scmp.eq.s32.totalorder %s14, 1
    %p74 = por %p72, %p73
    %p75 = scmp.ne.s32.totalorder %s66, %s67
    %p76 = scmp.eq.s32.totalorder %s14, 0
    %p77 = por %p75, %p76
    %p78 = scmp.ne.s32.totalorder %s66, %s67
    %p79 = scmp.eq.s32.totalorder %s15, 1
    %p80 = por %p78, %p79
    %p82 = scmp.ne.s32.totalorder %s67, %s81
    %p83 = scmp.eq.s32.totalorder %s15, 0
    %p84 = por %p82, %p83
    %s85 = ssub.s32 %s9, %s16
    %p86 = scmp.eq.s32.totalorder %s85, 0
    %s88 = sadd.s32 %s87, 1
    %s89 = scalar_select %p86, %s87, %s88
    %p92 = pneg %p86
    %p93 = scmp.eq.s32.totalorder %s9, 1
    %p94 = por %p92, %p93
    %p95 = scmp.ne.s32.totalorder %s87, %s90
    %p96 = scmp.eq.s32.totalorder %s9, 0
    %p97 = por %p95, %p96
    %p98 = scmp.ne.s32.totalorder %s87, %s90
    %p99 = scmp.eq.s32.totalorder %s14, 1
    %p100 = por %p98, %p99
    %p101 = scmp.ne.s32.totalorder %s90, %s91
    %p102 = scmp.eq.s32.totalorder %s14, 0
    %p103 = por %p101, %p102
    %p104 = scmp.ne.s32.totalorder %s90, %s91
    %p105 = scmp.eq.s32.totalorder %s15, 1
    %p106 = por %p104, %p105
    %p108 = scmp.ne.s32.totalorder %s91, %s107
    %p109 = scmp.eq.s32.totalorder %s15, 0
    %p110 = por %p108, %p109
    %p111 = scmp.le.s32.totalorder 1, %s9
    %p112 = scmp.lt.s32.totalorder %s9, 3
    %p113 = pnand %p111, %p112
    %p114 = pneg %p113
    // Predicated region
    $region9: #{deconv3d_block.1} parent=5 // pred_check
      _
    $region10: #{deconv3d_block.1} parent=5 // pred_check_branch
      %116 = sbr.rel (%p113) target = $region12
    $region11: #{deconv3d_block.1} parent=5 // pred_region
      %s117 = ssub.s32 %s9, 1
      // Predicated region
      $region13: #{deconv3d_block.1} parent=11 // pred_check
        %p118 = pneg %p56
      $region14: #{deconv3d_block.1} parent=11 // pred_check_branch
        %120 = sbr.rel (%p118) target = $region16
      $region15: #{deconv3d_block.1} parent=11 // pred_region
        _
      $region16: #{deconv3d_block.1} parent=11 // pred_fallthru
        _
      // Predicated region
      $region17: #{deconv3d_block.1} parent=11 // pred_check
        %p121 = pneg %p77
      $region18: #{deconv3d_block.1} parent=11 // pred_check_branch
        %123 = sbr.rel (%p121) target = $region20
      $region19: #{deconv3d_block.1} parent=11 // pred_region
        _
      $region20: #{deconv3d_block.1} parent=11 // pred_fallthru
        _
    $region12: #{deconv3d_block.1} parent=5 // pred_fallthru
      _
    %p124 = scmp.lt.s32.totalorder %s9, 2
    // Predicated region
    $region21: #{deconv3d_block.1} parent=5 // pred_check
      %p125 = pneg %p124
    $region22: #{deconv3d_block.1} parent=5 // pred_check_branch
      %127 = sbr.rel (%p125) target = $region24
    $region23: #{deconv3d_block.1} parent=5 // pred_region
      // Predicated region
      $region25: #{deconv3d_block.1} parent=23 // pred_check
        %p128 = pneg %p29
      $region26: #{deconv3d_block.1} parent=23 // pred_check_branch
        %130 = sbr.rel (%p128) target = $region28
      $region27: #{deconv3d_block.1} parent=23 // pred_region
        %p131 = scmp.lt.s32.totalorder %s9, 1
        %s132 = scalar_select %p131, %s9, 1
        %s133 = smul.addr %s132, 9
        %s134 = smul.addr %s133, 4
        %s135 = scalar_lea.vmem %s0, %s134
      $region28: #{deconv3d_block.1} parent=23 // pred_fallthru
        _
    $region24: #{deconv3d_block.1} parent=5 // pred_fallthru
      _
    %p136 = scmp.le.s32.totalorder 1, %s9
    %p137 = scmp.lt.s32.totalorder %s9, 3
    %p138 = pnand %p136, %p137
    %p139 = pneg %p138
    // Predicated region
    $region29: #{deconv3d_block.1} parent=5 // pred_check
      _
    $region30: #{deconv3d_block.1} parent=5 // pred_check_branch
      %141 = sbr.rel (%p138) target = $region32
    $region31: #{deconv3d_block.1} parent=5 // pred_region
      %s142 = ssub.s32 %s9, 1
      %p143 = scmp.lt.s32.totalorder %s14, 1
      %s144 = scalar_select %p143, %s14, 1
      %s145 = smul.addr %s144, 9
      %s146 = smul.addr %s145, 4
      %s147 = scalar_lea.vmem %s0, %s146
      %p148 = pneg %p35
      %p149 = pneg %p32
      %p150 = pneg %p56
      %p151 = pneg %p53
      %p152 = pneg %p77
      %p153 = pneg %p74
      %p154 = pneg %p103
      %p155 = pneg %p100
      %p156 = scmp.lt.s32.totalorder %s14, 1
      %s157 = scalar_select %p156, %s14, 1
      %s158 = smul.addr %s157, 56
      %s159 = smul.addr %s158, 8
      %s160 = scalar_lea.vmem %s3, %s159
      %p161 = scmp.lt.s32.totalorder %s14, 1
      %s162 = scalar_select %p161, %s14, 1
      %s163 = smul.addr %s162, 9
      %s164 = smul.addr %s163, 4
      %s165 = scalar_lea.vmem %s0, %s164
      %p166 = scmp.lt.s32.totalorder %s14, 1
      %s167 = scalar_select %p166, %s14, 1
      %s168 = smul.addr %s167, 56
      %s169 = smul.addr %s168, 8
      %s170 = scalar_lea.vmem %s3, %s169
      %v172 = vld [vmem:[%s165] sm:$0xff]
      %v173 = vld [vmem:[%s165 + $0x8] sm:$0xff]
      %v174 = vld [vmem:[%s165 + $0x10] sm:$0xff]
      %v175 = vld [vmem:[%s165 + $0x18] sm:$0xf]
      %v179 = vcombine.high %v172, %v172
      %v180 = vcombine.high %v173, %v173
      %v181 = vcombine.high %v174, %v174
      %v185 = vpack.c.bf16 %v172, %v172
      %v186 = vpack.c.bf16 %v179, %v179
      %v187 = vpack.c.bf16 %v173, %v173
      %v188 = vpack.c.bf16 %v180, %v180
      %v189 = vpack.c.bf16 %v174, %v174
      %v190 = vpack.c.bf16 %v181, %v181
      %v191 = vpack.c.bf16 %v175, %v175
      %v199 = vunpack.c.l.b16 %v185
      %v200 = vunpack.c.l.b16 %v186
      %v201 = vunpack.c.l.b16 %v187
      %v202 = vunpack.c.l.b16 %v188
      %v203 = vunpack.c.l.b16 %v189
      %v204 = vunpack.c.l.b16 %v190
      %v205 = vunpack.c.l.b16 %v191
      %v206 = vpack.c.b16 %v200, %v199
      %v207 = vpack.c.b16 %v202, %v201
      %v208 = vpack.c.b16 %v204, %v203
      %v209 = vpack.c.b16 %v205, %v205
      %214 = vst [vmem:[#allocation2] sm:$0x33] %v206
      %215 = vst [vmem:[#allocation2 + $0x8] sm:$0x33] %v207
      %216 = vst [vmem:[#allocation2 + $0x10] sm:$0x33] %v208
      %217 = vst [vmem:[#allocation2 + $0x18] sm:$0x3] %v209
      %v218 = vld [vmem:[%s165] sm:$0xff]
      %v219 = vld [vmem:[%s165 + $0x8] sm:$0xff]
      %v220 = vld [vmem:[%s165 + $0x10] sm:$0xff]
      %v221 = vld [vmem:[%s165 + $0x18] sm:$0xff]
      %v226 = vcombine.high %v218, %v218
      %v227 = vcombine.high %v219, %v219
      %v228 = vcombine.high %v220, %v220
      %v229 = vcombine.high %v221, %v221
      %v234 = vpack.c.bf16 %v218, %v218
      %v235 = vpack.c.bf16 %v226, %v226
      %v236 = vpack.c.bf16 %v219, %v219
      %v237 = vpack.c.bf16 %v227, %v227
      %v238 = vpack.c.bf16 %v220, %v220
      %v239 = vpack.c.bf16 %v228, %v228
      %v240 = vpack.c.bf16 %v221, %v221
      %v241 = vpack.c.bf16 %v229, %v229
      %v250 = vunpack.c.l.b16 %v234
      %v251 = vunpack.c.l.b16 %v235
      %v252 = vunpack.c.l.b16 %v236
      %v253 = vunpack.c.l.b16 %v237
      %v254 = vunpack.c.l.b16 %v238
      %v255 = vunpack.c.l.b16 %v239
      %v256 = vunpack.c.l.b16 %v240
      %v257 = vunpack.c.l.b16 %v241
      %v258 = vpack.c.b16 %v251, %v250
      %v259 = vpack.c.b16 %v253, %v252
      %v260 = vpack.c.b16 %v255, %v254
      %v261 = vpack.c.b16 %v257, %v256
      %v262 = vrot.slane %v258, 6
      %v263 = vrot.slane %v259, 6
      %v264 = vrot.slane %v260, 6
      %v265 = vrot.slane %v261, 6
      %266 = vrot.lane.b32.xlu0 %v262, 127
      %v267 = vpop.permute.xlu0 %266
      %268 = vrot.lane.b32.xlu0 %v263, 127
      %v269 = vpop.permute.xlu0 %268
      %270 = vrot.lane.b32.xlu0 %v264, 127
      %v271 = vpop.permute.xlu0 %270
      %272 = vrot.lane.b32.xlu0 %v265, 127
      %v273 = vpop.permute.xlu0 %272
      %v274 = vrot.slane %v267, 4
      %v275 = vrot.slane %v269, 4
      %v276 = vrot.slane %v271, 4
      %v277 = vrot.slane %v273, 4
      %vm278 = vcmask 1043456
      %v279 = vsel %vm278, %v274, %v275
      %vm280 = vcmask 1039360
      %v281 = vsel %vm280, %v267, %v279
      %v282 = vsel %vm278, %v275, %v276
      %v283 = vsel %vm280, %v269, %v282
      %v284 = vsel %vm278, %v276, %v277
      %v285 = vsel %vm280, %v271, %v284
      %v286 = vsel %vm280, %v273, %v277
      %291 = vst [vmem:[#allocation2] sm:$0xcc] %v281
      %292 = vst [vmem:[#allocation2 + $0x8] sm:$0xcc] %v283
      %293 = vst [vmem:[#allocation2 + $0x10] sm:$0xcc] %v285
      %294 = vst [vmem:[#allocation2 + $0x18] sm:$0xc] %v286
      %v295 = vld [vmem:[%s165] sm:$0xff]
      %v296 = vld [vmem:[%s165 + $0x8] sm:$0xff]
      %v297 = vld [vmem:[%s165 + $0x10] sm:$0xff]
      %v298 = vld [vmem:[%s165 + $0x18] sm:$0xff]
      %v303 = vcombine.high %v295, %v295
      %v304 = vcombine.high %v296, %v296
      %v305 = vcombine.high %v297, %v297
      %v306 = vcombine.high %v298, %v298
      %v311 = vpack.c.bf16 %v295, %v295
      %v312 = vpack.c.bf16 %v303, %v303
      %v313 = vpack.c.bf16 %v296, %v296
      %v314 = vpack.c.bf16 %v304, %v304
      %v315 = vpack.c.bf16 %v297, %v297
      %v316 = vpack.c.bf16 %v305, %v305
      %v317 = vpack.c.bf16 %v298, %v298
      %v318 = vpack.c.bf16 %v306, %v306
      %v327 = vunpack.c.l.b16 %v311
      %v328 = vunpack.c.l.b16 %v312
      %v329 = vunpack.c.l.b16 %v313
      %v330 = vunpack.c.l.b16 %v314
      %v331 = vunpack.c.l.b16 %v315
      %v332 = vunpack.c.l.b16 %v316
      %v333 = vunpack.c.l.b16 %v317
      %v334 = vunpack.c.l.b16 %v318
      %v335 = vpack.c.b16 %v328, %v327
      %v336 = vpack.c.b16 %v330, %v329
      %v337 = vpack.c.b16 %v332, %v331
      %v338 = vpack.c.b16 %v334, %v333
      %339 = vrot.lane.b32.xlu0 %v335, 126
      %v340 = vpop.permute.xlu0 %339
      %341 = vrot.lane.b32.xlu0 %v336, 126
      %v342 = vpop.permute.xlu0 %341
      %343 = vrot.lane.b32.xlu0 %v337, 126
      %v344 = vpop.permute.xlu0 %343
      %345 = vrot.lane.b32.xlu0 %v338, 126
      %v346 = vpop.permute.xlu0 %345
      %v347 = vrot.slane %v340, 4
      %v348 = vrot.slane %v342, 4
      %v349 = vrot.slane %v344, 4
      %v350 = vrot.slane %v346, 4
      %v351 = vsel %vm278, %v347, %v348
      %vm352 = vcmask 1031168
      %v353 = vsel %vm352, %v340, %v351
      %v354 = vsel %vm278, %v348, %v349
      %v355 = vsel %vm352, %v342, %v354
      %v356 = vsel %vm278, %v349, %v350
      %v357 = vsel %vm352, %v344, %v356
      %v358 = vsel %vm352, %v346, %v350
      %363 = vst [vmem:[#allocation2 + $0x1c] sm:$0x33] %v353
      %364 = vst [vmem:[#allocation2 + $0x24] sm:$0x33] %v355
      %365 = vst [vmem:[#allocation2 + $0x2c] sm:$0x33] %v357
      %366 = vst [vmem:[#allocation2 + $0x34] sm:$0x3] %v358
      %v367 = vld [vmem:[%s165] sm:$0xff]
      %v368 = vld [vmem:[%s165 + $0x8] sm:$0xff]
      %v369 = vld [vmem:[%s165 + $0x10] sm:$0xff]
      %v370 = vld [vmem:[%s165 + $0x18] sm:$0xff]
      %v375 = vcombine.high %v367, %v367
      %v376 = vcombine.high %v368, %v368
      %v377 = vcombine.high %v369, %v369
      %v378 = vcombine.high %v370, %v370
      %v383 = vpack.c.bf16 %v367, %v367
      %v384 = vpack.c.bf16 %v375, %v375
      %v385 = vpack.c.bf16 %v368, %v368
      %v386 = vpack.c.bf16 %v376, %v376
      %v387 = vpack.c.bf16 %v369, %v369
      %v388 = vpack.c.bf16 %v377, %v377
      %v389 = vpack.c.bf16 %v370, %v370
      %v390 = vpack.c.bf16 %v378, %v378
      %v399 = vunpack.c.l.b16 %v383
      %v400 = vunpack.c.l.b16 %v384
      %v401 = vunpack.c.l.b16 %v385
      %v402 = vunpack.c.l.b16 %v386
      %v403 = vunpack.c.l.b16 %v387
      %v404 = vunpack.c.l.b16 %v388
      %v405 = vunpack.c.l.b16 %v389
      %v406 = vunpack.c.l.b16 %v390
      %v407 = vpack.c.b16 %v400, %v399
      %v408 = vpack.c.b16 %v402, %v401
      %v409 = vpack.c.b16 %v404, %v403
      %v410 = vpack.c.b16 %v406, %v405
      %v411 = vrot.slane %v407, 6
      %v412 = vrot.slane %v408, 6
      %v413 = vrot.slane %v409, 6
      %v414 = vrot.slane %v410, 6
      %415 = vrot.lane.b32.xlu0 %v411, 118
      %v416 = vpop.permute.xlu0 %415
      %417 = vrot.lane.b32.xlu0 %v412, 118
      %v418 = vpop.permute.xlu0 %417
      %419 = vrot.lane.b32.xlu0 %v413, 118
      %v420 = vpop.permute.xlu0 %419
      %421 = vrot.lane.b32.xlu0 %v414, 118
      %v422 = vpop.permute.xlu0 %421
      %v423 = vrot.slane %v416, 4
      %v424 = vrot.slane %v418, 4
      %v425 = vrot.slane %v420, 4
      %v426 = vrot.slane %v422, 4
      %v427 = vsel %vm278, %v423, %v424
      %vm428 = vcmask 965632
      %v429 = vsel %vm428, %v416, %v427
      %v430 = vsel %vm278, %v424, %v425
      %v431 = vsel %vm428, %v418, %v430
      %v432 = vsel %vm278, %v425, %v426
      %v433 = vsel %vm428, %v420, %v432
      %v434 = vsel %vm428, %v422, %v426
      %439 = vst [vmem:[#allocation2 + $0x1c] sm:$0xcc] %v429
      %440 = vst [vmem:[#allocation2 + $0x24] sm:$0xcc] %v431
      %441 = vst [vmem:[#allocation2 + $0x2c] sm:$0xcc] %v433
      %442 = vst [vmem:[#allocation2 + $0x34] sm:$0xc] %v434
      %v443 = vld [vmem:[%s165] sm:$0xff]
      %v444 = vld [vmem:[%s165 + $0x8] sm:$0xff]
      %v445 = vld [vmem:[%s165 + $0x10] sm:$0xff]
      %v446 = vld [vmem:[%s165 + $0x18] sm:$0xff]
      %v451 = vcombine.high %v443, %v443
      %v452 = vcombine.high %v444, %v444
      %v453 = vcombine.high %v445, %v445
      %v454 = vcombine.high %v446, %v446
      %v459 = vpack.c.bf16 %v443, %v443
      %v460 = vpack.c.bf16 %v451, %v451
      %v461 = vpack.c.bf16 %v444, %v444
      %v462 = vpack.c.bf16 %v452, %v452
      %v463 = vpack.c.bf16 %v445, %v445
      %v464 = vpack.c.bf16 %v453, %v453
      %v465 = vpack.c.bf16 %v446, %v446
      %v466 = vpack.c.bf16 %v454, %v454
      %v475 = vunpack.c.l.b16 %v459
      %v476 = vunpack.c.l.b16 %v460
      %v477 = vunpack.c.l.b16 %v461
      %v478 = vunpack.c.l.b16 %v462
      %v479 = vunpack.c.l.b16 %v463
      %v480 = vunpack.c.l.b16 %v464
      %v481 = vunpack.c.l.b16 %v465
      %v482 = vunpack.c.l.b16 %v466
      %v483 = vpack.c.b16 %v476, %v475
      %v484 = vpack.c.b16 %v478, %v477
      %v485 = vpack.c.b16 %v480, %v479
      %v486 = vpack.c.b16 %v482, %v481
      %487 = vrot.lane.b32.xlu0 %v483, 117
      %v488 = vpop.permute.xlu0 %487
      %489 = vrot.lane.b32.xlu0 %v484, 117
      %v490 = vpop.permute.xlu0 %489
      %491 = vrot.lane.b32.xlu0 %v485, 117
      %v492 = vpop.permute.xlu0 %491
      %493 = vrot.lane.b32.xlu0 %v486, 117
      %v494 = vpop.permute.xlu0 %493
      %v495 = vrot.slane %v488, 4
      %v496 = vrot.slane %v490, 4
      %v497 = vrot.slane %v492, 4
      %v498 = vrot.slane %v494, 4
      %v499 = vsel %vm278, %v495, %v496
      %vm500 = vcmask 957440
      %v501 = vsel %vm500, %v488, %v499
      %v502 = vsel %vm278, %v496, %v497
      %v503 = vsel %vm500, %v490, %v502
      %v504 = vsel %vm278, %v497, %v498
      %v505 = vsel %vm500, %v492, %v504
      %v506 = vsel %vm500, %v494, %v498
      %511 = vst [vmem:[#allocation2 + $0x38] sm:$0x33] %v501
      %512 = vst [vmem:[#allocation2 + $0x40] sm:$0x33] %v503
      %513 = vst [vmem:[#allocation2 + $0x48] sm:$0x33] %v505
      %514 = vst [vmem:[#allocation2 + $0x50] sm:$0x3] %v506
      %v515 = vld [vmem:[%s165] sm:$0xff]
      %v516 = vld [vmem:[%s165 + $0x8] sm:$0xff]
      %v517 = vld [vmem:[%s165 + $0x10] sm:$0xff]
      %v518 = vld [vmem:[%s165 + $0x18] sm:$0xff]
      %v523 = vcombine.high %v515, %v515
      %v524 = vcombine.high %v516, %v516
      %v525 = vcombine.high %v517, %v517
      %v526 = vcombine.high %v518, %v518
      %v531 = vpack.c.bf16 %v515, %v515
      %v532 = vpack.c.bf16 %v523, %v523
      %v533 = vpack.c.bf16 %v516, %v516
      %v534 = vpack.c.bf16 %v524, %v524
      %v535 = vpack.c.bf16 %v517, %v517
      %v536 = vpack.c.bf16 %v525, %v525
      %v537 = vpack.c.bf16 %v518, %v518
      %v538 = vpack.c.bf16 %v526, %v526
      %v547 = vunpack.c.l.b16 %v531
      %v548 = vunpack.c.l.b16 %v532
      %v549 = vunpack.c.l.b16 %v533
      %v550 = vunpack.c.l.b16 %v534
      %v551 = vunpack.c.l.b16 %v535
      %v552 = vunpack.c.l.b16 %v536
      %v553 = vunpack.c.l.b16 %v537
      %v554 = vunpack.c.l.b16 %v538
      %v555 = vpack.c.b16 %v548, %v547
      %v556 = vpack.c.b16 %v550, %v549
      %v557 = vpack.c.b16 %v552, %v551
      %v558 = vpack.c.b16 %v554, %v553
      %v559 = vrot.slane %v555, 6
      %v560 = vrot.slane %v556, 6
      %v561 = vrot.slane %v557, 6
      %v562 = vrot.slane %v558, 6
      %563 = vrot.lane.b32.xlu0 %v559, 116
      %v564 = vpop.permute.xlu0 %563
      %565 = vrot.lane.b32.xlu0 %v560, 116
      %v566 = vpop.permute.xlu0 %565
      %567 = vrot.lane.b32.xlu0 %v561, 116
      %v568 = vpop.permute.xlu0 %567
      %569 = vrot.lane.b32.xlu0 %v562, 116
      %v570 = vpop.permute.xlu0 %569
      %v571 = vrot.slane %v564, 4
      %v572 = vrot.slane %v566, 4
      %v573 = vrot.slane %v568, 4
      %v574 = vrot.slane %v570, 4
      %v575 = vsel %vm278, %v571, %v572
      %vm576 = vcmask 949248
      %v577 = vsel %vm576, %v564, %v575
      %v578 = vsel %vm278, %v572, %v573
      %v579 = vsel %vm576, %v566, %v578
      %v580 = vsel %vm278, %v573, %v574
      %v581 = vsel %vm576, %v568, %v580
      %v582 = vsel %vm576, %v570, %v574
      %587 = vst [vmem:[#allocation2 + $0x38] sm:$0xcc] %v577
      %588 = vst [vmem:[#allocation2 + $0x40] sm:$0xcc] %v579
      %589 = vst [vmem:[#allocation2 + $0x48] sm:$0xcc] %v581
      %590 = vst [vmem:[#allocation2 + $0x50] sm:$0xc] %v582
      %v591 = vld [vmem:[%s165] sm:$0xff]
      %v592 = vld [vmem:[%s165 + $0x8] sm:$0xff]
      %v593 = vld [vmem:[%s165 + $0x10] sm:$0xff]
      %v594 = vld [vmem:[%s165 + $0x18] sm:$0xff]
      %v599 = vcombine.high %v591, %v591
      %v600 = vcombine.high %v592, %v592
      %v601 = vcombine.high %v593, %v593
      %v602 = vcombine.high %v594, %v594
      %v607 = vpack.c.bf16 %v591, %v591
      %v608 = vpack.c.bf16 %v599, %v599
      %v609 = vpack.c.bf16 %v592, %v592
      %v610 = vpack.c.bf16 %v600, %v600
      %v611 = vpack.c.bf16 %v593, %v593
      %v612 = vpack.c.bf16 %v601, %v601
      %v613 = vpack.c.bf16 %v594, %v594
      %v614 = vpack.c.bf16 %v602, %v602
      %v623 = vunpack.c.l.b16 %v607
      %v624 = vunpack.c.l.b16 %v608
      %v625 = vunpack.c.l.b16 %v609
      %v626 = vunpack.c.l.b16 %v610
      %v627 = vunpack.c.l.b16 %v611
      %v628 = vunpack.c.l.b16 %v612
      %v629 = vunpack.c.l.b16 %v613
      %v630 = vunpack.c.l.b16 %v614
      %v631 = vpack.c.b16 %v624, %v623
      %v632 = vpack.c.b16 %v626, %v625
      %v633 = vpack.c.b16 %v628, %v627
      %v634 = vpack.c.b16 %v630, %v629
      %635 = vrot.lane.b32.xlu0 %v631, 108
      %v636 = vpop.permute.xlu0 %635
      %637 = vrot.lane.b32.xlu0 %v632, 108
      %v638 = vpop.permute.xlu0 %637
      %639 = vrot.lane.b32.xlu0 %v633, 108
      %v640 = vpop.permute.xlu0 %639
      %641 = vrot.lane.b32.xlu0 %v634, 108
      %v642 = vpop.permute.xlu0 %641
      %v643 = vrot.slane %v636, 4
      %v644 = vrot.slane %v638, 4
      %v645 = vrot.slane %v640, 4
      %v646 = vrot.slane %v642, 4
      %v647 = vsel %vm278, %v643, %v644
      %vm648 = vcmask 883712
      %v649 = vsel %vm648, %v636, %v647
      %v650 = vsel %vm278, %v644, %v645
      %v651 = vsel %vm648, %v638, %v650
      %v652 = vsel %vm278, %v645, %v646
      %v653 = vsel %vm648, %v640, %v652
      %v654 = vsel %vm648, %v642, %v646
      %659 = vst [vmem:[#allocation2 + $0x54] sm:$0x33] %v649
      %660 = vst [vmem:[#allocation2 + $0x5c] sm:$0x33] %v651
      %661 = vst [vmem:[#allocation2 + $0x64] sm:$0x33] %v653
      %662 = vst [vmem:[#allocation2 + $0x6c] sm:$0x3] %v654
      %v663 = vld [vmem:[%s165] sm:$0xff]
      %v664 = vld [vmem:[%s165 + $0x8] sm:$0xff]
      %v665 = vld [vmem:[%s165 + $0x10] sm:$0xff]
      %v666 = vld [vmem:[%s165 + $0x18] sm:$0xff]
      %v671 = vcombine.high %v663, %v663
      %v672 = vcombine.high %v664, %v664
      %v673 = vcombine.high %v665, %v665
      %v674 = vcombine.high %v666, %v666
      %v679 = vpack.c.bf16 %v663, %v663
      %v680 = vpack.c.bf16 %v671, %v671
      %v681 = vpack.c.bf16 %v664, %v664
      %v682 = vpack.c.bf16 %v672, %v672
      %v683 = vpack.c.bf16 %v665, %v665
      %v684 = vpack.c.bf16 %v673, %v673
      %v685 = vpack.c.bf16 %v666, %v666
      %v686 = vpack.c.bf16 %v674, %v674
      %v695 = vunpack.c.l.b16 %v679
      %v696 = vunpack.c.l.b16 %v680
      %v697 = vunpack.c.l.b16 %v681
      %v698 = vunpack.c.l.b16 %v682
      %v699 = vunpack.c.l.b16 %v683
      %v700 = vunpack.c.l.b16 %v684
      %v701 = vunpack.c.l.b16 %v685
      %v702 = vunpack.c.l.b16 %v686
      %v703 = vpack.c.b16 %v696, %v695
      %v704 = vpack.c.b16 %v698, %v697
      %v705 = vpack.c.b16 %v700, %v699
      %v706 = vpack.c.b16 %v702, %v701
      %v707 = vrot.slane %v703, 6
      %v708 = vrot.slane %v704, 6
      %v709 = vrot.slane %v705, 6
      %v710 = vrot.slane %v706, 6
      %711 = vrot.lane.b32.xlu0 %v707, 107
      %v712 = vpop.permute.xlu0 %711
      %713 = vrot.lane.b32.xlu0 %v708, 107
      %v714 = vpop.permute.xlu0 %713
      %715 = vrot.lane.b32.xlu0 %v709, 107
      %v716 = vpop.permute.xlu0 %715
      %717 = vrot.lane.b32.xlu0 %v710, 107
      %v718 = vpop.permute.xlu0 %717
      %v719 = vrot.slane %v712, 4
      %v720 = vrot.slane %v714, 4
      %v721 = vrot.slane %v716, 4
      %v722 = vrot.slane %v718, 4
      %v723 = vsel %vm278, %v719, %v720
      %vm724 = vcmask 875520
      %v725 = vsel %vm724, %v712, %v723
      %v726 = vsel %vm278, %v720, %v721
      %v727 = vsel %vm724, %v714, %v726
      %v728 = vsel %vm278, %v721, %v722
      %v729 = vsel %vm724, %v716, %v728
      %v730 = vsel %vm724, %v718, %v722
      %735 = vst [vmem:[#allocation2 + $0x54] sm:$0xcc] %v725
      %736 = vst [vmem:[#allocation2 + $0x5c] sm:$0xcc] %v727
      %737 = vst [vmem:[#allocation2 + $0x64] sm:$0xcc] %v729
      %738 = vst [vmem:[#allocation2 + $0x6c] sm:$0xc] %v730
      %v739 = vld [vmem:[%s165] sm:$0xff]
      %v740 = vld [vmem:[%s165 + $0x8] sm:$0xff]
      %v741 = vld [vmem:[%s165 + $0x10] sm:$0xff]
      %v742 = vld [vmem:[%s165 + $0x18] sm:$0xff]
      %v747 = vcombine.high %v739, %v739
      %v748 = vcombine.high %v740, %v740
      %v749 = vcombine.high %v741, %v741
      %v750 = vcombine.high %v742, %v742
      %v755 = vpack.c.bf16 %v739, %v739
      %v756 = vpack.c.bf16 %v747, %v747
      %v757 = vpack.c.bf16 %v740, %v740
      %v758 = vpack.c.bf16 %v748, %v748
      %v759 = vpack.c.bf16 %v741, %v741
      %v760 = vpack.c.bf16 %v749, %v749
      %v761 = vpack.c.bf16 %v742, %v742
      %v762 = vpack.c.bf16 %v750, %v750
      %v771 = vunpack.c.l.b16 %v755
      %v772 = vunpack.c.l.b16 %v756
      %v773 = vunpack.c.l.b16 %v757
      %v774 = vunpack.c.l.b16 %v758
      %v775 = vunpack.c.l.b16 %v759
      %v776 = vunpack.c.l.b16 %v760
      %v777 = vunpack.c.l.b16 %v761
      %v778 = vunpack.c.l.b16 %v762
      %v779 = vpack.c.b16 %v772, %v771
      %v780 = vpack.c.b16 %v774, %v773
      %v781 = vpack.c.b16 %v776, %v775
      %v782 = vpack.c.b16 %v778, %v777
      %783 = vrot.lane.b32.xlu0 %v779, 106
      %v784 = vpop.permute.xlu0 %783
      %785 = vrot.lane.b32.xlu0 %v780, 106
      %v786 = vpop.permute.xlu0 %785
      %787 = vrot.lane.b32.xlu0 %v781, 106
      %v788 = vpop.permute.xlu0 %787
      %789 = vrot.lane.b32.xlu0 %v782, 106
      %v790 = vpop.permute.xlu0 %789
      %v791 = vrot.slane %v784, 4
      %v792 = vrot.slane %v786, 4
      %v793 = vrot.slane %v788, 4
      %v794 = vrot.slane %v790, 4
      %v795 = vsel %vm278, %v791, %v792
      %vm796 = vcmask 867328
      %v797 = vsel %vm796, %v784, %v795
      %v798 = vsel %vm278, %v792, %v793
      %v799 = vsel %vm796, %v786, %v798
      %v800 = vsel %vm278, %v793, %v794
      %v801 = vsel %vm796, %v788, %v800
      %v802 = vsel %vm796, %v790, %v794
      %807 = vst [vmem:[#allocation2 + $0x70] sm:$0x33] %v797
      %808 = vst [vmem:[#allocation2 + $0x78] sm:$0x33] %v799
      %809 = vst [vmem:[#allocation2 + $0x80] sm:$0x33] %v801
      %810 = vst [vmem:[#allocation2 + $0x88] sm:$0x3] %v802
      %v811 = vld [vmem:[%s165] sm:$0xff]
      %v812 = vld [vmem:[%s165 + $0x8] sm:$0xff]
      %v813 = vld [vmem:[%s165 + $0x10] sm:$0xff]
      %v814 = vld [vmem:[%s165 + $0x18] sm:$0xff]
      %v819 = vcombine.high %v811, %v811
      %v820 = vcombine.high %v812, %v812
      %v821 = vcombine.high %v813, %v813
      %v822 = vcombine.high %v814, %v814
      %v827 = vpack.c.bf16 %v811, %v811
      %v828 = vpack.c.bf16 %v819, %v819
      %v829 = vpack.c.bf16 %v812, %v812
      %v830 = vpack.c.bf16 %v820, %v820
      %v831 = vpack.c.bf16 %v813, %v813
      %v832 = vpack.c.bf16 %v821, %v821
      %v833 = vpack.c.bf16 %v814, %v814
      %v834 = vpack.c.bf16 %v822, %v822
      %v843 = vunpack.c.l.b16 %v827
      %v844 = vunpack.c.l.b16 %v828
      %v845 = vunpack.c.l.b16 %v829
      %v846 = vunpack.c.l.b16 %v830
      %v847 = vunpack.c.l.b16 %v831
      %v848 = vunpack.c.l.b16 %v832
      %v849 = vunpack.c.l.b16 %v833
      %v850 = vunpack.c.l.b16 %v834
      %v851 = vpack.c.b16 %v844, %v843
      %v852 = vpack.c.b16 %v846, %v845
      %v853 = vpack.c.b16 %v848, %v847
      %v854 = vpack.c.b16 %v850, %v849
      %v855 = vrot.slane %v851, 6
      %v856 = vrot.slane %v852, 6
      %v857 = vrot.slane %v853, 6
      %v858 = vrot.slane %v854, 6
      %859 = vrot.lane.b32.xlu0 %v855, 28
      %v860 = vpop.permute.xlu0 %859
      %861 = vrot.lane.b32.xlu0 %v856, 28
      %v862 = vpop.permute.xlu0 %861
      %863 = vrot.lane.b32.xlu0 %v857, 28
      %v864 = vpop.permute.xlu0 %863
      %865 = vrot.lane.b32.xlu0 %v858, 28
      %v866 = vpop.permute.xlu0 %865
      %v867 = vrot.slane %v860, 4
      %v868 = vrot.slane %v862, 4
      %v869 = vrot.slane %v864, 4
      %v870 = vrot.slane %v866, 4
      %v871 = vsel %vm278, %v867, %v868
      %vm872 = vcmask 228352
      %v873 = vsel %vm872, %v860, %v871
      %v874 = vsel %vm278, %v868, %v869
      %v875 = vsel %vm872, %v862, %v874
      %v876 = vsel %vm278, %v869, %v870
      %v877 = vsel %vm872, %v864, %v876
      %v878 = vsel %vm872, %v866, %v870
      %883 = vst [vmem:[#allocation2 + $0x70] sm:$0xcc] %v873
      %884 = vst [vmem:[#allocation2 + $0x78] sm:$0xcc] %v875
      %885 = vst [vmem:[#allocation2 + $0x80] sm:$0xcc] %v877
      %886 = vst [vmem:[#allocation2 + $0x88] sm:$0xc] %v878
      %v887 = vld [vmem:[%s165] sm:$0xff]
      %v888 = vld [vmem:[%s165 + $0x8] sm:$0xff]
      %v889 = vld [vmem:[%s165 + $0x10] sm:$0xff]
      %v890 = vld [vmem:[%s165 + $0x18] sm:$0xff]
      %v895 = vcombine.high %v887, %v887
      %v896 = vcombine.high %v888, %v888
      %v897 = vcombine.high %v889, %v889
      %v898 = vcombine.high %v890, %v890
      %v903 = vpack.c.bf16 %v887, %v887
      %v904 = vpack.c.bf16 %v895, %v895
      %v905 = vpack.c.bf16 %v888, %v888
      %v906 = vpack.c.bf16 %v896, %v896
      %v907 = vpack.c.bf16 %v889, %v889
      %v908 = vpack.c.bf16 %v897, %v897
      %v909 = vpack.c.bf16 %v890, %v890
      %v910 = vpack.c.bf16 %v898, %v898
      %v919 = vunpack.c.l.b16 %v903
      %v920 = vunpack.c.l.b16 %v904
      %v921 = vunpack.c.l.b16 %v905
      %v922 = vunpack.c.l.b16 %v906
      %v923 = vunpack.c.l.b16 %v907
      %v924 = vunpack.c.l.b16 %v908
      %v925 = vunpack.c.l.b16 %v909
      %v926 = vunpack.c.l.b16 %v910
      %v927 = vpack.c.b16 %v920, %v919
      %v928 = vpack.c.b16 %v922, %v921
      %v929 = vpack.c.b16 %v924, %v923
      %v930 = vpack.c.b16 %v926, %v925
      %931 = vrot.lane.b32.xlu0 %v927, 27
      %v932 = vpop.permute.xlu0 %931
      %933 = vrot.lane.b32.xlu0 %v928, 27
      %v934 = vpop.permute.xlu0 %933
      %935 = vrot.lane.b32.xlu0 %v929, 27
      %v936 = vpop.permute.xlu0 %935
      %937 = vrot.lane.b32.xlu0 %v930, 27
      %v938 = vpop.permute.xlu0 %937
      %v939 = vrot.slane %v932, 4
      %v940 = vrot.slane %v934, 4
      %v941 = vrot.slane %v936, 4
      %v942 = vrot.slane %v938, 4
      %v943 = vsel %vm278, %v939, %v940
      %vm944 = vcmask 220160
      %v945 = vsel %vm944, %v932, %v943
      %v946 = vsel %vm278, %v940, %v941
      %v947 = vsel %vm944, %v934, %v946
      %v948 = vsel %vm278, %v941, %v942
      %v949 = vsel %vm944, %v936, %v948
      %v950 = vsel %vm944, %v938, %v942
      %955 = vst [vmem:[#allocation2 + $0x8c] sm:$0x33] %v945
      %956 = vst [vmem:[#allocation2 + $0x94] sm:$0x33] %v947
      %957 = vst [vmem:[#allocation2 + $0x9c] sm:$0x33] %v949
      %958 = vst [vmem:[#allocation2 + $0xa4] sm:$0x3] %v950
      %v959 = vld [vmem:[%s165] sm:$0xff]
      %v960 = vld [vmem:[%s165 + $0x8] sm:$0xff]
      %v961 = vld [vmem:[%s165 + $0x10] sm:$0xff]
      %v962 = vld [vmem:[%s165 + $0x18] sm:$0xff]
      %v967 = vcombine.high %v959, %v959
      %v968 = vcombine.high %v960, %v960
      %v969 = vcombine.high %v961, %v961
      %v970 = vcombine.high %v962, %v962
      %v975 = vpack.c.bf16 %v959, %v959
      %v976 = vpack.c.bf16 %v967, %v967
      %v977 = vpack.c.bf16 %v960, %v960
      %v978 = vpack.c.bf16 %v968, %v968
      %v979 = vpack.c.bf16 %v961, %v961
      %v980 = vpack.c.bf16 %v969, %v969
      %v981 = vpack.c.bf16 %v962, %v962
      %v982 = vpack.c.bf16 %v970, %v970
      %v991 = vunpack.c.l.b16 %v975
      %v992 = vunpack.c.l.b16 %v976
      %v993 = vunpack.c.l.b16 %v977
      %v994 = vunpack.c.l.b16 %v978
      %v995 = vunpack.c.l.b16 %v979
      %v996 = vunpack.c.l.b16 %v980
      %v997 = vunpack.c.l.b16 %v981
      %v998 = vunpack.c.l.b16 %v982
      %v999 = vpack.c.b16 %v992, %v991
      %v1000 = vpack.c.b16 %v994, %v993
      %v1001 = vpack.c.b16 %v996, %v995
      %v1002 = vpack.c.b16 %v998, %v997
      %v1003 = vrot.slane %v999, 6
      %v1004 = vrot.slane %v1000, 6
      %v1005 = vrot.slane %v1001, 6
      %v1006 = vrot.slane %v1002, 6
      %1007 = vrot.lane.b32.xlu0 %v1003, 26
      %v1008 = vpop.permute.xlu0 %1007
      %1009 = vrot.lane.b32.xlu0 %v1004, 26
      %v1010 = vpop.permute.xlu0 %1009
      %1011 = vrot.lane.b32.xlu0 %v1005, 26
      %v1012 = vpop.permute.xlu0 %1011
      %1013 = vrot.lane.b32.xlu0 %v1006, 26
      %v1014 = vpop.permute.xlu0 %1013
      %v1015 = vrot.slane %v1008, 4
      %v1016 = vrot.slane %v1010, 4
      %v1017 = vrot.slane %v1012, 4
      %v1018 = vrot.slane %v1014, 4
      %v1019 = vsel %vm278, %v1015, %v1016
      %vm1020 = vcmask 211968
      %v1021 = vsel %vm1020, %v1008, %v1019
      %v1022 = vsel %vm278, %v1016, %v1017
      %v1023 = vsel %vm1020, %v1010, %v1022
      %v1024 = vsel %vm278, %v1017, %v1018
      %v1025 = vsel %vm1020, %v1012, %v1024
      %v1026 = vsel %vm1020, %v1014, %v1018
      %1031 = vst [vmem:[#allocation2 + $0x8c] sm:$0xcc] %v1021
      %1032 = vst [vmem:[#allocation2 + $0x94] sm:$0xcc] %v1023
      %1033 = vst [vmem:[#allocation2 + $0x9c] sm:$0xcc] %v1025
      %1034 = vst [vmem:[#allocation2 + $0xa4] sm:$0xc] %v1026
      %v1035 = vld [vmem:[%s165] sm:$0xff]
      %v1036 = vld [vmem:[%s165 + $0x8] sm:$0xff]
      %v1037 = vld [vmem:[%s165 + $0x10] sm:$0xff]
      %v1038 = vld [vmem:[%s165 + $0x18] sm:$0xff]
      %v1043 = vcombine.high %v1035, %v1035
      %v1044 = vcombine.high %v1036, %v1036
      %v1045 = vcombine.high %v1037, %v1037
      %v1046 = vcombine.high %v1038, %v1038
      %v1051 = vpack.c.bf16 %v1035, %v1035
      %v1052 = vpack.c.bf16 %v1043, %v1043
      %v1053 = vpack.c.bf16 %v1036, %v1036
      %v1054 = vpack.c.bf16 %v1044, %v1044
      %v1055 = vpack.c.bf16 %v1037, %v1037
      %v1056 = vpack.c.bf16 %v1045, %v1045
      %v1057 = vpack.c.bf16 %v1038, %v1038
      %v1058 = vpack.c.bf16 %v1046, %v1046
      %v1067 = vunpack.c.l.b16 %v1051
      %v1068 = vunpack.c.l.b16 %v1052
      %v1069 = vunpack.c.l.b16 %v1053
      %v1070 = vunpack.c.l.b16 %v1054
      %v1071 = vunpack.c.l.b16 %v1055
      %v1072 = vunpack.c.l.b16 %v1056
      %v1073 = vunpack.c.l.b16 %v1057
      %v1074 = vunpack.c.l.b16 %v1058
      %v1075 = vpack.c.b16 %v1068, %v1067
      %v1076 = vpack.c.b16 %v1070, %v1069
      %v1077 = vpack.c.b16 %v1072, %v1071
      %v1078 = vpack.c.b16 %v1074, %v1073
      %1079 = vrot.lane.b32.xlu0 %v1075, 18
      %v1080 = vpop.permute.xlu0 %1079
      %1081 = vrot.lane.b32.xlu0 %v1076, 18
      %v1082 = vpop.permute.xlu0 %1081
      %1083 = vrot.lane.b32.xlu0 %v1077, 18
      %v1084 = vpop.permute.xlu0 %1083
      %1085 = vrot.lane.b32.xlu0 %v1078, 18
      %v1086 = vpop.permute.xlu0 %1085
      %v1087 = vrot.slane %v1080, 4
      %v1088 = vrot.slane %v1082, 4
      %v1089 = vrot.slane %v1084, 4
      %v1090 = vrot.slane %v1086, 4
      %v1091 = vsel %vm278, %v1087, %v1088
      %vm1092 = vcmask 146432
      %v1093 = vsel %vm1092, %v1080, %v1091
      %v1094 = vsel %vm278, %v1088, %v1089
      %v1095 = vsel %vm1092, %v1082, %v1094
      %v1096 = vsel %vm278, %v1089, %v1090
      %v1097 = vsel %vm1092, %v1084, %v1096
      %v1098 = vsel %vm1092, %v1086, %v1090
      %1103 = vst [vmem:[#allocation2 + $0xa8] sm:$0x33] %v1093
      %1104 = vst [vmem:[#allocation2 + $0xb0] sm:$0x33] %v1095
      %1105 = vst [vmem:[#allocation2 + $0xb8] sm:$0x33] %v1097
      %1106 = vst [vmem:[#allocation2 + $0xc0] sm:$0x3] %v1098
      %v1107 = vld [vmem:[%s165] sm:$0xff]
      %v1108 = vld [vmem:[%s165 + $0x8] sm:$0xff]
      %v1109 = vld [vmem:[%s165 + $0x10] sm:$0xff]
      %v1110 = vld [vmem:[%s165 + $0x18] sm:$0xff]
      %v1115 = vcombine.high %v1107, %v1107
      %v1116 = vcombine.high %v1108, %v1108
      %v1117 = vcombine.high %v1109, %v1109
      %v1118 = vcombine.high %v1110, %v1110
      %v1123 = vpack.c.bf16 %v1107, %v1107
      %v1124 = vpack.c.bf16 %v1115, %v1115
      %v1125 = vpack.c.bf16 %v1108, %v1108
      %v1126 = vpack.c.bf16 %v1116, %v1116
      %v1127 = vpack.c.bf16 %v1109, %v1109
      %v1128 = vpack.c.bf16 %v1117, %v1117
      %v1129 = vpack.c.bf16 %v1110, %v1110
      %v1130 = vpack.c.bf16 %v1118, %v1118
      %v1139 = vunpack.c.l.b16 %v1123
      %v1140 = vunpack.c.l.b16 %v1124
      %v1141 = vunpack.c.l.b16 %v1125
      %v1142 = vunpack.c.l.b16 %v1126
      %v1143 = vunpack.c.l.b16 %v1127
      %v1144 = vunpack.c.l.b16 %v1128
      %v1145 = vunpack.c.l.b16 %v1129
      %v1146 = vunpack.c.l.b16 %v1130
      %v1147 = vpack.c.b16 %v1140, %v1139
      %v1148 = vpack.c.b16 %v1142, %v1141
      %v1149 = vpack.c.b16 %v1144, %v1143
      %v1150 = vpack.c.b16 %v1146, %v1145
      %v1151 = vrot.slane %v1147, 6
      %v1152 = vrot.slane %v1148, 6
      %v1153 = vrot.slane %v1149, 6
      %v1154 = vrot.slane %v1150, 6
      %1155 = vrot.lane.b32.xlu0 %v1151, 17
      %v1156 = vpop.permute.xlu0 %1155
      %1157 = vrot.lane.b32.xlu0 %v1152, 17
      %v1158 = vpop.permute.xlu0 %1157
      %1159 = vrot.lane.b32.xlu0 %v1153, 17
      %v1160 = vpop.permute.xlu0 %1159
      %1161 = vrot.lane.b32.xlu0 %v1154, 17
      %v1162 = vpop.permute.xlu0 %1161
      %v1163 = vrot.slane %v1156, 4
      %v1164 = vrot.slane %v1158, 4
      %v1165 = vrot.slane %v1160, 4
      %v1166 = vrot.slane %v1162, 4
      %v1167 = vsel %vm278, %v1163, %v1164
      %vm1168 = vcmask 138240
      %v1169 = vsel %vm1168, %v1156, %v1167
      %v1170 = vsel %vm278, %v1164, %v1165
      %v1171 = vsel %vm1168, %v1158, %v1170
      %v1172 = vsel %vm278, %v1165, %v1166
      %v1173 = vsel %vm1168, %v1160, %v1172
      %v1174 = vsel %vm1168, %v1162, %v1166
      %1179 = vst [vmem:[#allocation2 + $0xa8] sm:$0xcc] %v1169
      %1180 = vst [vmem:[#allocation2 + $0xb0] sm:$0xcc] %v1171
      %1181 = vst [vmem:[#allocation2 + $0xb8] sm:$0xcc] %v1173
      %1182 = vst [vmem:[#allocation2 + $0xc0] sm:$0xc] %v1174
      %v1183 = vld [vmem:[%s165] sm:$0xff]
      %v1184 = vld [vmem:[%s165 + $0x8] sm:$0xff]
      %v1185 = vld [vmem:[%s165 + $0x10] sm:$0xff]
      %v1186 = vld [vmem:[%s165 + $0x18] sm:$0xff]
      %v1191 = vcombine.high %v1183, %v1183
      %v1192 = vcombine.high %v1184, %v1184
      %v1193 = vcombine.high %v1185, %v1185
      %v1194 = vcombine.high %v1186, %v1186
      %v1199 = vpack.c.bf16 %v1183, %v1183
      %v1200 = vpack.c.bf16 %v1191, %v1191
      %v1201 = vpack.c.bf16 %v1184, %v1184
      %v1202 = vpack.c.bf16 %v1192, %v1192
      %v1203 = vpack.c.bf16 %v1185, %v1185
      %v1204 = vpack.c.bf16 %v1193, %v1193
      %v1205 = vpack.c.bf16 %v1186, %v1186
      %v1206 = vpack.c.bf16 %v1194, %v1194
      %v1215 = vunpack.c.l.b16 %v1199
      %v1216 = vunpack.c.l.b16 %v1200
      %v1217 = vunpack.c.l.b16 %v1201
      %v1218 = vunpack.c.l.b16 %v1202
      %v1219 = vunpack.c.l.b16 %v1203
      %v1220 = vunpack.c.l.b16 %v1204
      %v1221 = vunpack.c.l.b16 %v1205
      %v1222 = vunpack.c.l.b16 %v1206
      %v1223 = vpack.c.b16 %v1216, %v1215
      %v1224 = vpack.c.b16 %v1218, %v1217
      %v1225 = vpack.c.b16 %v1220, %v1219
      %v1226 = vpack.c.b16 %v1222, %v1221
      %1227 = vrot.lane.b32.xlu0 %v1223, 16
      %v1228 = vpop.permute.xlu0 %1227
      %1229 = vrot.lane.b32.xlu0 %v1224, 16
      %v1230 = vpop.permute.xlu0 %1229
      %1231 = vrot.lane.b32.xlu0 %v1225, 16
      %v1232 = vpop.permute.xlu0 %1231
      %1233 = vrot.lane.b32.xlu0 %v1226, 16
      %v1234 = vpop.permute.xlu0 %1233
      %v1235 = vrot.slane %v1228, 4
      %v1236 = vrot.slane %v1230, 4
      %v1237 = vrot.slane %v1232, 4
      %v1238 = vrot.slane %v1234, 4
      %v1239 = vsel %vm278, %v1235, %v1236
      %vm1240 = vcmask 130048
      %v1241 = vsel %vm1240, %v1228, %v1239
      %v1242 = vsel %vm278, %v1236, %v1237
      %v1243 = vsel %vm1240, %v1230, %v1242
      %v1244 = vsel %vm278, %v1237, %v1238
      %v1245 = vsel %vm1240, %v1232, %v1244
      %v1246 = vsel %vm1240, %v1234, %v1238
      %1251 = vst [vmem:[#allocation2 + $0xc4] sm:$0x33] %v1241
      %1252 = vst [vmem:[#allocation2 + $0xcc] sm:$0x33] %v1243
      %1253 = vst [vmem:[#allocation2 + $0xd4] sm:$0x33] %v1245
      %1254 = vst [vmem:[#allocation2 + $0xdc] sm:$0x3] %v1246
      %v1255 = vld [vmem:[%s165] sm:$0xff]
      %v1256 = vld [vmem:[%s165 + $0x8] sm:$0xff]
      %v1257 = vld [vmem:[%s165 + $0x10] sm:$0xff]
      %v1258 = vld [vmem:[%s165 + $0x18] sm:$0xff]
      %v1263 = vcombine.high %v1255, %v1255
      %v1264 = vcombine.high %v1256, %v1256
      %v1265 = vcombine.high %v1257, %v1257
      %v1266 = vcombine.high %v1258, %v1258
      %v1271 = vpack.c.bf16 %v1255, %v1255
      %v1272 = vpack.c.bf16 %v1263, %v1263
      %v1273 = vpack.c.bf16 %v1256, %v1256
      %v1274 = vpack.c.bf16 %v1264, %v1264
      %v1275 = vpack.c.bf16 %v1257, %v1257
      %v1276 = vpack.c.bf16 %v1265, %v1265
      %v1277 = vpack.c.bf16 %v1258, %v1258
      %v1278 = vpack.c.bf16 %v1266, %v1266
      %v1287 = vunpack.c.l.b16 %v1271
      %v1288 = vunpack.c.l.b16 %v1272
      %v1289 = vunpack.c.l.b16 %v1273
      %v1290 = vunpack.c.l.b16 %v1274
      %v1291 = vunpack.c.l.b16 %v1275
      %v1292 = vunpack.c.l.b16 %v1276
      %v1293 = vunpack.c.l.b16 %v1277
      %v1294 = vunpack.c.l.b16 %v1278
      %v1295 = vpack.c.b16 %v1288, %v1287
      %v1296 = vpack.c.b16 %v1290, %v1289
      %v1297 = vpack.c.b16 %v1292, %v1291
      %v1298 = vpack.c.b16 %v1294, %v1293
      %v1299 = vrot.slane %v1295, 6
      %v1300 = vrot.slane %v1296, 6
      %v1301 = vrot.slane %v1297, 6
      %v1302 = vrot.slane %v1298, 6
      %1303 = vrot.lane.b32.xlu0 %v1299, 8
      %v1304 = vpop.permute.xlu0 %1303
      %1305 = vrot.lane.b32.xlu0 %v1300, 8
      %v1306 = vpop.permute.xlu0 %1305
      %1307 = vrot.lane.b32.xlu0 %v1301, 8
      %v1308 = vpop.permute.xlu0 %1307
      %1309 = vrot.lane.b32.xlu0 %v1302, 8
      %v1310 = vpop.permute.xlu0 %1309
      %v1311 = vrot.slane %v1304, 4
      %v1312 = vrot.slane %v1306, 4
      %v1313 = vrot.slane %v1308, 4
      %v1314 = vrot.slane %v1310, 4
      %v1315 = vsel %vm278, %v1311, %v1312
      %vm1316 = vcmask 64512
      %v1317 = vsel %vm1316, %v1304, %v1315
      %v1318 = vsel %vm278, %v1312, %v1313
      %v1319 = vsel %vm1316, %v1306, %v1318
      %v1320 = vsel %vm278, %v1313, %v1314
      %v1321 = vsel %vm1316, %v1308, %v1320
      %v1322 = vsel %vm1316, %v1310, %v1314
      %1327 = vst [vmem:[#allocation2 + $0xc4] sm:$0xcc] %v1317
      %1328 = vst [vmem:[#allocation2 + $0xcc] sm:$0xcc] %v1319
      %1329 = vst [vmem:[#allocation2 + $0xd4] sm:$0xcc] %v1321
      %1330 = vst [vmem:[#allocation2 + $0xdc] sm:$0xc] %v1322
      %v1331 = vld [vmem:[%s165] sm:$0xff]
      %v1332 = vld [vmem:[%s165 + $0x8] sm:$0xff]
      %v1333 = vld [vmem:[%s165 + $0x10] sm:$0xff]
      %v1334 = vld [vmem:[%s165 + $0x18] sm:$0xff]
      %v1339 = vcombine.high %v1331, %v1331
      %v1340 = vcombine.high %v1332, %v1332
      %v1341 = vcombine.high %v1333, %v1333
      %v1342 = vcombine.high %v1334, %v1334
      %v1347 = vpack.c.bf16 %v1331, %v1331
      %v1348 = vpack.c.bf16 %v1339, %v1339
      %v1349 = vpack.c.bf16 %v1332, %v1332
      %v1350 = vpack.c.bf16 %v1340, %v1340
      %v1351 = vpack.c.bf16 %v1333, %v1333
      %v1352 = vpack.c.bf16 %v1341, %v1341
      %v1353 = vpack.c.bf16 %v1334, %v1334
      %v1354 = vpack.c.bf16 %v1342, %v1342
      %v1363 = vunpack.c.l.b16 %v1347
      %v1364 = vunpack.c.l.b16 %v1348
      %v1365 = vunpack.c.l.b16 %v1349
      %v1366 = vunpack.c.l.b16 %v1350
      %v1367 = vunpack.c.l.b16 %v1351
      %v1368 = vunpack.c.l.b16 %v1352
      %v1369 = vunpack.c.l.b16 %v1353
      %v1370 = vunpack.c.l.b16 %v1354
      %v1371 = vpack.c.b16 %v1364, %v1363
      %v1372 = vpack.c.b16 %v1366, %v1365
      %v1373 = vpack.c.b16 %v1368, %v1367
      %v1374 = vpack.c.b16 %v1370, %v1369
      %1375 = vrot.lane.b32.xlu0 %v1371, 7
      %v1376 = vpop.permute.xlu0 %1375
      %1377 = vrot.lane.b32.xlu0 %v1372, 7
      %v1378 = vpop.permute.xlu0 %1377
      %1379 = vrot.lane.b32.xlu0 %v1373, 7
      %v1380 = vpop.permute.xlu0 %1379
      %1381 = vrot.lane.b32.xlu0 %v1374, 7
      %v1382 = vpop.permute.xlu0 %1381
      %v1383 = vrot.slane %v1376, 4
      %v1384 = vrot.slane %v1378, 4
      %v1385 = vrot.slane %v1380, 4
      %v1386 = vrot.slane %v1382, 4
      %v1387 = vsel %vm278, %v1383, %v1384
      %vm1388 = vcmask 56320
      %v1389 = vsel %vm1388, %v1376, %v1387
      %v1390 = vsel %vm278, %v1384, %v1385
      %v1391 = vsel %vm1388, %v1378, %v1390
      %v1392 = vsel %vm278, %v1385, %v1386
      %v1393 = vsel %vm1388, %v1380, %v1392
      %v1394 = vsel %vm1388, %v1382, %v1386
      %1399 = vst [vmem:[#allocation2 + $0xe0] sm:$0x33] %v1389
      %1400 = vst [vmem:[#allocation2 + $0xe8] sm:$0x33] %v1391
      %1401 = vst [vmem:[#allocation2 + $0xf0] sm:$0x33] %v1393
      %1402 = vst [vmem:[#allocation2 + $0xf8] sm:$0x3] %v1394
      %v1403 = vld [vmem:[%s165] sm:$0xff]
      %v1404 = vld [vmem:[%s165 + $0x8] sm:$0xff]
      %v1405 = vld [vmem:[%s165 + $0x10] sm:$0xff]
      %v1406 = vld [vmem:[%s165 + $0x18] sm:$0xff]
      %v1411 = vcombine.high %v1403, %v1403
      %v1412 = vcombine.high %v1404, %v1404
      %v1413 = vcombine.high %v1405, %v1405
      %v1414 = vcombine.high %v1406, %v1406
      %v1419 = vpack.c.bf16 %v1403, %v1403
      %v1420 = vpack.c.bf16 %v1411, %v1411
      %v1421 = vpack.c.bf16 %v1404, %v1404
      %v1422 = vpack.c.bf16 %v1412, %v1412
      %v1423 = vpack.c.bf16 %v1405, %v1405
      %v1424 = vpack.c.bf16 %v1413, %v1413
      %v1425 = vpack.c.bf16 %v1406, %v1406
      %v1426 = vpack.c.bf16 %v1414, %v1414
      %v1435 = vunpack.c.l.b16 %v1419
      %v1436 = vunpack.c.l.b16 %v1420
      %v1437 = vunpack.c.l.b16 %v1421
      %v1438 = vunpack.c.l.b16 %v1422
      %v1439 = vunpack.c.l.b16 %v1423
      %v1440 = vunpack.c.l.b16 %v1424
      %v1441 = vunpack.c.l.b16 %v1425
      %v1442 = vunpack.c.l.b16 %v1426
      %v1443 = vpack.c.b16 %v1436, %v1435
      %v1444 = vpack.c.b16 %v1438, %v1437
      %v1445 = vpack.c.b16 %v1440, %v1439
      %v1446 = vpack.c.b16 %v1442, %v1441
      %v1447 = vrot.slane %v1443, 6
      %v1448 = vrot.slane %v1444, 6
      %v1449 = vrot.slane %v1445, 6
      %v1450 = vrot.slane %v1446, 6
      %1451 = vrot.lane.b32.xlu0 %v1447, 6
      %v1452 = vpop.permute.xlu0 %1451
      %1453 = vrot.lane.b32.xlu0 %v1448, 6
      %v1454 = vpop.permute.xlu0 %1453
      %1455 = vrot.lane.b32.xlu0 %v1449, 6
      %v1456 = vpop.permute.xlu0 %1455
      %1457 = vrot.lane.b32.xlu0 %v1450, 6
      %v1458 = vpop.permute.xlu0 %1457
      %v1459 = vrot.slane %v1452, 4
      %v1460 = vrot.slane %v1454, 4
      %v1461 = vrot.slane %v1456, 4
      %v1462 = vrot.slane %v1458, 4
      %v1463 = vsel %vm278, %v1459, %v1460
      %vm1464 = vcmask 48128
      %v1465 = vsel %vm1464, %v1452, %v1463
      %v1466 = vsel %vm278, %v1460, %v1461
      %v1467 = vsel %vm1464, %v1454, %v1466
      %v1468 = vsel %vm278, %v1461, %v1462
      %v1469 = vsel %vm1464, %v1456, %v1468
      %v1470 = vsel %vm1464, %v1458, %v1462
      %1475 = vst [vmem:[#allocation2 + $0xe0] sm:$0xcc] %v1465
      %1476 = vst [vmem:[#allocation2 + $0xe8] sm:$0xcc] %v1467
      %1477 = vst [vmem:[#allocation2 + $0xf0] sm:$0xcc] %v1469
      %1478 = vst [vmem:[#allocation2 + $0xf8] sm:$0xc] %v1470
      %v1479 = vld [vmem:[%s165 + $0x4] sm:$0xff]
      %v1480 = vld [vmem:[%s165 + $0xc] sm:$0xff]
      %v1481 = vld [vmem:[%s165 + $0x14] sm:$0xff]
      %v1482 = vld [vmem:[%s165 + $0x1c] sm:$0xff]
      %v1487 = vcombine.high %v1479, %v1479
      %v1488 = vcombine.high %v1480, %v1480
      %v1489 = vcombine.high %v1481, %v1481
      %v1490 = vcombine.high %v1482, %v1482
      %v1495 = vpack.c.bf16 %v1479, %v1479
      %v1496 = vpack.c.bf16 %v1487, %v1487
      %v1497 = vpack.c.bf16 %v1480, %v1480
      %v1498 = vpack.c.bf16 %v1488, %v1488
      %v1499 = vpack.c.bf16 %v1481, %v1481
      %v1500 = vpack.c.bf16 %v1489, %v1489
      %v1501 = vpack.c.bf16 %v1482, %v1482
      %v1502 = vpack.c.bf16 %v1490, %v1490
      %v1511 = vunpack.c.l.b16 %v1495
      %v1512 = vunpack.c.l.b16 %v1496
      %v1513 = vunpack.c.l.b16 %v1497
      %v1514 = vunpack.c.l.b16 %v1498
      %v1515 = vunpack.c.l.b16 %v1499
      %v1516 = vunpack.c.l.b16 %v1500
      %v1517 = vunpack.c.l.b16 %v1501
      %v1518 = vunpack.c.l.b16 %v1502
      %v1519 = vpack.c.b16 %v1512, %v1511
      %v1520 = vpack.c.b16 %v1514, %v1513
      %v1521 = vpack.c.b16 %v1516, %v1515
      %v1522 = vpack.c.b16 %v1518, %v1517
      %1523 = vrot.lane.b32.xlu0 %v1519, 56
      %v1524 = vpop.permute.xlu0 %1523
      %1525 = vrot.lane.b32.xlu0 %v1520, 56
      %v1526 = vpop.permute.xlu0 %1525
      %1527 = vrot.lane.b32.xlu0 %v1521, 56
      %v1528 = vpop.permute.xlu0 %1527
      %1529 = vrot.lane.b32.xlu0 %v1522, 56
      %v1530 = vpop.permute.xlu0 %1529
      %v1531 = vrot.slane %v1524, 4
      %v1532 = vrot.slane %v1526, 4
      %v1533 = vrot.slane %v1528, 4
      %v1534 = vrot.slane %v1530, 4
      %v1535 = vsel %vm278, %v1531, %v1532
      %vm1536 = vcmask 457728
      %v1537 = vsel %vm1536, %v1524, %v1535
      %v1538 = vsel %vm278, %v1532, %v1533
      %v1539 = vsel %vm1536, %v1526, %v1538
      %v1540 = vsel %vm278, %v1533, %v1534
      %v1541 = vsel %vm1536, %v1528, %v1540
      %v1542 = vsel %vm1536, %v1530, %v1534
      %1547 = vst [vmem:[#allocation2 + $0xfc] sm:$0x33] %v1537
      %1548 = vst [vmem:[#allocation2 + $0x104] sm:$0x33] %v1539
      %1549 = vst [vmem:[#allocation2 + $0x10c] sm:$0x33] %v1541
      %1550 = vst [vmem:[#allocation2 + $0x114] sm:$0x3] %v1542
      %v1551 = vld [vmem:[%s165 + $0x4] sm:$0xff]
      %v1552 = vld [vmem:[%s165 + $0xc] sm:$0xff]
      %v1553 = vld [vmem:[%s165 + $0x14] sm:$0xff]
      %v1554 = vld [vmem:[%s165 + $0x1c] sm:$0xff]
      %v1559 = vcombine.high %v1551, %v1551
      %v1560 = vcombine.high %v1552, %v1552
      %v1561 = vcombine.high %v1553, %v1553
      %v1562 = vcombine.high %v1554, %v1554
      %v1567 = vpack.c.bf16 %v1551, %v1551
      %v1568 = vpack.c.bf16 %v1559, %v1559
      %v1569 = vpack.c.bf16 %v1552, %v1552
      %v1570 = vpack.c.bf16 %v1560, %v1560
      %v1571 = vpack.c.bf16 %v1553, %v1553
      %v1572 = vpack.c.bf16 %v1561, %v1561
      %v1573 = vpack.c.bf16 %v1554, %v1554
      %v1574 = vpack.c.bf16 %v1562, %v1562
      %v1583 = vunpack.c.l.b16 %v1567
      %v1584 = vunpack.c.l.b16 %v1568
      %v1585 = vunpack.c.l.b16 %v1569
      %v1586 = vunpack.c.l.b16 %v1570
      %v1587 = vunpack.c.l.b16 %v1571
      %v1588 = vunpack.c.l.b16 %v1572
      %v1589 = vunpack.c.l.b16 %v1573
      %v1590 = vunpack.c.l.b16 %v1574
      %v1591 = vpack.c.b16 %v1584, %v1583
      %v1592 = vpack.c.b16 %v1586, %v1585
      %v1593 = vpack.c.b16 %v1588, %v1587
      %v1594 = vpack.c.b16 %v1590, %v1589
      %v1595 = vrot.slane %v1591, 6
      %v1596 = vrot.slane %v1592, 6
      %v1597 = vrot.slane %v1593, 6
      %v1598 = vrot.slane %v1594, 6
      %1599 = vrot.lane.b32.xlu0 %v1595, 55
      %v1600 = vpop.permute.xlu0 %1599
      %1601 = vrot.lane.b32.xlu0 %v1596, 55
      %v1602 = vpop.permute.xlu0 %1601
      %1603 = vrot.lane.b32.xlu0 %v1597, 55
      %v1604 = vpop.permute.xlu0 %1603
      %1605 = vrot.lane.b32.xlu0 %v1598, 55
      %v1606 = vpop.permute.xlu0 %1605
      %v1607 = vrot.slane %v1600, 4
      %v1608 = vrot.slane %v1602, 4
      %v1609 = vrot.slane %v1604, 4
      %v1610 = vrot.slane %v1606, 4
      %v1611 = vsel %vm278, %v1607, %v1608
      %vm1612 = vcmask 449536
      %v1613 = vsel %vm1612, %v1600, %v1611
      %v1614 = vsel %vm278, %v1608, %v1609
      %v1615 = vsel %vm1612, %v1602, %v1614
      %v1616 = vsel %vm278, %v1609, %v1610
      %v1617 = vsel %vm1612, %v1604, %v1616
      %v1618 = vsel %vm1612, %v1606, %v1610
      %1623 = vst [vmem:[#allocation2 + $0xfc] sm:$0xcc] %v1613
      %1624 = vst [vmem:[#allocation2 + $0x104] sm:$0xcc] %v1615
      %1625 = vst [vmem:[#allocation2 + $0x10c] sm:$0xcc] %v1617
      %1626 = vst [vmem:[#allocation2 + $0x114] sm:$0xc] %v1618
      %v1627 = vld [vmem:[%s165 + $0x4] sm:$0xff]
      %v1628 = vld [vmem:[%s165 + $0xc] sm:$0xff]
      %v1629 = vld [vmem:[%s165 + $0x14] sm:$0xff]
      %v1630 = vld [vmem:[%s165 + $0x1c] sm:$0xff]
      %v1635 = vcombine.high %v1627, %v1627
      %v1636 = vcombine.high %v1628, %v1628
      %v1637 = vcombine.high %v1629, %v1629
      %v1638 = vcombine.high %v1630, %v1630
      %v1643 = vpack.c.bf16 %v1627, %v1627
      %v1644 = vpack.c.bf16 %v1635, %v1635
      %v1645 = vpack.c.bf16 %v1628, %v1628
      %v1646 = vpack.c.bf16 %v1636, %v1636
      %v1647 = vpack.c.bf16 %v1629, %v1629
      %v1648 = vpack.c.bf16 %v1637, %v1637
      %v1649 = vpack.c.bf16 %v1630, %v1630
      %v1650 = vpack.c.bf16 %v1638, %v1638
      %v1659 = vunpack.c.l.b16 %v1643
      %v1660 = vunpack.c.l.b16 %v1644
      %v1661 = vunpack.c.l.b16 %v1645
      %v1662 = vunpack.c.l.b16 %v1646
      %v1663 = vunpack.c.l.b16 %v1647
      %v1664 = vunpack.c.l.b16 %v1648
      %v1665 = vunpack.c.l.b16 %v1649
      %v1666 = vunpack.c.l.b16 %v1650
      %v1667 = vpack.c.b16 %v1660, %v1659
      %v1668 = vpack.c.b16 %v1662, %v1661
      %v1669 = vpack.c.b16 %v1664, %v1663
      %v1670 = vpack.c.b16 %v1666, %v1665
      %1671 = vrot.lane.b32.xlu0 %v1667, 54
      %v1672 = vpop.permute.xlu0 %1671
      %1673 = vrot.lane.b32.xlu0 %v1668, 54
      %v1674 = vpop.permute.xlu0 %1673
      %1675 = vrot.lane.b32.xlu0 %v1669, 54
      %v1676 = vpop.permute.xlu0 %1675
      %1677 = vrot.lane.b32.xlu0 %v1670, 54
      %v1678 = vpop.permute.xlu0 %1677
      %v1679 = vrot.slane %v1672, 4
      %v1680 = vrot.slane %v1674, 4
      %v1681 = vrot.slane %v1676, 4
      %v1682 = vrot.slane %v1678, 4
      %v1683 = vsel %vm278, %v1679, %v1680
      %vm1684 = vcmask 441344
      %v1685 = vsel %vm1684, %v1672, %v1683
      %v1686 = vsel %vm278, %v1680, %v1681
      %v1687 = vsel %vm1684, %v1674, %v1686
      %v1688 = vsel %vm278, %v1681, %v1682
      %v1689 = vsel %vm1684, %v1676, %v1688
      %v1690 = vsel %vm1684, %v1678, %v1682
      %1695 = vst [vmem:[#allocation2 + $0x118] sm:$0x33] %v1685
      %1696 = vst [vmem:[#allocation2 + $0x120] sm:$0x33] %v1687
      %1697 = vst [vmem:[#allocation2 + $0x128] sm:$0x33] %v1689
      %1698 = vst [vmem:[#allocation2 + $0x130] sm:$0x3] %v1690
      %v1699 = vld [vmem:[%s165 + $0x4] sm:$0xff]
      %v1700 = vld [vmem:[%s165 + $0xc] sm:$0xff]
      %v1701 = vld [vmem:[%s165 + $0x14] sm:$0xff]
      %v1702 = vld [vmem:[%s165 + $0x1c] sm:$0xff]
      %v1707 = vcombine.high %v1699, %v1699
      %v1708 = vcombine.high %v1700, %v1700
      %v1709 = vcombine.high %v1701, %v1701
      %v1710 = vcombine.high %v1702, %v1702
      %v1715 = vpack.c.bf16 %v1699, %v1699
      %v1716 = vpack.c.bf16 %v1707, %v1707
      %v1717 = vpack.c.bf16 %v1700, %v1700
      %v1718 = vpack.c.bf16 %v1708, %v1708
      %v1719 = vpack.c.bf16 %v1701, %v1701
      %v1720 = vpack.c.bf16 %v1709, %v1709
      %v1721 = vpack.c.bf16 %v1702, %v1702
      %v1722 = vpack.c.bf16 %v1710, %v1710
      %v1731 = vunpack.c.l.b16 %v1715
      %v1732 = vunpack.c.l.b16 %v1716
      %v1733 = vunpack.c.l.b16 %v1717
      %v1734 = vunpack.c.l.b16 %v1718
      %v1735 = vunpack.c.l.b16 %v1719
      %v1736 = vunpack.c.l.b16 %v1720
      %v1737 = vunpack.c.l.b16 %v1721
      %v1738 = vunpack.c.l.b16 %v1722
      %v1739 = vpack.c.b16 %v1732, %v1731
      %v1740 = vpack.c.b16 %v1734, %v1733
      %v1741 = vpack.c.b16 %v1736, %v1735
      %v1742 = vpack.c.b16 %v1738, %v1737
      %v1743 = vrot.slane %v1739, 6
      %v1744 = vrot.slane %v1740, 6
      %v1745 = vrot.slane %v1741, 6
      %v1746 = vrot.slane %v1742, 6
      %1747 = vrot.lane.b32.xlu0 %v1743, 46
      %v1748 = vpop.permute.xlu0 %1747
      %1749 = vrot.lane.b32.xlu0 %v1744, 46
      %v1750 = vpop.permute.xlu0 %1749
      %1751 = vrot.lane.b32.xlu0 %v1745, 46
      %v1752 = vpop.permute.xlu0 %1751
      %1753 = vrot.lane.b32.xlu0 %v1746, 46
      %v1754 = vpop.permute.xlu0 %1753
      %v1755 = vrot.slane %v1748, 4
      %v1756 = vrot.slane %v1750, 4
      %v1757 = vrot.slane %v1752, 4
      %v1758 = vrot.slane %v1754, 4
      %v1759 = vsel %vm278, %v1755, %v1756
      %vm1760 = vcmask 375808
      %v1761 = vsel %vm1760, %v1748, %v1759
      %v1762 = vsel %vm278, %v1756, %v1757
      %v1763 = vsel %vm1760, %v1750, %v1762
      %v1764 = vsel %vm278, %v1757, %v1758
      %v1765 = vsel %vm1760, %v1752, %v1764
      %v1766 = vsel %vm1760, %v1754, %v1758
      %1771 = vst [vmem:[#allocation2 + $0x118] sm:$0xcc] %v1761
      %1772 = vst [vmem:[#allocation2 + $0x120] sm:$0xcc] %v1763
      %1773 = vst [vmem:[#allocation2 + $0x128] sm:$0xcc] %v1765
      %1774 = vst [vmem:[#allocation2 + $0x130] sm:$0xc] %v1766
      %v1775 = vld [vmem:[%s165 + $0x4] sm:$0xff]
      %v1776 = vld [vmem:[%s165 + $0xc] sm:$0xff]
      %v1777 = vld [vmem:[%s165 + $0x14] sm:$0xff]
      %v1778 = vld [vmem:[%s165 + $0x1c] sm:$0xff]
      %v1783 = vcombine.high %v1775, %v1775
      %v1784 = vcombine.high %v1776, %v1776
      %v1785 = vcombine.high %v1777, %v1777
      %v1786 = vcombine.high %v1778, %v1778
      %v1791 = vpack.c.bf16 %v1775, %v1775
      %v1792 = vpack.c.bf16 %v1783, %v1783
      %v1793 = vpack.c.bf16 %v1776, %v1776
      %v1794 = vpack.c.bf16 %v1784, %v1784
      %v1795 = vpack.c.bf16 %v1777, %v1777
      %v1796 = vpack.c.bf16 %v1785, %v1785
      %v1797 = vpack.c.bf16 %v1778, %v1778
      %v1798 = vpack.c.bf16 %v1786, %v1786
      %v1807 = vunpack.c.l.b16 %v1791
      %v1808 = vunpack.c.l.b16 %v1792
      %v1809 = vunpack.c.l.b16 %v1793
      %v1810 = vunpack.c.l.b16 %v1794
      %v1811 = vunpack.c.l.b16 %v1795
      %v1812 = vunpack.c.l.b16 %v1796
      %v1813 = vunpack.c.l.b16 %v1797
      %v1814 = vunpack.c.l.b16 %v1798
      %v1815 = vpack.c.b16 %v1808, %v1807
      %v1816 = vpack.c.b16 %v1810, %v1809
      %v1817 = vpack.c.b16 %v1812, %v1811
      %v1818 = vpack.c.b16 %v1814, %v1813
      %1819 = vrot.lane.b32.xlu0 %v1815, 45
      %v1820 = vpop.permute.xlu0 %1819
      %1821 = vrot.lane.b32.xlu0 %v1816, 45
      %v1822 = vpop.permute.xlu0 %1821
      %1823 = vrot.lane.b32.xlu0 %v1817, 45
      %v1824 = vpop.permute.xlu0 %1823
      %1825 = vrot.lane.b32.xlu0 %v1818, 45
      %v1826 = vpop.permute.xlu0 %1825
      %v1827 = vrot.slane %v1820, 4
      %v1828 = vrot.slane %v1822, 4
      %v1829 = vrot.slane %v1824, 4
      %v1830 = vrot.slane %v1826, 4
      %v1831 = vsel %vm278, %v1827, %v1828
      %vm1832 = vcmask 367616
      %v1833 = vsel %vm1832, %v1820, %v1831
      %v1834 = vsel %vm278, %v1828, %v1829
      %v1835 = vsel %vm1832, %v1822, %v1834
      %v1836 = vsel %vm278, %v1829, %v1830
      %v1837 = vsel %vm1832, %v1824, %v1836
      %v1838 = vsel %vm1832, %v1826, %v1830
      %1843 = vst [vmem:[#allocation2 + $0x134] sm:$0x33] %v1833
      %1844 = vst [vmem:[#allocation2 + $0x13c] sm:$0x33] %v1835
      %1845 = vst [vmem:[#allocation2 + $0x144] sm:$0x33] %v1837
      %1846 = vst [vmem:[#allocation2 + $0x14c] sm:$0x3] %v1838
      %v1847 = vld [vmem:[%s165 + $0x4] sm:$0xff]
      %v1848 = vld [vmem:[%s165 + $0xc] sm:$0xff]
      %v1849 = vld [vmem:[%s165 + $0x14] sm:$0xff]
      %v1850 = vld [vmem:[%s165 + $0x1c] sm:$0xff]
      %v1855 = vcombine.high %v1847, %v1847
      %v1856 = vcombine.high %v1848, %v1848
      %v1857 = vcombine.high %v1849, %v1849
      %v1858 = vcombine.high %v1850, %v1850
      %v1863 = vpack.c.bf16 %v1847, %v1847
      %v1864 = vpack.c.bf16 %v1855, %v1855
      %v1865 = vpack.c.bf16 %v1848, %v1848
      %v1866 = vpack.c.bf16 %v1856, %v1856
      %v1867 = vpack.c.bf16 %v1849, %v1849
      %v1868 = vpack.c.bf16 %v1857, %v1857
      %v1869 = vpack.c.bf16 %v1850, %v1850
      %v1870 = vpack.c.bf16 %v1858, %v1858
      %v1879 = vunpack.c.l.b16 %v1863
      %v1880 = vunpack.c.l.b16 %v1864
      %v1881 = vunpack.c.l.b16 %v1865
      %v1882 = vunpack.c.l.b16 %v1866
      %v1883 = vunpack.c.l.b16 %v1867
      %v1884 = vunpack.c.l.b16 %v1868
      %v1885 = vunpack.c.l.b16 %v1869
      %v1886 = vunpack.c.l.b16 %v1870
      %v1887 = vpack.c.b16 %v1880, %v1879
      %v1888 = vpack.c.b16 %v1882, %v1881
      %v1889 = vpack.c.b16 %v1884, %v1883
      %v1890 = vpack.c.b16 %v1886, %v1885
      %v1891 = vrot.slane %v1887, 6
      %v1892 = vrot.slane %v1888, 6
      %v1893 = vrot.slane %v1889, 6
      %v1894 = vrot.slane %v1890, 6
      %1895 = vrot.lane.b32.xlu0 %v1891, 44
      %v1896 = vpop.permute.xlu0 %1895
      %1897 = vrot.lane.b32.xlu0 %v1892, 44
      %v1898 = vpop.permute.xlu0 %1897
      %1899 = vrot.lane.b32.xlu0 %v1893, 44
      %v1900 = vpop.permute.xlu0 %1899
      %1901 = vrot.lane.b32.xlu0 %v1894, 44
      %v1902 = vpop.permute.xlu0 %1901
      %v1903 = vrot.slane %v1896, 4
      %v1904 = vrot.slane %v1898, 4
      %v1905 = vrot.slane %v1900, 4
      %v1906 = vrot.slane %v1902, 4
      %v1907 = vsel %vm278, %v1903, %v1904
      %vm1908 = vcmask 359424
      %v1909 = vsel %vm1908, %v1896, %v1907
      %v1910 = vsel %vm278, %v1904, %v1905
      %v1911 = vsel %vm1908, %v1898, %v1910
      %v1912 = vsel %vm278, %v1905, %v1906
      %v1913 = vsel %vm1908, %v1900, %v1912
      %v1914 = vsel %vm1908, %v1902, %v1906
      %1919 = vst [vmem:[#allocation2 + $0x134] sm:$0xcc] %v1909
      %1920 = vst [vmem:[#allocation2 + $0x13c] sm:$0xcc] %v1911
      %1921 = vst [vmem:[#allocation2 + $0x144] sm:$0xcc] %v1913
      %1922 = vst [vmem:[#allocation2 + $0x14c] sm:$0xc] %v1914
      %v1923 = vld [vmem:[%s165 + $0x4] sm:$0xff]
      %v1924 = vld [vmem:[%s165 + $0xc] sm:$0xff]
      %v1925 = vld [vmem:[%s165 + $0x14] sm:$0xff]
      %v1926 = vld [vmem:[%s165 + $0x1c] sm:$0xff]
      %v1931 = vcombine.high %v1923, %v1923
      %v1932 = vcombine.high %v1924, %v1924
      %v1933 = vcombine.high %v1925, %v1925
      %v1934 = vcombine.high %v1926, %v1926
      %v1939 = vpack.c.bf16 %v1923, %v1923
      %v1940 = vpack.c.bf16 %v1931, %v1931
      %v1941 = vpack.c.bf16 %v1924, %v1924
      %v1942 = vpack.c.bf16 %v1932, %v1932
      %v1943 = vpack.c.bf16 %v1925, %v1925
      %v1944 = vpack.c.bf16 %v1933, %v1933
      %v1945 = vpack.c.bf16 %v1926, %v1926
      %v1946 = vpack.c.bf16 %v1934, %v1934
      %v1955 = vunpack.c.l.b16 %v1939
      %v1956 = vunpack.c.l.b16 %v1940
      %v1957 = vunpack.c.l.b16 %v1941
      %v1958 = vunpack.c.l.b16 %v1942
      %v1959 = vunpack.c.l.b16 %v1943
      %v1960 = vunpack.c.l.b16 %v1944
      %v1961 = vunpack.c.l.b16 %v1945
      %v1962 = vunpack.c.l.b16 %v1946
      %v1963 = vpack.c.b16 %v1956, %v1955
      %v1964 = vpack.c.b16 %v1958, %v1957
      %v1965 = vpack.c.b16 %v1960, %v1959
      %v1966 = vpack.c.b16 %v1962, %v1961
      %1967 = vrot.lane.b32.xlu0 %v1963, 36
      %v1968 = vpop.permute.xlu0 %1967
      %1969 = vrot.lane.b32.xlu0 %v1964, 36
      %v1970 = vpop.permute.xlu0 %1969
      %1971 = vrot.lane.b32.xlu0 %v1965, 36
      %v1972 = vpop.permute.xlu0 %1971
      %1973 = vrot.lane.b32.xlu0 %v1966, 36
      %v1974 = vpop.permute.xlu0 %1973
      %v1975 = vrot.slane %v1968, 4
      %v1976 = vrot.slane %v1970, 4
      %v1977 = vrot.slane %v1972, 4
      %v1978 = vrot.slane %v1974, 4
      %v1979 = vsel %vm278, %v1975, %v1976
      %vm1980 = vcmask 293888
      %v1981 = vsel %vm1980, %v1968, %v1979
      %v1982 = vsel %vm278, %v1976, %v1977
      %v1983 = vsel %vm1980, %v1970, %v1982
      %v1984 = vsel %vm278, %v1977, %v1978
      %v1985 = vsel %vm1980, %v1972, %v1984
      %v1986 = vsel %vm1980, %v1974, %v1978
      %1991 = vst [vmem:[#allocation2 + $0x150] sm:$0x33] %v1981
      %1992 = vst [vmem:[#allocation2 + $0x158] sm:$0x33] %v1983
      %1993 = vst [vmem:[#allocation2 + $0x160] sm:$0x33] %v1985
      %1994 = vst [vmem:[#allocation2 + $0x168] sm:$0x3] %v1986
      %v1995 = vld [vmem:[%s165 + $0x4] sm:$0xff]
      %v1996 = vld [vmem:[%s165 + $0xc] sm:$0xff]
      %v1997 = vld [vmem:[%s165 + $0x14] sm:$0xff]
      %v1998 = vld [vmem:[%s165 + $0x1c] sm:$0xff]
      %v2003 = vcombine.high %v1995, %v1995
      %v2004 = vcombine.high %v1996, %v1996
      %v2005 = vcombine.high %v1997, %v1997
      %v2006 = vcombine.high %v1998, %v1998
      %v2011 = vpack.c.bf16 %v1995, %v1995
      %v2012 = vpack.c.bf16 %v2003, %v2003
      %v2013 = vpack.c.bf16 %v1996, %v1996
      %v2014 = vpack.c.bf16 %v2004, %v2004
      %v2015 = vpack.c.bf16 %v1997, %v1997
      %v2016 = vpack.c.bf16 %v2005, %v2005
      %v2017 = vpack.c.bf16 %v1998, %v1998
      %v2018 = vpack.c.bf16 %v2006, %v2006
      %v2027 = vunpack.c.l.b16 %v2011
      %v2028 = vunpack.c.l.b16 %v2012
      %v2029 = vunpack.c.l.b16 %v2013
      %v2030 = vunpack.c.l.b16 %v2014
      %v2031 = vunpack.c.l.b16 %v2015
      %v2032 = vunpack.c.l.b16 %v2016
      %v2033 = vunpack.c.l.b16 %v2017
      %v2034 = vunpack.c.l.b16 %v2018
      %v2035 = vpack.c.b16 %v2028, %v2027
      %v2036 = vpack.c.b16 %v2030, %v2029
      %v2037 = vpack.c.b16 %v2032, %v2031
      %v2038 = vpack.c.b16 %v2034, %v2033
      %v2039 = vrot.slane %v2035, 6
      %v2040 = vrot.slane %v2036, 6
      %v2041 = vrot.slane %v2037, 6
      %v2042 = vrot.slane %v2038, 6
      %2043 = vrot.lane.b32.xlu0 %v2039, 35
      %v2044 = vpop.permute.xlu0 %2043
      %2045 = vrot.lane.b32.xlu0 %v2040, 35
      %v2046 = vpop.permute.xlu0 %2045
      %2047 = vrot.lane.b32.xlu0 %v2041, 35
      %v2048 = vpop.permute.xlu0 %2047
      %2049 = vrot.lane.b32.xlu0 %v2042, 35
      %v2050 = vpop.permute.xlu0 %2049
      %v2051 = vrot.slane %v2044, 4
      %v2052 = vrot.slane %v2046, 4
      %v2053 = vrot.slane %v2048, 4
      %v2054 = vrot.slane %v2050, 4
      %v2055 = vsel %vm278, %v2051, %v2052
      %vm2056 = vcmask 285696
      %v2057 = vsel %vm2056, %v2044, %v2055
      %v2058 = vsel %vm278, %v2052, %v2053
      %v2059 = vsel %vm2056, %v2046, %v2058
      %v2060 = vsel %vm278, %v2053, %v2054
      %v2061 = vsel %vm2056, %v2048, %v2060
      %v2062 = vsel %vm2056, %v2050, %v2054
      %2067 = vst [vmem:[#allocation2 + $0x150] sm:$0xcc] %v2057
      %2068 = vst [vmem:[#allocation2 + $0x158] sm:$0xcc] %v2059
      %2069 = vst [vmem:[#allocation2 + $0x160] sm:$0xcc] %v2061
      %2070 = vst [vmem:[#allocation2 + $0x168] sm:$0xc] %v2062
      %v2071 = vld [vmem:[%s165 + $0x4] sm:$0xff]
      %v2072 = vld [vmem:[%s165 + $0xc] sm:$0xff]
      %v2073 = vld [vmem:[%s165 + $0x14] sm:$0xff]
      %v2074 = vld [vmem:[%s165 + $0x1c] sm:$0xff]
      %v2079 = vcombine.high %v2071, %v2071
      %v2080 = vcombine.high %v2072, %v2072
      %v2081 = vcombine.high %v2073, %v2073
      %v2082 = vcombine.high %v2074, %v2074
      %v2087 = vpack.c.bf16 %v2071, %v2071
      %v2088 = vpack.c.bf16 %v2079, %v2079
      %v2089 = vpack.c.bf16 %v2072, %v2072
      %v2090 = vpack.c.bf16 %v2080, %v2080
      %v2091 = vpack.c.bf16 %v2073, %v2073
      %v2092 = vpack.c.bf16 %v2081, %v2081
      %v2093 = vpack.c.bf16 %v2074, %v2074
      %v2094 = vpack.c.bf16 %v2082, %v2082
      %v2103 = vunpack.c.l.b16 %v2087
      %v2104 = vunpack.c.l.b16 %v2088
      %v2105 = vunpack.c.l.b16 %v2089
      %v2106 = vunpack.c.l.b16 %v2090
      %v2107 = vunpack.c.l.b16 %v2091
      %v2108 = vunpack.c.l.b16 %v2092
      %v2109 = vunpack.c.l.b16 %v2093
      %v2110 = vunpack.c.l.b16 %v2094
      %v2111 = vpack.c.b16 %v2104, %v2103
      %v2112 = vpack.c.b16 %v2106, %v2105
      %v2113 = vpack.c.b16 %v2108, %v2107
      %v2114 = vpack.c.b16 %v2110, %v2109
      %2115 = vrot.lane.b32.xlu0 %v2111, 34
      %v2116 = vpop.permute.xlu0 %2115
      %2117 = vrot.lane.b32.xlu0 %v2112, 34
      %v2118 = vpop.permute.xlu0 %2117
      %2119 = vrot.lane.b32.xlu0 %v2113, 34
      %v2120 = vpop.permute.xlu0 %2119
      %2121 = vrot.lane.b32.xlu0 %v2114, 34
      %v2122 = vpop.permute.xlu0 %2121
      %v2123 = vrot.slane %v2116, 4
      %v2124 = vrot.slane %v2118, 4
      %v2125 = vrot.slane %v2120, 4
      %v2126 = vrot.slane %v2122, 4
      %v2127 = vsel %vm278, %v2123, %v2124
      %vm2128 = vcmask 277504
      %v2129 = vsel %vm2128, %v2116, %v2127
      %v2130 = vsel %vm278, %v2124, %v2125
      %v2131 = vsel %vm2128, %v2118, %v2130
      %v2132 = vsel %vm278, %v2125, %v2126
      %v2133 = vsel %vm2128, %v2120, %v2132
      %v2134 = vsel %vm2128, %v2122, %v2126
      %2139 = vst [vmem:[#allocation2 + $0x16c] sm:$0x33] %v2129
      %2140 = vst [vmem:[#allocation2 + $0x174] sm:$0x33] %v2131
      %2141 = vst [vmem:[#allocation2 + $0x17c] sm:$0x33] %v2133
      %2142 = vst [vmem:[#allocation2 + $0x184] sm:$0x3] %v2134
      %v2143 = vld [vmem:[%s1] sm:$0xf]
      %v2144 = vld [vmem:[%s1 + $0x4] sm:$0xf]
      %v2145 = vld [vmem:[%s1 + $0x8] sm:$0xf]
      %v2146 = vld [vmem:[%s1 + $0xc] sm:$0xf]
      %v2147 = vld [vmem:[%s1 + $0x10] sm:$0xf]
      %v2148 = vld [vmem:[%s1 + $0x14] sm:$0xf]
      %v2149 = vld [vmem:[%s1 + $0x18] sm:$0xf]
      %v2150 = vld [vmem:[%s1 + $0x1c] sm:$0xf]
      %v2151 = vld [vmem:[#allocation2] sm:$0xff]
      %v2152 = vld [vmem:[#allocation2 + $0x8] sm:$0xff]
      %v2153 = vld [vmem:[#allocation2 + $0x10] sm:$0xff]
      %v2154 = vld [vmem:[#allocation2 + $0x18] sm:$0xf]
      %v2155 = vld [vmem:[#allocation2 + $0x1c] sm:$0xff]
      %v2156 = vld [vmem:[#allocation2 + $0x24] sm:$0xff]
      %v2157 = vld [vmem:[#allocation2 + $0x2c] sm:$0xff]
      %v2158 = vld [vmem:[#allocation2 + $0x34] sm:$0xf]
      %v2159 = vld [vmem:[#allocation2 + $0x38] sm:$0xff]
      %v2160 = vld [vmem:[#allocation2 + $0x40] sm:$0xff]
      %v2161 = vld [vmem:[#allocation2 + $0x48] sm:$0xff]
      %v2162 = vld [vmem:[#allocation2 + $0x50] sm:$0xf]
      %v2163 = vld [vmem:[#allocation2 + $0x54] sm:$0xff]
      %v2164 = vld [vmem:[#allocation2 + $0x5c] sm:$0xff]
      %v2165 = vld [vmem:[#allocation2 + $0x64] sm:$0xff]
      %v2166 = vld [vmem:[#allocation2 + $0x6c] sm:$0xf]
      %v2167 = vld [vmem:[#allocation2 + $0x70] sm:$0xff]
      %v2168 = vld [vmem:[#allocation2 + $0x78] sm:$0xff]
      %v2169 = vld [vmem:[#allocation2 + $0x80] sm:$0xff]
      %v2170 = vld [vmem:[#allocation2 + $0x88] sm:$0xf]
      %v2171 = vld [vmem:[#allocation2 + $0x8c] sm:$0xff]
      %v2172 = vld [vmem:[#allocation2 + $0x94] sm:$0xff]
      %v2173 = vld [vmem:[#allocation2 + $0x9c] sm:$0xff]
      %v2174 = vld [vmem:[#allocation2 + $0xa4] sm:$0xf]
      %v2175 = vld [vmem:[#allocation2 + $0xa8] sm:$0xff]
      %v2176 = vld [vmem:[#allocation2 + $0xb0] sm:$0xff]
      %v2177 = vld [vmem:[#allocation2 + $0xb8] sm:$0xff]
      %v2178 = vld [vmem:[#allocation2 + $0xc0] sm:$0xf]
      %v2179 = vld [vmem:[#allocation2 + $0xc4] sm:$0xff]
      %v2180 = vld [vmem:[#allocation2 + $0xcc] sm:$0xff]
      %v2181 = vld [vmem:[#allocation2 + $0xd4] sm:$0xff]
      %v2182 = vld [vmem:[#allocation2 + $0xdc] sm:$0xf]
      %v2183 = vld [vmem:[#allocation2 + $0xe0] sm:$0xff]
      %v2184 = vld [vmem:[#allocation2 + $0xe8] sm:$0xff]
      %v2185 = vld [vmem:[#allocation2 + $0xf0] sm:$0xff]
      %v2186 = vld [vmem:[#allocation2 + $0xf8] sm:$0xf]
      %v2187 = vld [vmem:[#allocation2 + $0xfc] sm:$0xff]
      %v2188 = vld [vmem:[#allocation2 + $0x104] sm:$0xff]
      %v2189 = vld [vmem:[#allocation2 + $0x10c] sm:$0xff]
      %v2190 = vld [vmem:[#allocation2 + $0x114] sm:$0xf]
      %v2191 = vld [vmem:[#allocation2 + $0x118] sm:$0xff]
      %v2192 = vld [vmem:[#allocation2 + $0x120] sm:$0xff]
      %v2193 = vld [vmem:[#allocation2 + $0x128] sm:$0xff]
      %v2194 = vld [vmem:[#allocation2 + $0x130] sm:$0xf]
      %v2195 = vld [vmem:[#allocation2 + $0x134] sm:$0xff]
      %v2196 = vld [vmem:[#allocation2 + $0x13c] sm:$0xff]
      %v2197 = vld [vmem:[#allocation2 + $0x144] sm:$0xff]
      %v2198 = vld [vmem:[#allocation2 + $0x14c] sm:$0xf]
      %v2199 = vld [vmem:[#allocation2 + $0x150] sm:$0xff]
      %v2200 = vld [vmem:[#allocation2 + $0x158] sm:$0xff]
      %v2201 = vld [vmem:[#allocation2 + $0x160] sm:$0xff]
      %v2202 = vld [vmem:[#allocation2 + $0x168] sm:$0xf]
      %v2203 = vld [vmem:[#allocation2 + $0x16c] sm:$0x33]
      %v2204 = vld [vmem:[#allocation2 + $0x174] sm:$0x33]
      %v2205 = vld [vmem:[#allocation2 + $0x17c] sm:$0x33]
      %v2206 = vld [vmem:[#allocation2 + $0x184] sm:$0x3]
      %v2215 = vunpack.c.l.b16 %v2143
      %v2216 = vunpack.c.l.b16 %v2144
      %v2217 = vunpack.c.l.b16 %v2145
      %v2218 = vunpack.c.l.b16 %v2146
      %v2219 = vunpack.c.l.b16 %v2147
      %v2220 = vunpack.c.l.b16 %v2148
      %v2221 = vunpack.c.l.b16 %v2149
      %v2222 = vunpack.c.l.b16 %v2150
      %v2223 = vpack.c.b16 %v2216, %v2215
      %v2224 = vpack.c.b16 %v2218, %v2217
      %v2225 = vpack.c.b16 %v2220, %v2219
      %v2226 = vpack.c.b16 %v2222, %v2221
      %v2283 = vunpack.c.l.b16 %v2151
      %v2284 = vunpack.c.h.b16 %v2151
      %v2285 = vunpack.c.l.b16 %v2152
      %v2286 = vunpack.c.h.b16 %v2152
      %v2287 = vunpack.c.l.b16 %v2153
      %v2288 = vunpack.c.h.b16 %v2153
      %v2289 = vunpack.c.l.b16 %v2154
      %v2290 = vunpack.c.l.b16 %v2155
      %v2291 = vunpack.c.h.b16 %v2155
      %v2292 = vunpack.c.l.b16 %v2156
      %v2293 = vunpack.c.h.b16 %v2156
      %v2294 = vunpack.c.l.b16 %v2157
      %v2295 = vunpack.c.h.b16 %v2157
      %v2296 = vunpack.c.l.b16 %v2158
      %v2297 = vunpack.c.l.b16 %v2159
      %v2298 = vunpack.c.h.b16 %v2159
      %v2299 = vunpack.c.l.b16 %v2160
      %v2300 = vunpack.c.h.b16 %v2160
      %v2301 = vunpack.c.l.b16 %v2161
      %v2302 = vunpack.c.h.b16 %v2161
      %v2303 = vunpack.c.l.b16 %v2162
      %v2304 = vunpack.c.l.b16 %v2163
      %v2305 = vunpack.c.h.b16 %v2163
      %v2306 = vunpack.c.l.b16 %v2164
      %v2307 = vunpack.c.h.b16 %v2164
      %v2308 = vunpack.c.l.b16 %v2165
      %v2309 = vunpack.c.h.b16 %v2165
      %v2310 = vunpack.c.l.b16 %v2166
      %v2311 = vunpack.c.l.b16 %v2167
      %v2312 = vunpack.c.h.b16 %v2167
      %v2313 = vunpack.c.l.b16 %v2168
      %v2314 = vunpack.c.h.b16 %v2168
      %v2315 = vunpack.c.l.b16 %v2169
      %v2316 = vunpack.c.h.b16 %v2169
      %v2317 = vunpack.c.l.b16 %v2170
      %v2318 = vunpack.c.l.b16 %v2171
      %v2319 = vunpack.c.h.b16 %v2171
      %v2320 = vunpack.c.l.b16 %v2172
      %v2321 = vunpack.c.h.b16 %v2172
      %v2322 = vunpack.c.l.b16 %v2173
      %v2323 = vunpack.c.h.b16 %v2173
      %v2324 = vunpack.c.l.b16 %v2174
      %v2325 = vunpack.c.l.b16 %v2175
      %v2326 = vunpack.c.h.b16 %v2175
      %v2327 = vunpack.c.l.b16 %v2176
      %v2328 = vunpack.c.h.b16 %v2176
      %v2329 = vunpack.c.l.b16 %v2177
      %v2330 = vunpack.c.h.b16 %v2177
      %v2331 = vunpack.c.l.b16 %v2178
      %v2332 = vunpack.c.l.b16 %v2179
      %v2333 = vunpack.c.h.b16 %v2179
      %v2334 = vunpack.c.l.b16 %v2180
      %v2335 = vunpack.c.h.b16 %v2180
      %v2336 = vunpack.c.l.b16 %v2181
      %v2337 = vunpack.c.h.b16 %v2181
      %v2338 = vunpack.c.l.b16 %v2182
      %v2339 = vunpack.c.l.b16 %v2183
      %v2340 = vunpack.c.h.b16 %v2183
      %v2341 = vunpack.c.l.b16 %v2184
      %v2342 = vunpack.c.h.b16 %v2184
      %v2343 = vunpack.c.l.b16 %v2185
      %v2344 = vunpack.c.h.b16 %v2185
      %v2345 = vunpack.c.l.b16 %v2186
      %v2346 = vunpack.c.l.b16 %v2187
      %v2347 = vunpack.c.h.b16 %v2187
      %v2348 = vunpack.c.l.b16 %v2188
      %v2349 = vunpack.c.h.b16 %v2188
      %v2350 = vunpack.c.l.b16 %v2189
      %v2351 = vunpack.c.h.b16 %v2189
      %v2352 = vunpack.c.l.b16 %v2190
      %v2353 = vunpack.c.l.b16 %v2191
      %v2354 = vunpack.c.h.b16 %v2191
      %v2355 = vunpack.c.l.b16 %v2192
      %v2356 = vunpack.c.h.b16 %v2192
      %v2357 = vunpack.c.l.b16 %v2193
      %v2358 = vunpack.c.h.b16 %v2193
      %v2359 = vunpack.c.l.b16 %v2194
      %v2360 = vunpack.c.l.b16 %v2195
      %v2361 = vunpack.c.h.b16 %v2195
      %v2362 = vunpack.c.l.b16 %v2196
      %v2363 = vunpack.c.h.b16 %v2196
      %v2364 = vunpack.c.l.b16 %v2197
      %v2365 = vunpack.c.h.b16 %v2197
      %v2366 = vunpack.c.l.b16 %v2198
      %v2367 = vunpack.c.l.b16 %v2199
      %v2368 = vunpack.c.h.b16 %v2199
      %v2369 = vunpack.c.l.b16 %v2200
      %v2370 = vunpack.c.h.b16 %v2200
      %v2371 = vunpack.c.l.b16 %v2201
      %v2372 = vunpack.c.h.b16 %v2201
      %v2373 = vunpack.c.l.b16 %v2202
      %v2374 = vunpack.c.l.b16 %v2203
      %v2375 = vunpack.c.h.b16 %v2203
      %v2376 = vunpack.c.l.b16 %v2204
      %v2377 = vunpack.c.h.b16 %v2204
      %v2378 = vunpack.c.l.b16 %v2205
      %v2379 = vunpack.c.h.b16 %v2205
      %v2380 = vunpack.c.l.b16 %v2206
      %v2381 = vpack.c.b16 %v2290, %v2283
      %v2382 = vpack.c.b16 %v2291, %v2284
      %v2383 = vpack.c.b16 %v2292, %v2285
      %v2384 = vpack.c.b16 %v2293, %v2286
      %v2385 = vpack.c.b16 %v2294, %v2287
      %v2386 = vpack.c.b16 %v2295, %v2288
      %v2387 = vpack.c.b16 %v2296, %v2289
      %v2388 = vpack.c.b16 %v2304, %v2297
      %v2389 = vpack.c.b16 %v2305, %v2298
      %v2390 = vpack.c.b16 %v2306, %v2299
      %v2391 = vpack.c.b16 %v2307, %v2300
      %v2392 = vpack.c.b16 %v2308, %v2301
      %v2393 = vpack.c.b16 %v2309, %v2302
      %v2394 = vpack.c.b16 %v2310, %v2303
      %v2395 = vpack.c.b16 %v2318, %v2311
      %v2396 = vpack.c.b16 %v2319, %v2312
      %v2397 = vpack.c.b16 %v2320, %v2313
      %v2398 = vpack.c.b16 %v2321, %v2314
      %v2399 = vpack.c.b16 %v2322, %v2315
      %v2400 = vpack.c.b16 %v2323, %v2316
      %v2401 = vpack.c.b16 %v2324, %v2317
      %v2402 = vpack.c.b16 %v2332, %v2325
      %v2403 = vpack.c.b16 %v2333, %v2326
      %v2404 = vpack.c.b16 %v2334, %v2327
      %v2405 = vpack.c.b16 %v2335, %v2328
      %v2406 = vpack.c.b16 %v2336, %v2329
      %v2407 = vpack.c.b16 %v2337, %v2330
      %v2408 = vpack.c.b16 %v2338, %v2331
      %v2409 = vpack.c.b16 %v2346, %v2339
      %v2410 = vpack.c.b16 %v2347, %v2340
      %v2411 = vpack.c.b16 %v2348, %v2341
      %v2412 = vpack.c.b16 %v2349, %v2342
      %v2413 = vpack.c.b16 %v2350, %v2343
      %v2414 = vpack.c.b16 %v2351, %v2344
      %v2415 = vpack.c.b16 %v2352, %v2345
      %v2416 = vpack.c.b16 %v2360, %v2353
      %v2417 = vpack.c.b16 %v2361, %v2354
      %v2418 = vpack.c.b16 %v2362, %v2355
      %v2419 = vpack.c.b16 %v2363, %v2356
      %v2420 = vpack.c.b16 %v2364, %v2357
      %v2421 = vpack.c.b16 %v2365, %v2358
      %v2422 = vpack.c.b16 %v2366, %v2359
      %v2423 = vpack.c.b16 %v2374, %v2367
      %v2424 = vpack.c.b16 %v2375, %v2368
      %v2425 = vpack.c.b16 %v2376, %v2369
      %v2426 = vpack.c.b16 %v2377, %v2370
      %v2427 = vpack.c.b16 %v2378, %v2371
      %v2428 = vpack.c.b16 %v2379, %v2372
      %v2429 = vpack.c.b16 %v2380, %v2373
      %vm2472 = vcmask 883712
      %v2474 = vsel %vm2472, %v2223, 0
      %v2477 = vsel %vm2472, %v2224, 0
      %v2480 = vsel %vm2472, %v2225, 0
      %v2483 = vsel %vm2472, %v2226, 0
      %vm2485 = vcmask 1045504
      %v2487 = vsel %vm2485, %v2423, 0
      %v2490 = vsel %vm2485, %v2424, 0
      %v2493 = vsel %vm2485, %v2425, 0
      %v2496 = vsel %vm2485, %v2426, 0
      %v2499 = vsel %vm2485, %v2427, 0
      %v2502 = vsel %vm2485, %v2428, 0
      %v2505 = vsel %vm2485, %v2429, 0
      %2507 = vmatprep.subr.bf16.mxu0 0
      %2508 = vmatpush1.bf16.msra.mxu0 0
      %2509 = vmatprep.subr.bf16.mxu0 %v2490
      %2510 = vmatpush1.bf16.msra.mxu0 %v2487
      %2511 = vmatprep.subr.bf16.mxu0 %v2417
      %2512 = vmatpush1.bf16.msra.mxu0 %v2416
      %2513 = vmatprep.subr.bf16.mxu0 %v2410
      %2514 = vmatpush1.bf16.msra.mxu0 %v2409
      %2515 = vmatprep.subr.bf16.mxu0 %v2403
      %2516 = vmatpush1.bf16.msra.mxu0 %v2402
      %2517 = vmatprep.subr.bf16.mxu0 %v2396
      %2518 = vmatpush1.bf16.msra.mxu0 %v2395
      %2519 = vmatprep.subr.bf16.mxu0 %v2389
      %2520 = vmatpush1.bf16.msra.mxu0 %v2388
      %2521 = vmatprep.subr.bf16.mxu0 %v2382
      %2522 = vmatpush1.bf16.msra.mxu0 %v2381
      %2523 = vmatprep.subr.bf16.mxu0 0
      %2524 = vmatpush2.bf16.msra.mxu0 0
      %2525 = vmatprep.subr.bf16.mxu0 0
      %2526 = vmatpush2.bf16.msra.mxu0 0
      %2527 = vmatprep.subr.bf16.mxu0 0
      %2528 = vmatpush2.bf16.msra.mxu0 0
      %2529 = vmatprep.subr.bf16.mxu0 0
      %2530 = vmatpush2.bf16.msra.mxu0 0
      %2531 = vmatprep.subr.bf16.mxu0 0
      %2532 = vmatpush2.bf16.msra.mxu0 0
      %2533 = vmatprep.subr.bf16.mxu0 0
      %2534 = vmatpush2.bf16.msra.mxu0 0
      %2535 = vmatprep.subr.bf16.mxu0 0
      %2536 = vmatpush2.bf16.msra.mxu0 0
      %2537 = vmatprep.subr.bf16.mxu0 0
      %2538 = vmatpush2.bf16.msra.mxu0 0
      %2539 = vmatprep.mubr.bf16.mxu0 0
      %2540 = vmatmul.mubr.bf16.gmra.mxu0 %v2474
      %v2541 = vpop.f32.mrf.mxu0
      %v2542 = vadd.f32 0.0, %v2541
      %v2543 = vpop.f32.mrf.mxu0
      %v2544 = vadd.f32 0.0, %v2543
      %v2545 = vpop.f32.mrf.mxu0
      %v2546 = vadd.f32 0.0, %v2545
      %v2547 = vpop.f32.mrf.mxu0
      %v2548 = vadd.f32 0.0, %v2547
      %2549 = vmatprep.mubr.bf16.mxu0 0
      %2550 = vmatmul.mubr.bf16.gmra.mxu0 %v2477
      %v2551 = vpop.f32.mrf.mxu0
      %v2552 = vadd.f32 0.0, %v2551
      %v2553 = vpop.f32.mrf.mxu0
      %v2554 = vadd.f32 0.0, %v2553
      %v2555 = vpop.f32.mrf.mxu0
      %v2556 = vadd.f32 0.0, %v2555
      %v2557 = vpop.f32.mrf.mxu0
      %v2558 = vadd.f32 0.0, %v2557
      %2559 = vmatprep.mubr.bf16.mxu0 0
      %2560 = vmatmul.mubr.bf16.gmra.mxu0 %v2480
      %v2561 = vpop.f32.mrf.mxu0
      %v2562 = vadd.f32 0.0, %v2561
      %v2563 = vpop.f32.mrf.mxu0
      %v2564 = vadd.f32 0.0, %v2563
      %v2565 = vpop.f32.mrf.mxu0
      %v2566 = vadd.f32 0.0, %v2565
      %v2567 = vpop.f32.mrf.mxu0
      %v2568 = vadd.f32 0.0, %v2567
      %2569 = vmatprep.mubr.bf16.mxu0 0
      %2570 = vmatmul.mubr.bf16.gmra.mxu0 %v2483
      %v2571 = vpop.f32.mrf.mxu0
      %v2572 = vadd.f32 0.0, %v2571
      %v2573 = vpop.f32.mrf.mxu0
      %v2574 = vadd.f32 0.0, %v2573
      %v2575 = vpop.f32.mrf.mxu0
      %v2576 = vadd.f32 0.0, %v2575
      %v2577 = vpop.f32.mrf.mxu0
      %v2578 = vadd.f32 0.0, %v2577
      %2579 = vdwg.mxu0
      %2580 = vmatprep.subr.bf16.mxu0 0
      %2581 = vmatpush1.bf16.msra.mxu0 0
      %2582 = vmatprep.subr.bf16.mxu0 %v2496
      %2583 = vmatpush1.bf16.msra.mxu0 %v2493
      %2584 = vmatprep.subr.bf16.mxu0 %v2419
      %2585 = vmatpush1.bf16.msra.mxu0 %v2418
      %2586 = vmatprep.subr.bf16.mxu0 %v2412
      %2587 = vmatpush1.bf16.msra.mxu0 %v2411
      %2588 = vmatprep.subr.bf16.mxu0 %v2405
      %2589 = vmatpush1.bf16.msra.mxu0 %v2404
      %2590 = vmatprep.subr.bf16.mxu0 %v2398
      %2591 = vmatpush1.bf16.msra.mxu0 %v2397
      %2592 = vmatprep.subr.bf16.mxu0 %v2391
      %2593 = vmatpush1.bf16.msra.mxu0 %v2390
      %2594 = vmatprep.subr.bf16.mxu0 %v2384
      %2595 = vmatpush1.bf16.msra.mxu0 %v2383
      %2596 = vmatprep.subr.bf16.mxu0 0
      %2597 = vmatpush2.bf16.msra.mxu0 0
      %2598 = vmatprep.subr.bf16.mxu0 0
      %2599 = vmatpush2.bf16.msra.mxu0 0
      %2600 = vmatprep.subr.bf16.mxu0 0
      %2601 = vmatpush2.bf16.msra.mxu0 0
      %2602 = vmatprep.subr.bf16.mxu0 0
      %2603 = vmatpush2.bf16.msra.mxu0 0
      %2604 = vmatprep.subr.bf16.mxu0 0
      %2605 = vmatpush2.bf16.msra.mxu0 0
      %2606 = vmatprep.subr.bf16.mxu0 0
      %2607 = vmatpush2.bf16.msra.mxu0 0
      %2608 = vmatprep.subr.bf16.mxu0 0
      %2609 = vmatpush2.bf16.msra.mxu0 0
      %2610 = vmatprep.subr.bf16.mxu0 0
      %2611 = vmatpush2.bf16.msra.mxu0 0
      %2612 = vmatprep.mubr.bf16.mxu0 0
      %2613 = vmatmul.mubr.bf16.gmra.mxu0 %v2474
      %v2614 = vpop.f32.mrf.mxu0
      %v2615 = vadd.f32 0.0, %v2614
      %v2616 = vpop.f32.mrf.mxu0
      %v2617 = vadd.f32 0.0, %v2616
      %v2618 = vpop.f32.mrf.mxu0
      %v2619 = vadd.f32 0.0, %v2618
      %v2620 = vpop.f32.mrf.mxu0
      %v2621 = vadd.f32 0.0, %v2620
      %2622 = vmatprep.mubr.bf16.mxu0 0
      %2623 = vmatmul.mubr.bf16.gmra.mxu0 %v2477
      %v2624 = vpop.f32.mrf.mxu0
      %v2625 = vadd.f32 0.0, %v2624
      %v2626 = vpop.f32.mrf.mxu0
      %v2627 = vadd.f32 0.0, %v2626
      %v2628 = vpop.f32.mrf.mxu0
      %v2629 = vadd.f32 0.0, %v2628
      %v2630 = vpop.f32.mrf.mxu0
      %v2631 = vadd.f32 0.0, %v2630
      %2632 = vmatprep.mubr.bf16.mxu0 0
      %2633 = vmatmul.mubr.bf16.gmra.mxu0 %v2480
      %v2634 = vpop.f32.mrf.mxu0
      %v2635 = vadd.f32 0.0, %v2634
      %v2636 = vpop.f32.mrf.mxu0
      %v2637 = vadd.f32 0.0, %v2636
      %v2638 = vpop.f32.mrf.mxu0
      %v2639 = vadd.f32 0.0, %v2638
      %v2640 = vpop.f32.mrf.mxu0
      %v2641 = vadd.f32 0.0, %v2640
      %2642 = vmatprep.mubr.bf16.mxu0 0
      %2643 = vmatmul.mubr.bf16.gmra.mxu0 %v2483
      %v2644 = vpop.f32.mrf.mxu0
      %v2645 = vadd.f32 0.0, %v2644
      %v2646 = vpop.f32.mrf.mxu0
      %v2647 = vadd.f32 0.0, %v2646
      %v2648 = vpop.f32.mrf.mxu0
      %v2649 = vadd.f32 0.0, %v2648
      %v2650 = vpop.f32.mrf.mxu0
      %v2651 = vadd.f32 0.0, %v2650
      %2652 = vdwg.mxu0
      %2653 = vmatprep.subr.bf16.mxu0 0
      %2654 = vmatpush1.bf16.msra.mxu0 0
      %2655 = vmatprep.subr.bf16.mxu0 %v2502
      %2656 = vmatpush1.bf16.msra.mxu0 %v2499
      %2657 = vmatprep.subr.bf16.mxu0 %v2421
      %2658 = vmatpush1.bf16.msra.mxu0 %v2420
      %2659 = vmatprep.subr.bf16.mxu0 %v2414
      %2660 = vmatpush1.bf16.msra.mxu0 %v2413
      %2661 = vmatprep.subr.bf16.mxu0 %v2407
      %2662 = vmatpush1.bf16.msra.mxu0 %v2406
      %2663 = vmatprep.subr.bf16.mxu0 %v2400
      %2664 = vmatpush1.bf16.msra.mxu0 %v2399
      %2665 = vmatprep.subr.bf16.mxu0 %v2393
      %2666 = vmatpush1.bf16.msra.mxu0 %v2392
      %2667 = vmatprep.subr.bf16.mxu0 %v2386
      %2668 = vmatpush1.bf16.msra.mxu0 %v2385
      %2669 = vmatprep.subr.bf16.mxu0 0
      %2670 = vmatpush2.bf16.msra.mxu0 0
      %2671 = vmatprep.subr.bf16.mxu0 0
      %2672 = vmatpush2.bf16.msra.mxu0 0
      %2673 = vmatprep.subr.bf16.mxu0 0
      %2674 = vmatpush2.bf16.msra.mxu0 0
      %2675 = vmatprep.subr.bf16.mxu0 0
      %2676 = vmatpush2.bf16.msra.mxu0 0
      %2677 = vmatprep.subr.bf16.mxu0 0
      %2678 = vmatpush2.bf16.msra.mxu0 0
      %2679 = vmatprep.subr.bf16.mxu0 0
      %2680 = vmatpush2.bf16.msra.mxu0 0
      %2681 = vmatprep.subr.bf16.mxu0 0
      %2682 = vmatpush2.bf16.msra.mxu0 0
      %2683 = vmatprep.subr.bf16.mxu0 0
      %2684 = vmatpush2.bf16.msra.mxu0 0
      %2685 = vmatprep.mubr.bf16.mxu0 0
      %2686 = vmatmul.mubr.bf16.gmra.mxu0 %v2474
      %v2687 = vpop.f32.mrf.mxu0
      %v2688 = vadd.f32 0.0, %v2687
      %v2689 = vpop.f32.mrf.mxu0
      %v2690 = vadd.f32 0.0, %v2689
      %v2691 = vpop.f32.mrf.mxu0
      %v2692 = vadd.f32 0.0, %v2691
      %v2693 = vpop.f32.mrf.mxu0
      %v2694 = vadd.f32 0.0, %v2693
      %2695 = vmatprep.mubr.bf16.mxu0 0
      %2696 = vmatmul.mubr.bf16.gmra.mxu0 %v2477
      %v2697 = vpop.f32.mrf.mxu0
      %v2698 = vadd.f32 0.0, %v2697
      %v2699 = vpop.f32.mrf.mxu0
      %v2700 = vadd.f32 0.0, %v2699
      %v2701 = vpop.f32.mrf.mxu0
      %v2702 = vadd.f32 0.0, %v2701
      %v2703 = vpop.f32.mrf.mxu0
      %v2704 = vadd.f32 0.0, %v2703
      %2705 = vmatprep.mubr.bf16.mxu0 0
      %2706 = vmatmul.mubr.bf16.gmra.mxu0 %v2480
      %v2707 = vpop.f32.mrf.mxu0
      %v2708 = vadd.f32 0.0, %v2707
      %v2709 = vpop.f32.mrf.mxu0
      %v2710 = vadd.f32 0.0, %v2709
      %v2711 = vpop.f32.mrf.mxu0
      %v2712 = vadd.f32 0.0, %v2711
      %v2713 = vpop.f32.mrf.mxu0
      %v2714 = vadd.f32 0.0, %v2713
      %2715 = vmatprep.mubr.bf16.mxu0 0
      %2716 = vmatmul.mubr.bf16.gmra.mxu0 %v2483
      %v2717 = vpop.f32.mrf.mxu0
      %v2718 = vadd.f32 0.0, %v2717
      %v2719 = vpop.f32.mrf.mxu0
      %v2720 = vadd.f32 0.0, %v2719
      %v2721 = vpop.f32.mrf.mxu0
      %v2722 = vadd.f32 0.0, %v2721
      %v2723 = vpop.f32.mrf.mxu0
      %v2724 = vadd.f32 0.0, %v2723
      %2725 = vdwg.mxu0
      %2726 = vmatprep.subr.bf16.mxu0 0
      %2727 = vmatpush1.bf16.msra.mxu0 0
      %2728 = vmatprep.subr.bf16.mxu0 0
      %2729 = vmatpush1.bf16.msra.mxu0 %v2505
      %2730 = vmatprep.subr.bf16.mxu0 0
      %2731 = vmatpush1.bf16.msra.mxu0 %v2422
      %2732 = vmatprep.subr.bf16.mxu0 0
      %2733 = vmatpush1.bf16.msra.mxu0 %v2415
      %2734 = vmatprep.subr.bf16.mxu0 0
      %2735 = vmatpush1.bf16.msra.mxu0 %v2408
      %2736 = vmatprep.subr.bf16.mxu0 0
      %2737 = vmatpush1.bf16.msra.mxu0 %v2401
      %2738 = vmatprep.subr.bf16.mxu0 0
      %2739 = vmatpush1.bf16.msra.mxu0 %v2394
      %2740 = vmatprep.subr.bf16.mxu0 0
      %2741 = vmatpush1.bf16.msra.mxu0 %v2387
      %2742 = vmatprep.subr.bf16.mxu0 0
      %2743 = vmatpush2.bf16.msra.mxu0 0
      %2744 = vmatprep.subr.bf16.mxu0 0
      %2745 = vmatpush2.bf16.msra.mxu0 0
      %2746 = vmatprep.subr.bf16.mxu0 0
      %2747 = vmatpush2.bf16.msra.mxu0 0
      %2748 = vmatprep.subr.bf16.mxu0 0
      %2749 = vmatpush2.bf16.msra.mxu0 0
      %2750 = vmatprep.subr.bf16.mxu0 0
      %2751 = vmatpush2.bf16.msra.mxu0 0
      %2752 = vmatprep.subr.bf16.mxu0 0
      %2753 = vmatpush2.bf16.msra.mxu0 0
      %2754 = vmatprep.subr.bf16.mxu0 0
      %2755 = vmatpush2.bf16.msra.mxu0 0
      %2756 = vmatprep.subr.bf16.mxu0 0
      %2757 = vmatpush2.bf16.msra.mxu0 0
      %2758 = vmatprep.mubr.bf16.mxu0 0
      %2759 = vmatmul.mubr.bf16.gmra.mxu0 %v2474
      %v2760 = vpop.f32.mrf.mxu0
      %v2761 = vadd.f32 0.0, %v2760
      %v2762 = vpop.f32.mrf.mxu0
      %v2763 = vpop.f32.mrf.mxu0
      %v2764 = vadd.f32 0.0, %v2763
      %v2765 = vpop.f32.mrf.mxu0
      %2766 = vmatprep.mubr.bf16.mxu0 0
      %2767 = vmatmul.mubr.bf16.gmra.mxu0 %v2477
      %v2768 = vpop.f32.mrf.mxu0
      %v2769 = vadd.f32 0.0, %v2768
      %v2770 = vpop.f32.mrf.mxu0
      %v2771 = vpop.f32.mrf.mxu0
      %v2772 = vadd.f32 0.0, %v2771
      %v2773 = vpop.f32.mrf.mxu0
      %2774 = vmatprep.mubr.bf16.mxu0 0
      %2775 = vmatmul.mubr.bf16.gmra.mxu0 %v2480
      %v2776 = vpop.f32.mrf.mxu0
      %v2777 = vadd.f32 0.0, %v2776
      %v2778 = vpop.f32.mrf.mxu0
      %v2779 = vpop.f32.mrf.mxu0
      %v2780 = vadd.f32 0.0, %v2779
      %v2781 = vpop.f32.mrf.mxu0
      %2782 = vmatprep.mubr.bf16.mxu0 0
      %2783 = vmatmul.mubr.bf16.gmra.mxu0 %v2483
      %v2784 = vpop.f32.mrf.mxu0
      %v2785 = vadd.f32 0.0, %v2784
      %v2786 = vpop.f32.mrf.mxu0
      %v2787 = vpop.f32.mrf.mxu0
      %v2788 = vadd.f32 0.0, %v2787
      %v2789 = vpop.f32.mrf.mxu0
      %2790 = vdwg.mxu0
      %v2791 = vld [vmem:[%s2] sm:$0xff]
      %v2792 = vld [vmem:[%s2 + $0x8] sm:$0xff]
      %v2793 = vld [vmem:[%s2 + $0x10] sm:$0xff]
      %v2794 = vld [vmem:[%s2 + $0x18] sm:$0xff]
      %v2795 = vld [vmem:[%s2 + $0x20] sm:$0xff]
      %v2796 = vld [vmem:[%s2 + $0x28] sm:$0xff]
      %v2797 = vld [vmem:[%s2 + $0x30] sm:$0xff]
      %v2798 = vld [vmem:[%s2 + $0x38] sm:$0xff]
      %v2799 = vld [vmem:[%s2 + $0x40] sm:$0xff]
      %v2800 = vld [vmem:[%s2 + $0x48] sm:$0xff]
      %v2801 = vld [vmem:[%s2 + $0x50] sm:$0xff]
      %v2802 = vld [vmem:[%s2 + $0x58] sm:$0xff]
      %v2803 = vld [vmem:[%s2 + $0x60] sm:$0xff]
      %v2804 = vld [vmem:[%s2 + $0x68] sm:$0xff]
      %v2805 = vld [vmem:[%s2 + $0x70] sm:$0xff]
      %v2806 = vld [vmem:[%s2 + $0x78] sm:$0xff]
      %v2807 = vld [vmem:[%s2 + $0x80] sm:$0xff]
      %v2808 = vld [vmem:[%s2 + $0x88] sm:$0xff]
      %v2809 = vld [vmem:[%s2 + $0x90] sm:$0xff]
      %v2810 = vld [vmem:[%s2 + $0x98] sm:$0xff]
      %v2811 = vld [vmem:[%s2 + $0xa0] sm:$0xff]
      %v2812 = vld [vmem:[%s2 + $0xa8] sm:$0xff]
      %v2813 = vld [vmem:[%s2 + $0xb0] sm:$0xff]
      %v2814 = vld [vmem:[%s2 + $0xb8] sm:$0xff]
      %v2815 = vld [vmem:[%s2 + $0xc0] sm:$0xff]
      %v2816 = vld [vmem:[%s2 + $0xc8] sm:$0xff]
      %v2817 = vld [vmem:[%s2 + $0xd0] sm:$0xff]
      %v2818 = vld [vmem:[%s2 + $0xd8] sm:$0xff]
      %v2819 = vld [vmem:[%s2 + $0xe0] sm:$0xff]
      %v2820 = vld [vmem:[%s2 + $0xe8] sm:$0xff]
      %v2821 = vld [vmem:[%s2 + $0xf0] sm:$0xff]
      %v2822 = vld [vmem:[%s2 + $0xf8] sm:$0xff]
      %v2823 = vld [vmem:[%s2 + $0x100] sm:$0xff]
      %v2824 = vld [vmem:[%s2 + $0x108] sm:$0xff]
      %v2825 = vld [vmem:[%s2 + $0x110] sm:$0xff]
      %v2826 = vld [vmem:[%s2 + $0x118] sm:$0xff]
      %v2827 = vld [vmem:[%s2 + $0x120] sm:$0xff]
      %v2828 = vld [vmem:[%s2 + $0x128] sm:$0xff]
      %v2829 = vld [vmem:[%s2 + $0x130] sm:$0xff]
      %v2830 = vld [vmem:[%s2 + $0x138] sm:$0xff]
      %v2831 = vld [vmem:[%s2 + $0x140] sm:$0xff]
      %v2832 = vld [vmem:[%s2 + $0x148] sm:$0xff]
      %v2833 = vld [vmem:[%s2 + $0x150] sm:$0xff]
      %v2834 = vld [vmem:[%s2 + $0x158] sm:$0xff]
      %v2835 = vld [vmem:[%s2 + $0x160] sm:$0xff]
      %v2836 = vld [vmem:[%s2 + $0x168] sm:$0xff]
      %v2837 = vld [vmem:[%s2 + $0x170] sm:$0xff]
      %v2838 = vld [vmem:[%s2 + $0x178] sm:$0xff]
      %v2839 = vld [vmem:[%s2 + $0x180] sm:$0xff]
      %v2840 = vld [vmem:[%s2 + $0x188] sm:$0xff]
      %v2841 = vld [vmem:[%s2 + $0x190] sm:$0xff]
      %v2842 = vld [vmem:[%s2 + $0x198] sm:$0xff]
      %v2843 = vld [vmem:[%s2 + $0x1a0] sm:$0xff]
      %v2844 = vld [vmem:[%s2 + $0x1a8] sm:$0xff]
      %v2845 = vld [vmem:[%s2 + $0x1b0] sm:$0xff]
      %v2846 = vld [vmem:[%s2 + $0x1b8] sm:$0xff]
      %v2847 = vmul.f32 %v2542, %v2791
      %v2848 = vmul.f32 %v2544, %v2792
      %v2849 = vmul.f32 %v2615, %v2793
      %v2850 = vmul.f32 %v2617, %v2794
      %v2851 = vmul.f32 %v2688, %v2795
      %v2852 = vmul.f32 %v2690, %v2796
      %v2853 = vmul.f32 %v2761, %v2797
      %v2854 = vmul.f32 %v2546, %v2798
      %v2855 = vmul.f32 %v2548, %v2799
      %v2856 = vmul.f32 %v2619, %v2800
      %v2857 = vmul.f32 %v2621, %v2801
      %v2858 = vmul.f32 %v2692, %v2802
      %v2859 = vmul.f32 %v2694, %v2803
      %v2860 = vmul.f32 %v2764, %v2804
      %v2861 = vmul.f32 %v2552, %v2805
      %v2862 = vmul.f32 %v2554, %v2806
      %v2863 = vmul.f32 %v2625, %v2807
      %v2864 = vmul.f32 %v2627, %v2808
      %v2865 = vmul.f32 %v2698, %v2809
      %v2866 = vmul.f32 %v2700, %v2810
      %v2867 = vmul.f32 %v2769, %v2811
      %v2868 = vmul.f32 %v2556, %v2812
      %v2869 = vmul.f32 %v2558, %v2813
      %v2870 = vmul.f32 %v2629, %v2814
      %v2871 = vmul.f32 %v2631, %v2815
      %v2872 = vmul.f32 %v2702, %v2816
      %v2873 = vmul.f32 %v2704, %v2817
      %v2874 = vmul.f32 %v2772, %v2818
      %v2875 = vmul.f32 %v2562, %v2819
      %v2876 = vmul.f32 %v2564, %v2820
      %v2877 = vmul.f32 %v2635, %v2821
      %v2878 = vmul.f32 %v2637, %v2822
      %v2879 = vmul.f32 %v2708, %v2823
      %v2880 = vmul.f32 %v2710, %v2824
      %v2881 = vmul.f32 %v2777, %v2825
      %v2882 = vmul.f32 %v2566, %v2826
      %v2883 = vmul.f32 %v2568, %v2827
      %v2884 = vmul.f32 %v2639, %v2828
      %v2885 = vmul.f32 %v2641, %v2829
      %v2886 = vmul.f32 %v2712, %v2830
      %v2887 = vmul.f32 %v2714, %v2831
      %v2888 = vmul.f32 %v2780, %v2832
      %v2889 = vmul.f32 %v2572, %v2833
      %v2890 = vmul.f32 %v2574, %v2834
      %v2891 = vmul.f32 %v2645, %v2835
      %v2892 = vmul.f32 %v2647, %v2836
      %v2893 = vmul.f32 %v2718, %v2837
      %v2894 = vmul.f32 %v2720, %v2838
      %v2895 = vmul.f32 %v2785, %v2839
      %v2896 = vmul.f32 %v2576, %v2840
      %v2897 = vmul.f32 %v2578, %v2841
      %v2898 = vmul.f32 %v2649, %v2842
      %v2899 = vmul.f32 %v2651, %v2843
      %v2900 = vmul.f32 %v2722, %v2844
      %v2901 = vmul.f32 %v2724, %v2845
      %v2902 = vmul.f32 %v2788, %v2846
      %v2903 = vadd.f32 %v2847, %v2848
      %v2904 = vadd.f32 %v2903, %v2849
      %v2905 = vadd.f32 %v2904, %v2850
      %v2906 = vadd.f32 %v2905, %v2851
      %v2907 = vadd.f32 %v2906, %v2852
      %v2908 = vadd.f32 %v2907, %v2853
      %2909 = vadd.xlane.f32.xlu0 %v2908
      %v2910 = vpop.xlane.xlu0 %2909
      %v2911 = vadd.f32 %v2854, %v2855
      %v2912 = vadd.f32 %v2911, %v2856
      %v2913 = vadd.f32 %v2912, %v2857
      %v2914 = vadd.f32 %v2913, %v2858
      %v2915 = vadd.f32 %v2914, %v2859
      %v2916 = vadd.f32 %v2915, %v2860
      %2917 = vadd.xlane.f32.xlu0 %v2916
      %v2918 = vpop.xlane.xlu0 %2917
      %v2919 = vadd.f32 %v2861, %v2862
      %v2920 = vadd.f32 %v2919, %v2863
      %v2921 = vadd.f32 %v2920, %v2864
      %v2922 = vadd.f32 %v2921, %v2865
      %v2923 = vadd.f32 %v2922, %v2866
      %v2924 = vadd.f32 %v2923, %v2867
      %2925 = vadd.xlane.f32.xlu0 %v2924
      %v2926 = vpop.xlane.xlu0 %2925
      %v2927 = vadd.f32 %v2868, %v2869
      %v2928 = vadd.f32 %v2927, %v2870
      %v2929 = vadd.f32 %v2928, %v2871
      %v2930 = vadd.f32 %v2929, %v2872
      %v2931 = vadd.f32 %v2930, %v2873
      %v2932 = vadd.f32 %v2931, %v2874
      %2933 = vadd.xlane.f32.xlu0 %v2932
      %v2934 = vpop.xlane.xlu0 %2933
      %v2935 = vadd.f32 %v2875, %v2876
      %v2936 = vadd.f32 %v2935, %v2877
      %v2937 = vadd.f32 %v2936, %v2878
      %v2938 = vadd.f32 %v2937, %v2879
      %v2939 = vadd.f32 %v2938, %v2880
      %v2940 = vadd.f32 %v2939, %v2881
      %2941 = vadd.xlane.f32.xlu0 %v2940
      %v2942 = vpop.xlane.xlu0 %2941
      %v2943 = vadd.f32 %v2882, %v2883
      %v2944 = vadd.f32 %v2943, %v2884
      %v2945 = vadd.f32 %v2944, %v2885
      %v2946 = vadd.f32 %v2945, %v2886
      %v2947 = vadd.f32 %v2946, %v2887
      %v2948 = vadd.f32 %v2947, %v2888
      %2949 = vadd.xlane.f32.xlu0 %v2948
      %v2950 = vpop.xlane.xlu0 %2949
      %v2951 = vadd.f32 %v2889, %v2890
      %v2952 = vadd.f32 %v2951, %v2891
      %v2953 = vadd.f32 %v2952, %v2892
      %v2954 = vadd.f32 %v2953, %v2893
      %v2955 = vadd.f32 %v2954, %v2894
      %v2956 = vadd.f32 %v2955, %v2895
      %2957 = vadd.xlane.f32.xlu0 %v2956
      %v2958 = vpop.xlane.xlu0 %2957
      %v2959 = vadd.f32 %v2896, %v2897
      %v2960 = vadd.f32 %v2959, %v2898
      %v2961 = vadd.f32 %v2960, %v2899
      %v2962 = vadd.f32 %v2961, %v2900
      %v2963 = vadd.f32 %v2962, %v2901
      %v2964 = vadd.f32 %v2963, %v2902
      %2965 = vadd.xlane.f32.xlu0 %v2964
      %v2966 = vpop.xlane.xlu0 %2965
      %v2967 = vmul.f32 %v2847, %v2542
      %v2968 = vmul.f32 %v2848, %v2544
      %v2969 = vmul.f32 %v2849, %v2615
      %v2970 = vmul.f32 %v2850, %v2617
      %v2971 = vmul.f32 %v2851, %v2688
      %v2972 = vmul.f32 %v2852, %v2690
      %v2973 = vmul.f32 %v2853, %v2761
      %v2974 = vmul.f32 %v2854, %v2546
      %v2975 = vmul.f32 %v2855, %v2548
      %v2976 = vmul.f32 %v2856, %v2619
      %v2977 = vmul.f32 %v2857, %v2621
      %v2978 = vmul.f32 %v2858, %v2692
      %v2979 = vmul.f32 %v2859, %v2694
      %v2980 = vmul.f32 %v2860, %v2764
      %v2981 = vmul.f32 %v2861, %v2552
      %v2982 = vmul.f32 %v2862, %v2554
      %v2983 = vmul.f32 %v2863, %v2625
      %v2984 = vmul.f32 %v2864, %v2627
      %v2985 = vmul.f32 %v2865, %v2698
      %v2986 = vmul.f32 %v2866, %v2700
      %v2987 = vmul.f32 %v2867, %v2769
      %v2988 = vmul.f32 %v2868, %v2556
      %v2989 = vmul.f32 %v2869, %v2558
      %v2990 = vmul.f32 %v2870, %v2629
      %v2991 = vmul.f32 %v2871, %v2631
      %v2992 = vmul.f32 %v2872, %v2702
      %v2993 = vmul.f32 %v2873, %v2704
      %v2994 = vmul.f32 %v2874, %v2772
      %v2995 = vmul.f32 %v2875, %v2562
      %v2996 = vmul.f32 %v2876, %v2564
      %v2997 = vmul.f32 %v2877, %v2635
      %v2998 = vmul.f32 %v2878, %v2637
      %v2999 = vmul.f32 %v2879, %v2708
      %v3000 = vmul.f32 %v2880, %v2710
      %v3001 = vmul.f32 %v2881, %v2777
      %v3002 = vmul.f32 %v2882, %v2566
      %v3003 = vmul.f32 %v2883, %v2568
      %v3004 = vmul.f32 %v2884, %v2639
      %v3005 = vmul.f32 %v2885, %v2641
      %v3006 = vmul.f32 %v2886, %v2712
      %v3007 = vmul.f32 %v2887, %v2714
      %v3008 = vmul.f32 %v2888, %v2780
      %v3009 = vmul.f32 %v2889, %v2572
      %v3010 = vmul.f32 %v2890, %v2574
      %v3011 = vmul.f32 %v2891, %v2645
      %v3012 = vmul.f32 %v2892, %v2647
      %v3013 = vmul.f32 %v2893, %v2718
      %v3014 = vmul.f32 %v2894, %v2720
      %v3015 = vmul.f32 %v2895, %v2785
      %v3016 = vmul.f32 %v2896, %v2576
      %v3017 = vmul.f32 %v2897, %v2578
      %v3018 = vmul.f32 %v2898, %v2649
      %v3019 = vmul.f32 %v2899, %v2651
      %v3020 = vmul.f32 %v2900, %v2722
      %v3021 = vmul.f32 %v2901, %v2724
      %v3022 = vmul.f32 %v2902, %v2788
      %v3023 = vadd.f32 %v2967, %v2968
      %v3024 = vadd.f32 %v3023, %v2969
      %v3025 = vadd.f32 %v3024, %v2970
      %v3026 = vadd.f32 %v3025, %v2971
      %v3027 = vadd.f32 %v3026, %v2972
      %v3028 = vadd.f32 %v3027, %v2973
      %3029 = vadd.xlane.f32.xlu0 %v3028
      %v3030 = vpop.xlane.xlu0 %3029
      %v3031 = vadd.f32 %v2974, %v2975
      %v3032 = vadd.f32 %v3031, %v2976
      %v3033 = vadd.f32 %v3032, %v2977
      %v3034 = vadd.f32 %v3033, %v2978
      %v3035 = vadd.f32 %v3034, %v2979
      %v3036 = vadd.f32 %v3035, %v2980
      %3037 = vadd.xlane.f32.xlu0 %v3036
      %v3038 = vpop.xlane.xlu0 %3037
      %v3039 = vadd.f32 %v2981, %v2982
      %v3040 = vadd.f32 %v3039, %v2983
      %v3041 = vadd.f32 %v3040, %v2984
      %v3042 = vadd.f32 %v3041, %v2985
      %v3043 = vadd.f32 %v3042, %v2986
      %v3044 = vadd.f32 %v3043, %v2987
      %3045 = vadd.xlane.f32.xlu0 %v3044
      %v3046 = vpop.xlane.xlu0 %3045
      %v3047 = vadd.f32 %v2988, %v2989
      %v3048 = vadd.f32 %v3047, %v2990
      %v3049 = vadd.f32 %v3048, %v2991
      %v3050 = vadd.f32 %v3049, %v2992
      %v3051 = vadd.f32 %v3050, %v2993
      %v3052 = vadd.f32 %v3051, %v2994
      %3053 = vadd.xlane.f32.xlu0 %v3052
      %v3054 = vpop.xlane.xlu0 %3053
      %v3055 = vadd.f32 %v2995, %v2996
      %v3056 = vadd.f32 %v3055, %v2997
      %v3057 = vadd.f32 %v3056, %v2998
      %v3058 = vadd.f32 %v3057, %v2999
      %v3059 = vadd.f32 %v3058, %v3000
      %v3060 = vadd.f32 %v3059, %v3001
      %3061 = vadd.xlane.f32.xlu0 %v3060
      %v3062 = vpop.xlane.xlu0 %3061
      %v3063 = vadd.f32 %v3002, %v3003
      %v3064 = vadd.f32 %v3063, %v3004
      %v3065 = vadd.f32 %v3064, %v3005
      %v3066 = vadd.f32 %v3065, %v3006
      %v3067 = vadd.f32 %v3066, %v3007
      %v3068 = vadd.f32 %v3067, %v3008
      %3069 = vadd.xlane.f32.xlu0 %v3068
      %v3070 = vpop.xlane.xlu0 %3069
      %v3071 = vadd.f32 %v3009, %v3010
      %v3072 = vadd.f32 %v3071, %v3011
      %v3073 = vadd.f32 %v3072, %v3012
      %v3074 = vadd.f32 %v3073, %v3013
      %v3075 = vadd.f32 %v3074, %v3014
      %v3076 = vadd.f32 %v3075, %v3015
      %3077 = vadd.xlane.f32.xlu0 %v3076
      %v3078 = vpop.xlane.xlu0 %3077
      %v3079 = vadd.f32 %v3016, %v3017
      %v3080 = vadd.f32 %v3079, %v3018
      %v3081 = vadd.f32 %v3080, %v3019
      %v3082 = vadd.f32 %v3081, %v3020
      %v3083 = vadd.f32 %v3082, %v3021
      %v3084 = vadd.f32 %v3083, %v3022
      %3085 = vadd.xlane.f32.xlu0 %v3084
      %v3086 = vpop.xlane.xlu0 %3085
      %v3087 = vadd.f32 %v2910, %v2918
      %v3088 = vadd.f32 %v3030, %v3038
      %v3089 = vadd.f32 %v3087, %v2926
      %v3090 = vadd.f32 %v3088, %v3046
      %v3091 = vadd.f32 %v3089, %v2934
      %v3092 = vadd.f32 %v3090, %v3054
      %v3093 = vadd.f32 %v3091, %v2942
      %v3094 = vadd.f32 %v3092, %v3062
      %v3095 = vadd.f32 %v3093, %v2950
      %v3096 = vadd.f32 %v3094, %v3070
      %v3097 = vadd.f32 %v3095, %v2958
      %v3098 = vadd.f32 %v3096, %v3078
      %v3099 = vadd.f32 %v3097, %v2966
      %v3100 = vadd.f32 %v3098, %v3086
      %v3101 = vmul.f32 %v3099, 0.0002962963
      %v3102 = vmul.f32 %v3100, 0.0002962963
      %v3103 = vmul.f32 %v3101, %v3101
      %v3104 = vsub.f32 %v3102, %v3103
      %v3105 = vadd.f32 %v3104, 1e-05
      %v3106 = vrsqrt.pop %v3105
      %v3107 = vsub.f32 %v2542, %v3101
      %v3108 = vsub.f32 %v2544, %v3101
      %v3109 = vsub.f32 %v2615, %v3101
      %v3110 = vsub.f32 %v2617, %v3101
      %v3111 = vsub.f32 %v2688, %v3101
      %v3112 = vsub.f32 %v2690, %v3101
      %v3113 = vsub.f32 %v2761, %v3101
      %v3114 = vmul.f32 %v3107, %v3106
      %v3115 = vmul.f32 %v3108, %v3106
      %v3116 = vmul.f32 %v3109, %v3106
      %v3117 = vmul.f32 %v3110, %v3106
      %v3118 = vmul.f32 %v3111, %v3106
      %v3119 = vmul.f32 %v3112, %v3106
      %v3120 = vmul.f32 %v3113, %v3106
      %v3121 = vmax.f32 %v3114, 0.0
      %v3122 = vmax.f32 %v3115, 0.0
      %v3123 = vmax.f32 %v3116, 0.0
      %v3124 = vmax.f32 %v3117, 0.0
      %v3125 = vmax.f32 %v3118, 0.0
      %v3126 = vmax.f32 %v3119, 0.0
      %v3127 = vmax.f32 %v3120, 0.0
      %3128 = vst [vmem:[%s170] sm:$0xff] %v3121
      %3129 = vst [vmem:[%s170 + $0x8] sm:$0xff] %v3122
      %3130 = vst [vmem:[%s170 + $0x10] sm:$0xff] %v3123
      %3131 = vst [vmem:[%s170 + $0x18] sm:$0xff] %v3124
      %3132 = vst [vmem:[%s170 + $0x20] sm:$0xff] %v3125
      %3133 = vst [vmem:[%s170 + $0x28] sm:$0xff] %v3126
      %3134 = vst [vmem:[%s170 + $0x30] sm:$0xff] %v3127
      %v3135 = vsub.f32 %v2546, %v3101
      %v3136 = vsub.f32 %v2548, %v3101
      %v3137 = vsub.f32 %v2619, %v3101
      %v3138 = vsub.f32 %v2621, %v3101
      %v3139 = vsub.f32 %v2692, %v3101
      %v3140 = vsub.f32 %v2694, %v3101
      %v3141 = vsub.f32 %v2764, %v3101
      %v3142 = vmul.f32 %v3135, %v3106
      %v3143 = vmul.f32 %v3136, %v3106
      %v3144 = vmul.f32 %v3137, %v3106
      %v3145 = vmul.f32 %v3138, %v3106
      %v3146 = vmul.f32 %v3139, %v3106
      %v3147 = vmul.f32 %v3140, %v3106
      %v3148 = vmul.f32 %v3141, %v3106
      %v3149 = vmax.f32 %v3142, 0.0
      %v3150 = vmax.f32 %v3143, 0.0
      %v3151 = vmax.f32 %v3144, 0.0
      %v3152 = vmax.f32 %v3145, 0.0
      %v3153 = vmax.f32 %v3146, 0.0
      %v3154 = vmax.f32 %v3147, 0.0
      %v3155 = vmax.f32 %v3148, 0.0
      %3156 = vst [vmem:[%s170 + $0x38] sm:$0xff] %v3149
      %3157 = vst [vmem:[%s170 + $0x40] sm:$0xff] %v3150
      %3158 = vst [vmem:[%s170 + $0x48] sm:$0xff] %v3151
      %3159 = vst [vmem:[%s170 + $0x50] sm:$0xff] %v3152
      %3160 = vst [vmem:[%s170 + $0x58] sm:$0xff] %v3153
      %3161 = vst [vmem:[%s170 + $0x60] sm:$0xff] %v3154
      %3162 = vst [vmem:[%s170 + $0x68] sm:$0xff] %v3155
      %v3163 = vsub.f32 %v2552, %v3101
      %v3164 = vsub.f32 %v2554, %v3101
      %v3165 = vsub.f32 %v2625, %v3101
      %v3166 = vsub.f32 %v2627, %v3101
      %v3167 = vsub.f32 %v2698, %v3101
      %v3168 = vsub.f32 %v2700, %v3101
      %v3169 = vsub.f32 %v2769, %v3101
      %v3170 = vmul.f32 %v3163, %v3106
      %v3171 = vmul.f32 %v3164, %v3106
      %v3172 = vmul.f32 %v3165, %v3106
      %v3173 = vmul.f32 %v3166, %v3106
      %v3174 = vmul.f32 %v3167, %v3106
      %v3175 = vmul.f32 %v3168, %v3106
      %v3176 = vmul.f32 %v3169, %v3106
      %v3177 = vmax.f32 %v3170, 0.0
      %v3178 = vmax.f32 %v3171, 0.0
      %v3179 = vmax.f32 %v3172, 0.0
      %v3180 = vmax.f32 %v3173, 0.0
      %v3181 = vmax.f32 %v3174, 0.0
      %v3182 = vmax.f32 %v3175, 0.0
      %v3183 = vmax.f32 %v3176, 0.0
      %3184 = vst [vmem:[%s170 + $0x70] sm:$0xff] %v3177
      %3185 = vst [vmem:[%s170 + $0x78] sm:$0xff] %v3178
      %3186 = vst [vmem:[%s170 + $0x80] sm:$0xff] %v3179
      %3187 = vst [vmem:[%s170 + $0x88] sm:$0xff] %v3180
      %3188 = vst [vmem:[%s170 + $0x90] sm:$0xff] %v3181
      %3189 = vst [vmem:[%s170 + $0x98] sm:$0xff] %v3182
      %3190 = vst [vmem:[%s170 + $0xa0] sm:$0xff] %v3183
      %v3191 = vsub.f32 %v2556, %v3101
      %v3192 = vsub.f32 %v2558, %v3101
      %v3193 = vsub.f32 %v2629, %v3101
      %v3194 = vsub.f32 %v2631, %v3101
      %v3195 = vsub.f32 %v2702, %v3101
      %v3196 = vsub.f32 %v2704, %v3101
      %v3197 = vsub.f32 %v2772, %v3101
      %v3198 = vmul.f32 %v3191, %v3106
      %v3199 = vmul.f32 %v3192, %v3106
      %v3200 = vmul.f32 %v3193, %v3106
      %v3201 = vmul.f32 %v3194, %v3106
      %v3202 = vmul.f32 %v3195, %v3106
      %v3203 = vmul.f32 %v3196, %v3106
      %v3204 = vmul.f32 %v3197, %v3106
      %v3205 = vmax.f32 %v3198, 0.0
      %v3206 = vmax.f32 %v3199, 0.0
      %v3207 = vmax.f32 %v3200, 0.0
      %v3208 = vmax.f32 %v3201, 0.0
      %v3209 = vmax.f32 %v3202, 0.0
      %v3210 = vmax.f32 %v3203, 0.0
      %v3211 = vmax.f32 %v3204, 0.0
      %3212 = vst [vmem:[%s170 + $0xa8] sm:$0xff] %v3205
      %3213 = vst [vmem:[%s170 + $0xb0] sm:$0xff] %v3206
      %3214 = vst [vmem:[%s170 + $0xb8] sm:$0xff] %v3207
      %3215 = vst [vmem:[%s170 + $0xc0] sm:$0xff] %v3208
      %3216 = vst [vmem:[%s170 + $0xc8] sm:$0xff] %v3209
      %3217 = vst [vmem:[%s170 + $0xd0] sm:$0xff] %v3210
      %3218 = vst [vmem:[%s170 + $0xd8] sm:$0xff] %v3211
      %v3219 = vsub.f32 %v2562, %v3101
      %v3220 = vsub.f32 %v2564, %v3101
      %v3221 = vsub.f32 %v2635, %v3101
      %v3222 = vsub.f32 %v2637, %v3101
      %v3223 = vsub.f32 %v2708, %v3101
      %v3224 = vsub.f32 %v2710, %v3101
      %v3225 = vsub.f32 %v2777, %v3101
      %v3226 = vmul.f32 %v3219, %v3106
      %v3227 = vmul.f32 %v3220, %v3106
      %v3228 = vmul.f32 %v3221, %v3106
      %v3229 = vmul.f32 %v3222, %v3106
      %v3230 = vmul.f32 %v3223, %v3106
      %v3231 = vmul.f32 %v3224, %v3106
      %v3232 = vmul.f32 %v3225, %v3106
      %v3233 = vmax.f32 %v3226, 0.0
      %v3234 = vmax.f32 %v3227, 0.0
      %v3235 = vmax.f32 %v3228, 0.0
      %v3236 = vmax.f32 %v3229, 0.0
      %v3237 = vmax.f32 %v3230, 0.0
      %v3238 = vmax.f32 %v3231, 0.0
      %v3239 = vmax.f32 %v3232, 0.0
      %3240 = vst [vmem:[%s170 + $0xe0] sm:$0xff] %v3233
      %3241 = vst [vmem:[%s170 + $0xe8] sm:$0xff] %v3234
      %3242 = vst [vmem:[%s170 + $0xf0] sm:$0xff] %v3235
      %3243 = vst [vmem:[%s170 + $0xf8] sm:$0xff] %v3236
      %3244 = vst [vmem:[%s170 + $0x100] sm:$0xff] %v3237
      %3245 = vst [vmem:[%s170 + $0x108] sm:$0xff] %v3238
      %3246 = vst [vmem:[%s170 + $0x110] sm:$0xff] %v3239
      %v3247 = vsub.f32 %v2566, %v3101
      %v3248 = vsub.f32 %v2568, %v3101
      %v3249 = vsub.f32 %v2639, %v3101
      %v3250 = vsub.f32 %v2641, %v3101
      %v3251 = vsub.f32 %v2712, %v3101
      %v3252 = vsub.f32 %v2714, %v3101
      %v3253 = vsub.f32 %v2780, %v3101
      %v3254 = vmul.f32 %v3247, %v3106
      %v3255 = vmul.f32 %v3248, %v3106
      %v3256 = vmul.f32 %v3249, %v3106
      %v3257 = vmul.f32 %v3250, %v3106
      %v3258 = vmul.f32 %v3251, %v3106
      %v3259 = vmul.f32 %v3252, %v3106
      %v3260 = vmul.f32 %v3253, %v3106
      %v3261 = vmax.f32 %v3254, 0.0
      %v3262 = vmax.f32 %v3255, 0.0
      %v3263 = vmax.f32 %v3256, 0.0
      %v3264 = vmax.f32 %v3257, 0.0
      %v3265 = vmax.f32 %v3258, 0.0
      %v3266 = vmax.f32 %v3259, 0.0
      %v3267 = vmax.f32 %v3260, 0.0
      %3268 = vst [vmem:[%s170 + $0x118] sm:$0xff] %v3261
      %3269 = vst [vmem:[%s170 + $0x120] sm:$0xff] %v3262
      %3270 = vst [vmem:[%s170 + $0x128] sm:$0xff] %v3263
      %3271 = vst [vmem:[%s170 + $0x130] sm:$0xff] %v3264
      %3272 = vst [vmem:[%s170 + $0x138] sm:$0xff] %v3265
      %3273 = vst [vmem:[%s170 + $0x140] sm:$0xff] %v3266
      %3274 = vst [vmem:[%s170 + $0x148] sm:$0xff] %v3267
      %v3275 = vsub.f32 %v2572, %v3101
      %v3276 = vsub.f32 %v2574, %v3101
      %v3277 = vsub.f32 %v2645, %v3101
      %v3278 = vsub.f32 %v2647, %v3101
      %v3279 = vsub.f32 %v2718, %v3101
      %v3280 = vsub.f32 %v2720, %v3101
      %v3281 = vsub.f32 %v2785, %v3101
      %v3282 = vmul.f32 %v3275, %v3106
      %v3283 = vmul.f32 %v3276, %v3106
      %v3284 = vmul.f32 %v3277, %v3106
      %v3285 = vmul.f32 %v3278, %v3106
      %v3286 = vmul.f32 %v3279, %v3106
      %v3287 = vmul.f32 %v3280, %v3106
      %v3288 = vmul.f32 %v3281, %v3106
      %v3289 = vmax.f32 %v3282, 0.0
      %v3290 = vmax.f32 %v3283, 0.0
      %v3291 = vmax.f32 %v3284, 0.0
      %v3292 = vmax.f32 %v3285, 0.0
      %v3293 = vmax.f32 %v3286, 0.0
      %v3294 = vmax.f32 %v3287, 0.0
      %v3295 = vmax.f32 %v3288, 0.0
      %3296 = vst [vmem:[%s170 + $0x150] sm:$0xff] %v3289
      %3297 = vst [vmem:[%s170 + $0x158] sm:$0xff] %v3290
      %3298 = vst [vmem:[%s170 + $0x160] sm:$0xff] %v3291
      %3299 = vst [vmem:[%s170 + $0x168] sm:$0xff] %v3292
      %3300 = vst [vmem:[%s170 + $0x170] sm:$0xff] %v3293
      %3301 = vst [vmem:[%s170 + $0x178] sm:$0xff] %v3294
      %3302 = vst [vmem:[%s170 + $0x180] sm:$0xff] %v3295
      %v3303 = vsub.f32 %v2576, %v3101
      %v3304 = vsub.f32 %v2578, %v3101
      %v3305 = vsub.f32 %v2649, %v3101
      %v3306 = vsub.f32 %v2651, %v3101
      %v3307 = vsub.f32 %v2722, %v3101
      %v3308 = vsub.f32 %v2724, %v3101
      %v3309 = vsub.f32 %v2788, %v3101
      %v3310 = vmul.f32 %v3303, %v3106
      %v3311 = vmul.f32 %v3304, %v3106
      %v3312 = vmul.f32 %v3305, %v3106
      %v3313 = vmul.f32 %v3306, %v3106
      %v3314 = vmul.f32 %v3307, %v3106
      %v3315 = vmul.f32 %v3308, %v3106
      %v3316 = vmul.f32 %v3309, %v3106
      %v3317 = vmax.f32 %v3310, 0.0
      %v3318 = vmax.f32 %v3311, 0.0
      %v3319 = vmax.f32 %v3312, 0.0
      %v3320 = vmax.f32 %v3313, 0.0
      %v3321 = vmax.f32 %v3314, 0.0
      %v3322 = vmax.f32 %v3315, 0.0
      %v3323 = vmax.f32 %v3316, 0.0
      %3324 = vst [vmem:[%s170 + $0x188] sm:$0xff] %v3317
      %3325 = vst [vmem:[%s170 + $0x190] sm:$0xff] %v3318
      %3326 = vst [vmem:[%s170 + $0x198] sm:$0xff] %v3319
      %3327 = vst [vmem:[%s170 + $0x1a0] sm:$0xff] %v3320
      %3328 = vst [vmem:[%s170 + $0x1a8] sm:$0xff] %v3321
      %3329 = vst [vmem:[%s170 + $0x1b0] sm:$0xff] %v3322
      %3330 = vst [vmem:[%s170 + $0x1b8] sm:$0xff] %v3323
      %p3331 = scmp.lt.s32.totalorder %s14, 1
      %s3332 = scalar_select %p3331, %s14, 1
      %s3333 = smul.addr %s3332, 56
      %s3334 = smul.addr %s3333, 8
      %s3335 = scalar_lea.vmem %s3, %s3334
      // Predicated region
      $region33: #{deconv3d_block.1} parent=31 // pred_check
        %p3336 = pneg %p100
      $region34: #{deconv3d_block.1} parent=31 // pred_check_branch
        %3338 = sbr.rel (%p3336) target = $region36
      $region35: #{deconv3d_block.1} parent=31 // pred_region
        _
      $region36: #{deconv3d_block.1} parent=31 // pred_fallthru
        _
    $region32: #{deconv3d_block.1} parent=5 // pred_fallthru
      _
    %p3339 = scmp.le.s32.totalorder 2, %s9
    // Predicated region
    $region37: #{deconv3d_block.1} parent=5 // pred_check
      %p3340 = pneg %p3339
    $region38: #{deconv3d_block.1} parent=5 // pred_check_branch
      %3342 = sbr.rel (%p3340) target = $region40
    $region39: #{deconv3d_block.1} parent=5 // pred_region
      %s3343 = ssub.s32 %s9, 2
      // Predicated region
      $region41: #{deconv3d_block.1} parent=39 // pred_check
        %p3344 = pneg %p106
      $region42: #{deconv3d_block.1} parent=39 // pred_check_branch
        %3346 = sbr.rel (%p3344) target = $region44
      $region43: #{deconv3d_block.1} parent=39 // pred_region
        %p3347 = scmp.lt.s32.totalorder %s15, 1
        %s3348 = scalar_select %p3347, %s15, 1
        %s3349 = smul.addr %s3348, 56
        %s3350 = smul.addr %s3349, 8
        %s3351 = scalar_lea.vmem %s3, %s3350
      $region44: #{deconv3d_block.1} parent=39 // pred_fallthru
        _
    $region40: #{deconv3d_block.1} parent=5 // pred_fallthru
      _
  $region6: #{deconv3d_block.1} parent=0 // loop_footer
    %s13 = sadd.s32 1, %s9
  $region7: #{deconv3d_block.1} parent=0 // loop_footer_branch
    %8 = sbr.rel target = $region3
  $region8: #{deconv3d_block.1} parent=0 // loop_exit
    _

</llo_original>
